<compile_context>
chip_gen: v7x
topology: tpu7x:2x2x1
jax: 0.10.0
libtpu: 0.0.40
codegen_flags: <defaults>
</compile_context>

<pallas_src>
import numpy as np
import jax
import jax.numpy as jnp
from jax.experimental import pallas as pl
from jax.experimental.pallas import tpu as pltpu

EPS = 1e-5

_SINGLE_BUF_OK = None
_VMEM_CAP = None


# --------------------------------------------------------------------------- #
# Small runtime probes (cached)
# --------------------------------------------------------------------------- #
def _single_buffer_consts_supported():
    """Probe whether this jax/Mosaic build accepts pl.Buffered(1) so constant
    (weight) operands can be single-buffered (halves their VMEM footprint)."""
    global _SINGLE_BUF_OK
    if _SINGLE_BUF_OK is None:
        ok = False
        if hasattr(pl, "Buffered"):
            try:
                def _probe(w_ref, x_ref, o_ref):
                    o_ref[...] = x_ref[...] + w_ref[...]

                w = jnp.ones((8, 128), jnp.float32)
                x = jnp.ones((16, 128), jnp.float32)
                out = pl.pallas_call(
                    _probe,
                    out_shape=jax.ShapeDtypeStruct((16, 128), jnp.float32),
                    grid=(2,),
                    in_specs=[
                        pl.BlockSpec((8, 128), lambda i: (0, 0),
                                     pipeline_mode=pl.Buffered(1)),
                        pl.BlockSpec((8, 128), lambda i: (i, 0)),
                    ],
                    out_specs=pl.BlockSpec((8, 128), lambda i: (i, 0)),
                )(w, x)
                ok = bool(jnp.all(out == 2.0))
            except Exception:
                ok = False
        _SINGLE_BUF_OK = ok
    return _SINGLE_BUF_OK


def _vmem_capacity_bytes():
    """Per-core VMEM capacity; falls back to 64 MiB (the v7x per-TC size)."""
    global _VMEM_CAP
    if _VMEM_CAP is None:
        cap = 64 * 2 ** 20
        try:
            info = pltpu.get_tpu_info()
            cap = int(getattr(info, "vmem_capacity_bytes", cap)) or cap
        except Exception:
            pass
        _VMEM_CAP = cap
    return _VMEM_CAP


# --------------------------------------------------------------------------- #
# Kernel
# --------------------------------------------------------------------------- #
def _make_kernel(s, H, W, H2, W2p, has_shortcut, use_im2col):
    """Build the fused Bottleneck kernel body.

    s        : conv2 stride (1 or 2)
    H, W     : unpadded input spatial size (for the in-kernel pad-ring mask)
    H2, W2p  : output rows / layout-padded output cols
    """

    def body(x_ref, w1_ref, b1_ref, w2_ref, b2_ref, w3_ref, b3_ref,
             wsc_ref, out_ref, col_ref):
        xv = x_ref[...]                                 # (NB, S2*QH, QWp, Cp)
        nb, s2qh, qwp, cp = xv.shape
        qh = s2qh // (s * s)
        pp = w1_ref.shape[1]
        op = w3_ref.shape[1]
        ohwp = H2 * W2p
        m1 = nb * s2qh * qwp                            # conv1 rows
        mo = nb * ohwp                                  # conv2/conv3 rows

        # ---- conv1 (1x1) + folded bn1 + relu --------------------------------
        h1 = jnp.dot(xv.reshape(m1, cp), w1_ref[...],
                     preferred_element_type=jnp.float32)
        h1 = jnp.maximum(h1 + b1_ref[...], 0.0).reshape(nb, s2qh, qwp, pp)

        # Pad-ring mask computed in-kernel (iota compares + where); replaces
        # the old HBM mask input.  bn1's folded bias would otherwise leak a
        # nonzero value into conv2's zero-padding ring.
        ii = jax.lax.broadcasted_iota(jnp.int32, (s2qh, qwp, pp), 0)
        jj = jax.lax.broadcasted_iota(jnp.int32, (s2qh, qwp, pp), 1)
        inside = None
        for py in range(s):
            for px in range(s):
                base = (py * s + px) * qh
                lo_r, hi_r = -((py - 1) // s), (H - py) // s
                lo_c, hi_c = -((px - 1) // s), (W - px) // s
                ok = ((ii >= base + lo_r) & (ii <= base + hi_r) &
                      (jj >= lo_c) & (jj <= hi_c))
                inside = ok if inside is None else inside | ok
        # Single f32->bf16 cast of h1 (old code re-cast inside every tap).
        h1 = jnp.where(inside, h1, 0.0).astype(jnp.bfloat16)

        # ---- conv2 (3x3, stride s, pad 1) on the phase planes ---------------
        def tap(dy, dx):
            r0 = ((dy % s) * s + (dx % s)) * qh + dy // s
            c0 = dx // s
            return h1[:, r0:r0 + H2, c0:c0 + W2p, :]

        if use_im2col:
            # One K = 9*Pp matmul via a bf16 im2col scratch (best when Pp=128:
            # a single full-depth contraction instead of 9 shallow ones).
            for dy in range(3):
                for dx in range(3):
                    t = dy * 3 + dx
                    col_ref[:, :, t * pp:(t + 1) * pp] = (
                        tap(dy, dx).reshape(nb * H2, W2p, pp))
            h2 = jnp.dot(col_ref[...].reshape(mo, 9 * pp), w2_ref[...],
                         preferred_element_type=jnp.float32)
        else:
            # 9 accumulating K = Pp matmuls straight off the static tap slices:
            # no im2col materialization (saves VMEM + store-slot traffic).
            h2 = None
            for dy in range(3):
                for dx in range(3):
                    t = dy * 3 + dx
                    d = jnp.dot(tap(dy, dx).reshape(mo, pp),
                                w2_ref[t * pp:(t + 1) * pp, :],
                                preferred_element_type=jnp.float32)
                    h2 = d if h2 is None else h2 + d
        h2 = jnp.maximum(h2 + b2_ref[...], 0.0)

        # ---- conv3 (1x1) + folded bn3 + shortcut + relu ---------------------
        h3 = jnp.dot(h2.astype(jnp.bfloat16), w3_ref[...],
                     preferred_element_type=jnp.float32)
        if has_shortcut:
            # 1x1 stride-s projection: the subsampled input is one static
            # slice of the phase planes; its matmul accumulates directly into
            # h3 and its folded BN bias was merged into b3 in the wrapper.
            phs, off = 1 % s, 1 // s
            r0 = (phs * s + phs) * qh + off
            xs = xv[:, r0:r0 + H2, off:off + W2p, :].reshape(mo, cp)
            h3 = h3 + jnp.dot(xs, wsc_ref[...],
                              preferred_element_type=jnp.float32)
            h3 = h3 + b3_ref[...]
        else:
            # Identity shortcut (stride == 1 and Cp == Op).
            # TODO(synk): residual is the bf16-rounded input; feed an f32 copy
            # of x if exact f32 residual precision is ever required.
            h3 = h3 + b3_ref[...]
            h3 = h3 + xv[:, 1:1 + H2, 1:1 + W2p, :].reshape(mo, cp).astype(
                jnp.float32)

        out_ref[...] = jnp.maximum(h3, 0.0).reshape(nb, ohwp, op).astype(
            out_ref.dtype)

    if has_shortcut and use_im2col:
        def kernel(x, w1, b1, w2, b2, w3, b3, wsc, out, col):
            body(x, w1, b1, w2, b2, w3, b3, wsc, out, col)
    elif has_shortcut:
        def kernel(x, w1, b1, w2, b2, w3, b3, wsc, out):
            body(x, w1, b1, w2, b2, w3, b3, wsc, out, None)
    elif use_im2col:
        def kernel(x, w1, b1, w2, b2, w3, b3, out, col):
            body(x, w1, b1, w2, b2, w3, b3, None, out, col)
    else:
        def kernel(x, w1, b1, w2, b2, w3, b3, out):
            body(x, w1, b1, w2, b2, w3, b3, None, out, None)
    return kernel


# --------------------------------------------------------------------------- #
# Weight preparation (hoist out of the per-forward path)
# --------------------------------------------------------------------------- #
def _round_up(v, m):
    return -(-v // m) * m


def _fold_bn(w, gamma, beta, mean, var):
    """Fold inference-mode BN into a conv weight (out-channels on last dim)."""
    scale = gamma / jnp.sqrt(var + EPS)
    return w * scale[None, :], beta - mean * scale


def _pad2(a, rows, cols):
    return jnp.pad(a, ((0, rows - a.shape[0]), (0, cols - a.shape[1])))


def prepare_bottleneck_params(params, stride):
    """Fold BN, pad channels to lane multiples, cast weights to bf16.
    Call ONCE per model; reuse the result with bottleneck_apply()."""
    s = int(stride)
    assert s in (1, 2), "phase-plane tap math assumes stride in {1, 2}"
    planes = int(params["conv1_w"].shape[0])
    cin = int(params["conv1_w"].shape[1])
    cout = 4 * planes
    has_shortcut = (s != 1) or (cin != cout)
    Cp = _round_up(cin, 128)
    Pp = _round_up(planes, 128)
    Op = _round_up(cout, 128)

    w1 = params["conv1_w"].reshape(planes, cin).T
    w1, b1 = _fold_bn(w1, params["bn1_g"], params["bn1_b"],
                      params["bn1_m"], params["bn1_v"])
    w1 = _pad2(w1, Cp, Pp).astype(jnp.bfloat16)
    b1 = _pad2(b1[None, :], 1, Pp).astype(jnp.float32)

    sc2 = params["bn2_g"] / jnp.sqrt(params["bn2_v"] + EPS)
    b2v = params["bn2_b"] - params["bn2_m"] * sc2
    w2 = jnp.transpose(params["conv2_w"], (2, 3, 1, 0)) * sc2[None, None, None, :]
    w2 = jnp.pad(w2, ((0, 0), (0, 0), (0, Pp - planes), (0, Pp - planes)))
    w2 = w2.reshape(9 * Pp, Pp).astype(jnp.bfloat16)      # rows: (tap, in-ch)
    b2 = _pad2(b2v[None, :], 1, Pp).astype(jnp.float32)

    w3 = params["conv3_w"].reshape(cout, planes).T
    w3, b3v = _fold_bn(w3, params["bn3_g"], params["bn3_b"],
                       params["bn3_m"], params["bn3_v"])
    w3 = _pad2(w3, Pp, Op).astype(jnp.bfloat16)

    wsc = None
    if has_shortcut:
        wscm = params["sc_conv_w"].reshape(cout, cin).T
        wscm, bscv = _fold_bn(wscm, params["sc_bn_g"], params["sc_bn_b"],
                              params["sc_bn_m"], params["sc_bn_v"])
        wsc = _pad2(wscm, Cp, Op).astype(jnp.bfloat16)
        b3v = b3v + bscv      # shortcut BN bias folded into b3 (one add saved)
    b3 = _pad2(b3v[None, :], 1, Op).astype(jnp.float32)

    return dict(w1=w1, b1=b1, w2=w2, b2=b2, w3=w3, b3=b3, wsc=wsc,
                planes=planes, cin=cin, cout=cout, stride=s,
                has_shortcut=has_shortcut, Cp=Cp, Pp=Pp, Op=Op)


# --------------------------------------------------------------------------- #
# Forward wrapper
# --------------------------------------------------------------------------- #
def bottleneck_apply(x_nchw, prep, *, conv2_mode=None, out_dtype=jnp.bfloat16):
    N, Cin, H, W = map(int, x_nchw.shape)
    assert Cin == prep["cin"]
    s = prep["stride"]
    Cp, Pp, Op = prep["Cp"], prep["Pp"], prep["Op"]
    cout = prep["cout"]
    has_shortcut = prep["has_shortcut"]

    H2 = (H - 1) // s + 1
    W2 = (W - 1) // s + 1
    o_max = 2 // s                      # largest tap offset in phase-plane units
    QH = H2 + o_max                     # phase-plane height
    W2p = _round_up(W2, 8)              # layout-padded output width
    # TODO(synk): for tiny spatial stages (7x7) this 8-rounding inflates conv1's
    # M dimension; the batch block NB below amortizes most of the waste.
    QWp = _round_up(W2p + o_max, 8)     # phase-plane width
    S2 = s * s
    TOT = S2 * QH * QWp
    OHWp = H2 * W2p

    # conv2 strategy (perf review): im2col only when Pp == 128, otherwise 9
    # accumulating dots directly on the phase planes.
    if conv2_mode is None:
        use_im2col = Pp < 256
    else:
        assert conv2_mode in ("im2col", "direct")
        use_im2col = conv2_mode == "im2col"

    # -- input: NCHW -> NHWC, conv/layout/channel zero-pad, space-to-depth into
    #    s*s phase planes so every in-kernel tap read is a static slice. -------
    x = jnp.transpose(x_nchw, (0, 2, 3, 1)).astype(jnp.float32)
    pad_h = max(0, s * QH - (H + 1))
    pad_w = max(0, s * QWp - (W + 1))
    xp = jnp.pad(x, ((0, 0), (1, pad_h), (1, pad_w), (0, Cp - Cin)))
    xp = xp[:, :s * QH, :s * QWp, :]
    xp = xp.reshape(N, QH, s, QWp, s, Cp).transpose(0, 2, 4, 1, 3, 5)
    xph = xp.reshape(N, S2 * QH, QWp, Cp).astype(jnp.bfloat16)

    consts = [prep["w1"], prep["b1"], prep["w2"], prep["b2"],
              prep["w3"], prep["b3"]]
    if has_shortcut:
        consts.append(prep["wsc"])

    out_isz = np.dtype(out_dtype).itemsize
    single_buf = _single_buffer_consts_supported()
    cap = _vmem_capacity_bytes()
    const_bytes = sum(int(a.size) * a.dtype.itemsize for a in consts)
    const_bytes *= 1 if single_buf else 2

    def per_step_bytes(nb):
        b = 2 * nb * TOT * Cp * 2                   # x block (2x-buffered bf16)
        b += 2 * nb * OHWp * Op * out_isz           # out block (2x-buffered)
        if use_im2col:
            b += nb * H2 * W2p * 9 * Pp * 2         # im2col scratch (bf16)
        b += nb * TOT * Pp * 6                      # h1 (f32 + bf16 copy)
        b += 3 * TOT * Pp * 4                       # mask/iota temporaries
        b += nb * OHWp * Pp * 10                    # h2 f32/bf16 + conv2 partials
        b += nb * OHWp * Op * 8                     # h3 + shortcut accumulation
        return int(b)

    # Batch block: several images per grid step for small spatial stages
    # (amortizes per-step overhead, enlarges the matmul M dimension).
    NB = 1
    budget = int(cap * 0.7) - const_bytes
    for cand in (8, 4, 2):
        if N % cand == 0 and per_step_bytes(cand) <= budget:
            NB = cand
            break

    vmem_need = per_step_bytes(NB) + const_bytes + (2 << 20)
    vmem_limit = int(min(max(vmem_need, 32 * 2 ** 20), int(cap * 0.85)))

    def const_spec(a):
        nd = a.ndim

        def idx(n, _nd=nd):
            return (0,) * _nd

        if single_buf:
            # constant-index operands fetched once -> single buffer is enough
            return pl.BlockSpec(a.shape, idx, pipeline_mode=pl.Buffered(1))
        return pl.BlockSpec(a.shape, idx)

    in_specs = [pl.BlockSpec((NB, S2 * QH, QWp, Cp), lambda n: (n, 0, 0, 0))]
    in_specs += [const_spec(a) for a in consts]
    out_specs = pl.BlockSpec((NB, OHWp, Op), lambda n: (n, 0, 0))
    scratch_shapes = (
        [pltpu.VMEM((NB * H2, W2p, 9 * Pp), jnp.bfloat16)] if use_im2col else [])

    flops = 2 * N * (TOT * Cp * Pp + OHWp * 9 * Pp * Pp + OHWp * Pp * Op
                     + (OHWp * Cp * Op if has_shortcut else 0))
    bytes_accessed = (int(xph.size) * 2
                      + sum(int(a.size) * a.dtype.itemsize for a in consts)
                      + N * OHWp * Op * out_isz)

    out = pl.pallas_call(
        _make_kernel(s, H, W, H2, W2p, has_shortcut, use_im2col),
        out_shape=jax.ShapeDtypeStruct((N, OHWp, Op), out_dtype),
        grid=(N // NB,),
        in_specs=in_specs,
        out_specs=out_specs,
        scratch_shapes=scratch_shapes,
        compiler_params=pltpu.CompilerParams(
            dimension_semantics=("parallel",),
            vmem_limit_bytes=vmem_limit),
        cost_estimate=pl.CostEstimate(flops=flops, transcendentals=0,
                                      bytes_accessed=bytes_accessed),
    )(xph, *consts)

    out = out.reshape(N, H2, W2p, Op)[:, :, :W2, :cout]
    return jnp.transpose(out, (0, 3, 1, 2))                 # NCHW, out_dtype


def bottleneck_forward(x_nchw, params, stride=1, *, conv2_mode=None,
                       out_dtype=jnp.bfloat16):
    # NOTE: in a real model call prepare_bottleneck_params once at load time.
    prep = prepare_bottleneck_params(params, stride)
    return bottleneck_apply(x_nchw, prep, conv2_mode=conv2_mode,
                            out_dtype=out_dtype)


# --------------------------------------------------------------------------- #
# Pure-JAX reference (eval-mode BN) and test harness
# --------------------------------------------------------------------------- #
def bottleneck_reference(x, params, stride):
    def conv(z, w, s, p):
        return jax.lax.conv_general_dilated(
            z, w, (s, s), [(p, p), (p, p)],
            dimension_numbers=("NCHW", "OIHW", "NCHW"))

    def bn(z, g, b, m, v):
        g, b, m, v = (a.reshape(1, -1, 1, 1) for a in (g, b, m, v))
        return (z - m) / jnp.sqrt(v + EPS) * g + b

    out = jax.nn.relu(bn(conv(x, params["conv1_w"], 1, 0),
                         params["bn1_g"], params["bn1_b"],
                         params["bn1_m"], params["bn1_v"]))
    out = jax.nn.relu(bn(conv(out, params["conv2_w"], stride, 1),
                         params["bn2_g"], params["bn2_b"],
                         params["bn2_m"], params["bn2_v"]))
    out = bn(conv(out, params["conv3_w"], 1, 0),
             params["bn3_g"], params["bn3_b"], params["bn3_m"], params["bn3_v"])
    cout = params["conv3_w"].shape[0]
    if stride != 1 or x.shape[1] != cout:
        sc = bn(conv(x, params["sc_conv_w"], stride, 0),
                params["sc_bn_g"], params["sc_bn_b"],
                params["sc_bn_m"], params["sc_bn_v"])
    else:
        sc = x
    return jax.nn.relu(out + sc)


def _init_params(key, inplanes, planes):
    cout = 4 * planes
    ks = jax.random.split(key, 16)
    p = {}
    p["conv1_w"] = 0.1 * jax.random.normal(ks[0], (planes, inplanes, 1, 1),
                                           jnp.float32)
    p["conv2_w"] = 0.1 * jax.random.normal(ks[1], (planes, planes, 3, 3),
                                           jnp.float32)
    p["conv3_w"] = 0.1 * jax.random.normal(ks[2], (cout, planes, 1, 1),
                                           jnp.float32)
    p["sc_conv_w"] = 0.1 * jax.random.normal(ks[3], (cout, inplanes, 1, 1),
                                             jnp.float32)
    for i, (name, c) in enumerate([("bn1", planes), ("bn2", planes),
                                   ("bn3", cout), ("sc_bn", cout)]):
        kg, kb, km, kv = jax.random.split(ks[4 + i], 4)
        p[f"{name}_g"] = 0.5 + jax.random.uniform(kg, (c,), jnp.float32)
        p[f"{name}_b"] = 0.1 * jax.random.normal(kb, (c,), jnp.float32)
        p[f"{name}_m"] = 0.1 * jax.random.normal(km, (c,), jnp.float32)
        p[f"{name}_v"] = 0.5 + jax.random.uniform(kv, (c,), jnp.float32)
    return p


def _run_case(key, N, inplanes, planes, H, W, stride, label, conv2_mode=None):
    kx, kp = jax.random.split(key)
    x = jax.random.normal(kx, (N, inplanes, H, W), jnp.float32)
    params = _init_params(kp, inplanes, planes)
    out = jax.block_until_ready(
        bottleneck_forward(x, params, stride=stride, conv2_mode=conv2_mode))
    ref = jax.block_until_ready(bottleneck_reference(x, params, stride))
    H2 = (H - 1) // stride + 1
    W2 = (W - 1) // stride + 1
    assert out.shape == (N, 4 * planes, H2, W2), (label, out.shape)
    outf = np.asarray(out.astype(jnp.float32))
    # bf16 matmul operands + bf16 output (f32 accumulation) vs f32 reference.
    np.testing.assert_allclose(outf, np.asarray(ref), rtol=4e-2, atol=4e-2,
                               err_msg=label)


if __name__ == "__main__":
    key = jax.random.PRNGKey(0)
    k1, k2, k3 = jax.random.split(key, 3)
    # projection shortcut, stride 2, im2col conv2 path, batch-blocked (NB=2)
    _run_case(k1, N=2, inplanes=4, planes=4, H=16, W=16, stride=2,
              label="proj_s2")
    # identity shortcut, stride 1, multi-step grid (N=3 -> NB=1)
    _run_case(k2, N=3, inplanes=16, planes=4, H=8, W=8, stride=1,
              label="identity_s1")
    # projection shortcut, stride 1, direct (9 accumulating dots) conv2 path
    _run_case(k3, N=2, inplanes=8, planes=4, H=8, W=8, stride=1,
              label="proj_s1_direct", conv2_mode="direct")
    print("KERNEL_OK")
</pallas_src>

<mosaic_0001>
module attributes {stable_mosaic.version = 11 : i64} {
  func.func @_probe(%arg0: i32, %arg1: memref<8x128xf32, #tpu.memory_space<vmem>>, %arg2: memref<8x128xf32, #tpu.memory_space<vmem>>, %arg3: memref<8x128xf32, #tpu.memory_space<vmem>>) attributes {dimension_semantics = [#tpu.dimension_semantics<arbitrary>], iteration_bounds = array<i64: 2>, scalar_prefetch = 0 : i64, scratch_operands = 0 : i64, tpu.core_type = #tpu.core_type<tc>, window_params = [{pipeline_mode = #tpu.pipeline_mode<synchronous>, transform_indices = @transform_0, window_bounds = array<i64: 8, 128>}, {transform_indices = @transform_1, window_bounds = array<i64: 8, 128>}, {transform_indices = @transform_2, window_bounds = array<i64: 8, 128>}]} {
    %c0 = arith.constant 0 : index
    %c0_0 = arith.constant 0 : index
    %0 = vector.load %arg2[%c0, %c0_0] : memref<8x128xf32, #tpu.memory_space<vmem>>, vector<8x128xf32>
    %c0_1 = arith.constant 0 : index
    %c0_2 = arith.constant 0 : index
    %1 = vector.load %arg1[%c0_1, %c0_2] : memref<8x128xf32, #tpu.memory_space<vmem>>, vector<8x128xf32>
    %2 = arith.addf %0, %1 : vector<8x128xf32>
    %c0_3 = arith.constant 0 : index
    %c0_4 = arith.constant 0 : index
    %3 = vector.load %arg3[%c0_3, %c0_4] : memref<8x128xf32, #tpu.memory_space<vmem>>, vector<8x128xf32>
    tpu.vector_store %arg3[%c0_3, %c0_4], %2 {strides = array<i32>} : memref<8x128xf32, #tpu.memory_space<vmem>>, vector<8x128xf32>,
    return
  }
  func.func @transform_0(%arg0: i32) -> (i32, i32) {
    %c0_i32 = arith.constant 0 : i32
    %c0_i32_0 = arith.constant 0 : i32
    %c0_i32_1 = arith.constant 0 : i32
    return %c0_i32, %c0_i32_0 : i32, i32
  }
  func.func @transform_1(%arg0: i32) -> (i32, i32) {
    %c0_i32 = arith.constant 0 : i32
    %c0_i32_0 = arith.constant 0 : i32
    return %arg0, %c0_i32 : i32, i32
  }
  func.func @transform_2(%arg0: i32) -> (i32, i32) {
    %c0_i32 = arith.constant 0 : i32
    %c0_i32_0 = arith.constant 0 : i32
    return %arg0, %c0_i32 : i32, i32
  }
}

module attributes {stable_mosaic.version = 11 : i64} {
  func.func @kernel(%arg0: i32, %arg1: memref<2x36x16x128xbf16, #tpu.memory_space<vmem>>, %arg2: memref<128x128xbf16, #tpu.memory_space<vmem>>, %arg3: memref<1x128xf32, #tpu.memory_space<vmem>>, %arg4: memref<1152x128xbf16, #tpu.memory_space<vmem>>, %arg5: memref<1x128xf32, #tpu.memory_space<vmem>>, %arg6: memref<128x128xbf16, #tpu.memory_space<vmem>>, %arg7: memref<1x128xf32, #tpu.memory_space<vmem>>, %arg8: memref<128x128xbf16, #tpu.memory_space<vmem>>, %arg9: memref<2x64x128xbf16, #tpu.memory_space<vmem>>, %arg10: memref<16x8x1152xbf16, #tpu.memory_space<vmem>>) attributes {dimension_semantics = [#tpu.dimension_semantics<parallel>], iteration_bounds = array<i64: 1>, scalar_prefetch = 0 : i64, scratch_operands = 1 : i64, tpu.core_type = #tpu.core_type<tc>, window_params = [{transform_indices = @transform_0, window_bounds = array<i64: 2, 36, 16, 128>}, {pipeline_mode = #tpu.pipeline_mode<synchronous>, transform_indices = @transform_1, window_bounds = array<i64: 128, 128>}, {pipeline_mode = #tpu.pipeline_mode<synchronous>, transform_indices = @transform_2, window_bounds = array<i64: 1, 128>}, {pipeline_mode = #tpu.pipeline_mode<synchronous>, transform_indices = @transform_3, window_bounds = array<i64: 1152, 128>}, {pipeline_mode = #tpu.pipeline_mode<synchronous>, transform_indices = @transform_4, window_bounds = array<i64: 1, 128>}, {pipeline_mode = #tpu.pipeline_mode<synchronous>, transform_indices = @transform_5, window_bounds = array<i64: 128, 128>}, {pipeline_mode = #tpu.pipeline_mode<synchronous>, transform_indices = @transform_6, window_bounds = array<i64: 1, 128>}, {pipeline_mode = #tpu.pipeline_mode<synchronous>, transform_indices = @transform_7, window_bounds = array<i64: 128, 128>}, {transform_indices = @transform_8, window_bounds = array<i64: 2, 64, 128>}]} {
    %c0 = arith.constant 0 : index
    %c0_0 = arith.constant 0 : index
    %c0_1 = arith.constant 0 : index
    %c0_2 = arith.constant 0 : index
    %0 = vector.load %arg1[%c0, %c0_0, %c0_1, %c0_2] : memref<2x36x16x128xbf16, #tpu.memory_space<vmem>>, vector<2x36x16x128xbf16>
    %1 = vector.shape_cast %0 : vector<2x36x16x128xbf16> to vector<1152x128xbf16>
    %c0_3 = arith.constant 0 : index
    %c0_4 = arith.constant 0 : index
    %2 = vector.load %arg2[%c0_3, %c0_4] : memref<128x128xbf16, #tpu.memory_space<vmem>>, vector<128x128xbf16>
    %cst = arith.constant dense<0.000000e+00> : vector<1152x128xf32>
    %3 = tpu.matmul %1, %2, %cst {dimension_numbers = #tpu.dot_dimension_numbers<[1], [0], [0], [1], [0, 0, 1, 1], [], []>} : vector<1152x128xbf16>, vector<128x128xbf16>, vector<1152x128xf32> -> vector<1152x128xf32>
    %c0_5 = arith.constant 0 : index
    %c0_6 = arith.constant 0 : index
    %4 = vector.load %arg3[%c0_5, %c0_6] : memref<1x128xf32, #tpu.memory_space<vmem>>, vector<1x128xf32>
    %5 = vector.broadcast %4 : vector<1x128xf32> to vector<1152x128xf32>
    %6 = arith.addf %3, %5 : vector<1152x128xf32>
    %cst_7 = arith.constant 0.000000e+00 : f32
    %7 = vector.broadcast %cst_7 : f32 to vector<1152x128xf32>
    %8 = arith.maximumf %6, %7 : vector<1152x128xf32>
    %9 = vector.shape_cast %8 : vector<1152x128xf32> to vector<2x36x16x128xf32>
    %10 = tpu.iota {dimensions = array<i32: 0>} : vector<36x16x128xi32>
    %11 = tpu.iota {dimensions = array<i32: 1>} : vector<36x16x128xi32>
    %c1_i32 = arith.constant 1 : i32
    %12 = vector.broadcast %c1_i32 : i32 to vector<36x16x128xi32>
    %13 = arith.cmpi sge, %10, %12 : vector<36x16x128xi32>
    %c8_i32 = arith.constant 8 : i32
    %14 = vector.broadcast %c8_i32 : i32 to vector<36x16x128xi32>
    %15 = arith.cmpi sle, %10, %14 : vector<36x16x128xi32>
    %16 = arith.andi %13, %15 : vector<36x16x128xi1>
    %c1_i32_8 = arith.constant 1 : i32
    %17 = vector.broadcast %c1_i32_8 : i32 to vector<36x16x128xi32>
    %18 = arith.cmpi sge, %11, %17 : vector<36x16x128xi32>
    %19 = arith.andi %16, %18 : vector<36x16x128xi1>
    %c8_i32_9 = arith.constant 8 : i32
    %20 = vector.broadcast %c8_i32_9 : i32 to vector<36x16x128xi32>
    %21 = arith.cmpi sle, %11, %20 : vector<36x16x128xi32>
    %22 = arith.andi %19, %21 : vector<36x16x128xi1>
    %c10_i32 = arith.constant 10 : i32
    %23 = vector.broadcast %c10_i32 : i32 to vector<36x16x128xi32>
    %24 = arith.cmpi sge, %10, %23 : vector<36x16x128xi32>
    %c17_i32 = arith.constant 17 : i32
    %25 = vector.broadcast %c17_i32 : i32 to vector<36x16x128xi32>
    %26 = arith.cmpi sle, %10, %25 : vector<36x16x128xi32>
    %27 = arith.andi %24, %26 : vector<36x16x128xi1>
    %c0_i32 = arith.constant 0 : i32
    %28 = vector.broadcast %c0_i32 : i32 to vector<36x16x128xi32>
    %29 = arith.cmpi sge, %11, %28 : vector<36x16x128xi32>
    %30 = arith.andi %27, %29 : vector<36x16x128xi1>
    %c7_i32 = arith.constant 7 : i32
    %31 = vector.broadcast %c7_i32 : i32 to vector<36x16x128xi32>
    %32 = arith.cmpi sle, %11, %31 : vector<36x16x128xi32>
    %33 = arith.andi %30, %32 : vector<36x16x128xi1>
    %34 = arith.ori %22, %33 : vector<36x16x128xi1>
    %c18_i32 = arith.constant 18 : i32
    %35 = vector.broadcast %c18_i32 : i32 to vector<36x16x128xi32>
    %36 = arith.cmpi sge, %10, %35 : vector<36x16x128xi32>
    %c25_i32 = arith.constant 25 : i32
    %37 = vector.broadcast %c25_i32 : i32 to vector<36x16x128xi32>
    %38 = arith.cmpi sle, %10, %37 : vector<36x16x128xi32>
    %39 = arith.andi %36, %38 : vector<36x16x128xi1>
    %c1_i32_10 = arith.constant 1 : i32
    %40 = vector.broadcast %c1_i32_10 : i32 to vector<36x16x128xi32>
    %41 = arith.cmpi sge, %11, %40 : vector<36x16x128xi32>
    %42 = arith.andi %39, %41 : vector<36x16x128xi1>
    %c8_i32_11 = arith.constant 8 : i32
    %43 = vector.broadcast %c8_i32_11 : i32 to vector<36x16x128xi32>
    %44 = arith.cmpi sle, %11, %43 : vector<36x16x128xi32>
    %45 = arith.andi %42, %44 : vector<36x16x128xi1>
    %46 = arith.ori %34, %45 : vector<36x16x128xi1>
    %c27_i32 = arith.constant 27 : i32
    %47 = vector.broadcast %c27_i32 : i32 to vector<36x16x128xi32>
    %48 = arith.cmpi sge, %10, %47 : vector<36x16x128xi32>
    %c34_i32 = arith.constant 34 : i32
    %49 = vector.broadcast %c34_i32 : i32 to vector<36x16x128xi32>
    %50 = arith.cmpi sle, %10, %49 : vector<36x16x128xi32>
    %51 = arith.andi %48, %50 : vector<36x16x128xi1>
    %c0_i32_12 = arith.constant 0 : i32
    %52 = vector.broadcast %c0_i32_12 : i32 to vector<36x16x128xi32>
    %53 = arith.cmpi sge, %11, %52 : vector<36x16x128xi32>
    %54 = arith.andi %51, %53 : vector<36x16x128xi1>
    %c7_i32_13 = arith.constant 7 : i32
    %55 = vector.broadcast %c7_i32_13 : i32 to vector<36x16x128xi32>
    %56 = arith.cmpi sle, %11, %55 : vector<36x16x128xi32>
    %57 = arith.andi %54, %56 : vector<36x16x128xi1>
    %58 = arith.ori %46, %57 : vector<36x16x128xi1>
    %cst_14 = arith.constant 0.000000e+00 : f32
    %59 = vector.shape_cast %58 : vector<36x16x128xi1> to vector<1x36x16x128xi1>
    %60 = vector.broadcast %59 : vector<1x36x16x128xi1> to vector<2x36x16x128xi1>
    %61 = vector.broadcast %cst_14 : f32 to vector<2x36x16x128xf32>
    %62 = arith.select %60, %9, %61 : vector<2x36x16x128xi1>, vector<2x36x16x128xf32>
    %63 = arith.truncf %62 : vector<2x36x16x128xf32> to vector<2x36x16x128xbf16>
    %64 = vector.extract_strided_slice %63 {offsets = [0, 0, 0, 0], sizes = [2, 8, 8, 128], strides = [1, 1, 1, 1]} : vector<2x36x16x128xbf16> to vector<2x8x8x128xbf16>
    %65 = vector.shape_cast %64 : vector<2x8x8x128xbf16> to vector<16x8x128xbf16>
    %c0_15 = arith.constant 0 : index
    %c0_16 = arith.constant 0 : index
    %c0_17 = arith.constant 0 : index
    %66 = vector.load %arg10[%c0_15, %c0_16, %c0_17] : memref<16x8x1152xbf16, #tpu.memory_space<vmem>>, vector<16x8x128xbf16>
    tpu.vector_store %arg10[%c0_15, %c0_16, %c0_17], %65 {strides = array<i32>} : memref<16x8x1152xbf16, #tpu.memory_space<vmem>>, vector<16x8x128xbf16>,
    %67 = vector.extract_strided_slice %63 {offsets = [0, 9, 0, 0], sizes = [2, 8, 8, 128], strides = [1, 1, 1, 1]} : vector<2x36x16x128xbf16> to vector<2x8x8x128xbf16>
    %68 = vector.shape_cast %67 : vector<2x8x8x128xbf16> to vector<16x8x128xbf16>
    %c0_18 = arith.constant 0 : index
    %c0_19 = arith.constant 0 : index
    %c128 = arith.constant 128 : index
    %69 = vector.load %arg10[%c0_18, %c0_19, %c128] : memref<16x8x1152xbf16, #tpu.memory_space<vmem>>, vector<16x8x128xbf16>
    tpu.vector_store %arg10[%c0_18, %c0_19, %c128], %68 {strides = array<i32>} : memref<16x8x1152xbf16, #tpu.memory_space<vmem>>, vector<16x8x128xbf16>,
    %70 = vector.extract_strided_slice %63 {offsets = [0, 0, 1, 0], sizes = [2, 8, 8, 128], strides = [1, 1, 1, 1]} : vector<2x36x16x128xbf16> to vector<2x8x8x128xbf16>
    %71 = vector.shape_cast %70 : vector<2x8x8x128xbf16> to vector<16x8x128xbf16>
    %c0_20 = arith.constant 0 : index
    %c0_21 = arith.constant 0 : index
    %c256 = arith.constant 256 : index
    %72 = vector.load %arg10[%c0_20, %c0_21, %c256] : memref<16x8x1152xbf16, #tpu.memory_space<vmem>>, vector<16x8x128xbf16>
    tpu.vector_store %arg10[%c0_20, %c0_21, %c256], %71 {strides = array<i32>} : memref<16x8x1152xbf16, #tpu.memory_space<vmem>>, vector<16x8x128xbf16>,
    %73 = vector.extract_strided_slice %63 {offsets = [0, 18, 0, 0], sizes = [2, 8, 8, 128], strides = [1, 1, 1, 1]} : vector<2x36x16x128xbf16> to vector<2x8x8x128xbf16>
    %74 = vector.shape_cast %73 : vector<2x8x8x128xbf16> to vector<16x8x128xbf16>
    %c0_22 = arith.constant 0 : index
    %c0_23 = arith.constant 0 : index
    %c384 = arith.constant 384 : index
    %75 = vector.load %arg10[%c0_22, %c0_23, %c384] : memref<16x8x1152xbf16, #tpu.memory_space<vmem>>, vector<16x8x128xbf16>
    tpu.vector_store %arg10[%c0_22, %c0_23, %c384], %74 {strides = array<i32>} : memref<16x8x1152xbf16, #tpu.memory_space<vmem>>, vector<16x8x128xbf16>,
    %76 = vector.extract_strided_slice %63 {offsets = [0, 27, 0, 0], sizes = [2, 8, 8, 128], strides = [1, 1, 1, 1]} : vector<2x36x16x128xbf16> to vector<2x8x8x128xbf16>
    %77 = vector.shape_cast %76 : vector<2x8x8x128xbf16> to vector<16x8x128xbf16>
    %c0_24 = arith.constant 0 : index
    %c0_25 = arith.constant 0 : index
    %c512 = arith.constant 512 : index
    %78 = vector.load %arg10[%c0_24, %c0_25, %c512] : memref<16x8x1152xbf16, #tpu.memory_space<vmem>>, vector<16x8x128xbf16>
    tpu.vector_store %arg10[%c0_24, %c0_25, %c512], %77 {strides = array<i32>} : memref<16x8x1152xbf16, #tpu.memory_space<vmem>>, vector<16x8x128xbf16>,
    %79 = vector.extract_strided_slice %63 {offsets = [0, 18, 1, 0], sizes = [2, 8, 8, 128], strides = [1, 1, 1, 1]} : vector<2x36x16x128xbf16> to vector<2x8x8x128xbf16>
    %80 = vector.shape_cast %79 : vector<2x8x8x128xbf16> to vector<16x8x128xbf16>
    %c0_26 = arith.constant 0 : index
    %c0_27 = arith.constant 0 : index
    %c640 = arith.constant 640 : index
    %81 = vector.load %arg10[%c0_26, %c0_27, %c640] : memref<16x8x1152xbf16, #tpu.memory_space<vmem>>, vector<16x8x128xbf16>
    tpu.vector_store %arg10[%c0_26, %c0_27, %c640], %80 {strides = array<i32>} : memref<16x8x1152xbf16, #tpu.memory_space<vmem>>, vector<16x8x128xbf16>,
    %82 = vector.extract_strided_slice %63 {offsets = [0, 1, 0, 0], sizes = [2, 8, 8, 128], strides = [1, 1, 1, 1]} : vector<2x36x16x128xbf16> to vector<2x8x8x128xbf16>
    %83 = vector.shape_cast %82 : vector<2x8x8x128xbf16> to vector<16x8x128xbf16>
    %c0_28 = arith.constant 0 : index
    %c0_29 = arith.constant 0 : index
    %c768 = arith.constant 768 : index
    %84 = vector.load %arg10[%c0_28, %c0_29, %c768] : memref<16x8x1152xbf16, #tpu.memory_space<vmem>>, vector<16x8x128xbf16>
    tpu.vector_store %arg10[%c0_28, %c0_29, %c768], %83 {strides = array<i32>} : memref<16x8x1152xbf16, #tpu.memory_space<vmem>>, vector<16x8x128xbf16>,
    %85 = vector.extract_strided_slice %63 {offsets = [0, 10, 0, 0], sizes = [2, 8, 8, 128], strides = [1, 1, 1, 1]} : vector<2x36x16x128xbf16> to vector<2x8x8x128xbf16>
    %86 = vector.shape_cast %85 : vector<2x8x8x128xbf16> to vector<16x8x128xbf16>
    %c0_30 = arith.constant 0 : index
    %c0_31 = arith.constant 0 : index
    %c896 = arith.constant 896 : index
    %87 = vector.load %arg10[%c0_30, %c0_31, %c896] : memref<16x8x1152xbf16, #tpu.memory_space<vmem>>, vector<16x8x128xbf16>
    tpu.vector_store %arg10[%c0_30, %c0_31, %c896], %86 {strides = array<i32>} : memref<16x8x1152xbf16, #tpu.memory_space<vmem>>, vector<16x8x128xbf16>,
    %88 = vector.extract_strided_slice %63 {offsets = [0, 1, 1, 0], sizes = [2, 8, 8, 128], strides = [1, 1, 1, 1]} : vector<2x36x16x128xbf16> to vector<2x8x8x128xbf16>
    %89 = vector.shape_cast %88 : vector<2x8x8x128xbf16> to vector<16x8x128xbf16>
    %c0_32 = arith.constant 0 : index
    %c0_33 = arith.constant 0 : index
    %c1024 = arith.constant 1024 : index
    %90 = vector.load %arg10[%c0_32, %c0_33, %c1024] : memref<16x8x1152xbf16, #tpu.memory_space<vmem>>, vector<16x8x128xbf16>
    tpu.vector_store %arg10[%c0_32, %c0_33, %c1024], %89 {strides = array<i32>} : memref<16x8x1152xbf16, #tpu.memory_space<vmem>>, vector<16x8x128xbf16>,
    %c0_34 = arith.constant 0 : index
    %c0_35 = arith.constant 0 : index
    %c0_36 = arith.constant 0 : index
    %91 = vector.load %arg10[%c0_34, %c0_35, %c0_36] : memref<16x8x1152xbf16, #tpu.memory_space<vmem>>, vector<16x8x1152xbf16>
    %92 = vector.shape_cast %91 : vector<16x8x1152xbf16> to vector<128x1152xbf16>
    %c0_37 = arith.constant 0 : index
    %c0_38 = arith.constant 0 : index
    %93 = vector.load %arg4[%c0_37, %c0_38] : memref<1152x128xbf16, #tpu.memory_space<vmem>>, vector<1152x128xbf16>
    %cst_39 = arith.constant dense<0.000000e+00> : vector<128x128xf32>
    %94 = tpu.matmul %92, %93, %cst_39 {dimension_numbers = #tpu.dot_dimension_numbers<[1], [0], [0], [1], [0, 0, 1, 1], [], []>} : vector<128x1152xbf16>, vector<1152x128xbf16>, vector<128x128xf32> -> vector<128x128xf32>
    %c0_40 = arith.constant 0 : index
    %c0_41 = arith.constant 0 : index
    %95 = vector.load %arg5[%c0_40, %c0_41] : memref<1x128xf32, #tpu.memory_space<vmem>>, vector<1x128xf32>
    %96 = vector.broadcast %95 : vector<1x128xf32> to vector<128x128xf32>
    %97 = arith.addf %94, %96 : vector<128x128xf32>
    %cst_42 = arith.constant 0.000000e+00 : f32
    %98 = vector.broadcast %cst_42 : f32 to vector<128x128xf32>
    %99 = arith.maximumf %97, %98 : vector<128x128xf32>
    %100 = arith.truncf %99 : vector<128x128xf32> to vector<128x128xbf16>
    %c0_43 = arith.constant 0 : index
    %c0_44 = arith.constant 0 : index
    %101 = vector.load %arg6[%c0_43, %c0_44] : memref<128x128xbf16, #tpu.memory_space<vmem>>, vector<128x128xbf16>
    %cst_45 = arith.constant dense<0.000000e+00> : vector<128x128xf32>
    %102 = tpu.matmul %100, %101, %cst_45 {dimension_numbers = #tpu.dot_dimension_numbers<[1], [0], [0], [1], [0, 0, 1, 1], [], []>} : vector<128x128xbf16>, vector<128x128xbf16>, vector<128x128xf32> -> vector<128x128xf32>
    %103 = vector.extract_strided_slice %0 {offsets = [0, 27, 0, 0], sizes = [2, 8, 8, 128], strides = [1, 1, 1, 1]} : vector<2x36x16x128xbf16> to vector<2x8x8x128xbf16>
    %104 = vector.shape_cast %103 : vector<2x8x8x128xbf16> to vector<128x128xbf16>
    %c0_46 = arith.constant 0 : index
    %c0_47 = arith.constant 0 : index
    %105 = vector.load %arg8[%c0_46, %c0_47] : memref<128x128xbf16, #tpu.memory_space<vmem>>, vector<128x128xbf16>
    %cst_48 = arith.constant dense<0.000000e+00> : vector<128x128xf32>
    %106 = tpu.matmul %104, %105, %cst_48 {dimension_numbers = #tpu.dot_dimension_numbers<[1], [0], [0], [1], [0, 0, 1, 1], [], []>} : vector<128x128xbf16>, vector<128x128xbf16>, vector<128x128xf32> -> vector<128x128xf32>
    %107 = arith.addf %102, %106 : vector<128x128xf32>
    %c0_49 = arith.constant 0 : index
    %c0_50 = arith.constant 0 : index
    %108 = vector.load %arg7[%c0_49, %c0_50] : memref<1x128xf32, #tpu.memory_space<vmem>>, vector<1x128xf32>
    %109 = vector.broadcast %108 : vector<1x128xf32> to vector<128x128xf32>
    %110 = arith.addf %107, %109 : vector<128x128xf32>
    %cst_51 = arith.constant 0.000000e+00 : f32
    %111 = vector.broadcast %cst_51 : f32 to vector<128x128xf32>
    %112 = arith.maximumf %110, %111 : vector<128x128xf32>
    %113 = vector.shape_cast %112 : vector<128x128xf32> to vector<2x64x128xf32>
    %114 = arith.truncf %113 : vector<2x64x128xf32> to vector<2x64x128xbf16>
    %c0_52 = arith.constant 0 : index
    %c0_53 = arith.constant 0 : index
    %c0_54 = arith.constant 0 : index
    %115 = vector.load %arg9[%c0_52, %c0_53, %c0_54] : memref<2x64x128xbf16, #tpu.memory_space<vmem>>, vector<2x64x128xbf16>
    tpu.vector_store %arg9[%c0_52, %c0_53, %c0_54], %114 {strides = array<i32>} : memref<2x64x128xbf16, #tpu.memory_space<vmem>>, vector<2x64x128xbf16>,
    return
  }
  func.func @transform_0(%arg0: i32) -> (i32, i32, i32, i32) {
    %c0_i32 = arith.constant 0 : i32
    %c0_i32_0 = arith.constant 0 : i32
    %c0_i32_1 = arith.constant 0 : i32
    %c0_i32_2 = arith.constant 0 : i32
    return %arg0, %c0_i32, %c0_i32_0, %c0_i32_1 : i32, i32, i32, i32
  }
  func.func @transform_1(%arg0: i32) -> (i32, i32) {
    %c0_i32 = arith.constant 0 : i32
    %c0_i32_0 = arith.constant 0 : i32
    %c0_i32_1 = arith.constant 0 : i32
    return %c0_i32, %c0_i32_0 : i32, i32
  }
  func.func @transform_2(%arg0: i32) -> (i32, i32) {
    %c0_i32 = arith.constant 0 : i32
    %c0_i32_0 = arith.constant 0 : i32
    %c0_i32_1 = arith.constant 0 : i32
    return %c0_i32, %c0_i32_0 : i32, i32
  }
  func.func @transform_3(%arg0: i32) -> (i32, i32) {
    %c0_i32 = arith.constant 0 : i32
    %c0_i32_0 = arith.constant 0 : i32
    %c0_i32_1 = arith.constant 0 : i32
    return %c0_i32, %c0_i32_0 : i32, i32
  }
  func.func @transform_4(%arg0: i32) -> (i32, i32) {
    %c0_i32 = arith.constant 0 : i32
    %c0_i32_0 = arith.constant 0 : i32
    %c0_i32_1 = arith.constant 0 : i32
    return %c0_i32, %c0_i32_0 : i32, i32
  }
  func.func @transform_5(%arg0: i32) -> (i32, i32) {
    %c0_i32 = arith.constant 0 : i32
    %c0_i32_0 = arith.constant 0 : i32
    %c0_i32_1 = arith.constant 0 : i32
    return %c0_i32, %c0_i32_0 : i32, i32
  }
  func.func @transform_6(%arg0: i32) -> (i32, i32) {
    %c0_i32 = arith.constant 0 : i32
    %c0_i32_0 = arith.constant 0 : i32
    %c0_i32_1 = arith.constant 0 : i32
    return %c0_i32, %c0_i32_0 : i32, i32
  }
  func.func @transform_7(%arg0: i32) -> (i32, i32) {
    %c0_i32 = arith.constant 0 : i32
    %c0_i32_0 = arith.constant 0 : i32
    %c0_i32_1 = arith.constant 0 : i32
    return %c0_i32, %c0_i32_0 : i32, i32
  }
  func.func @transform_8(%arg0: i32) -> (i32, i32, i32) {
    %c0_i32 = arith.constant 0 : i32
    %c0_i32_0 = arith.constant 0 : i32
    %c0_i32_1 = arith.constant 0 : i32
    return %arg0, %c0_i32, %c0_i32_0 : i32, i32, i32
  }
}

</mosaic_0001>

<llo_original>
// kernel: tpu_custom_call.1
$region0: #{tpu_custom_call.1}
  #allocation0 [shape = 'u32[]', space=smem, size = 0x4, offset = 0x4, fixed_abs, tag = 'smem constant byte address 0x4 - core index']
  #allocation1 [shape = 'u32[144,128]{1,0:T(1,128)}', space=vmem, size = 0x12000, scoped, tag = 'internal scratch']
  %s0 = inlined_call_operand.hbm [shape: f32[8,128], index: 0, kind: input, shape index: {}]
  %s1 = inlined_call_operand.hbm [shape: f32[16,128], index: 1, kind: input, shape index: {}]
  %s2 = inlined_call_operand.hbm [shape: f32[16,128], index: 2, kind: output, shape index: {}]
  %s3 = sld [smem:[#allocation0]]
  $region49: #{tpu_custom_call.1} parent=0
    _
  %s5 = ssub.s32 1, %s3
  %s6 = scalar_select 0, %s5, %s3
  $region1: #{tpu_custom_call.1} parent=0
    #allocation2 [shape = 'u8[4096]{0}', space=vmem, size = 0x1000, scoped, tag = 'input window, operand 0, single buffered']
    #allocation3 [shape = 's32[2]{0}', space=sflag, size = 0x8, scoped, tag = 'scoped memory for tpu_custom_call.1']
    #allocation4 [shape = 's32[2]{0}', space=sflag, size = 0x8, scoped, tag = 'scoped memory for tpu_custom_call.1']
    #allocation5 [shape = 'u8[8192]{0}', space=vmem, size = 0x2000, scoped, tag = 'input window, operand 1']
    #allocation6 [shape = 's32[2]{0}', space=sflag, size = 0x8, scoped, tag = 'scoped memory for tpu_custom_call.1']
    #allocation7 [shape = 'u8[8192]{0}', space=vmem, size = 0x2000, scoped, tag = 'output window, operand 0']
    %7 = vsyncpa [#allocation3], 0
    %8 = vsyncpa [#allocation6], 0
    %s9 = scalar_lea.sflag [#allocation6], 1
    %10 = vsyncpa %s9, 0
    %11 = vsyncpa [#allocation4], 0
    %s12 = scalar_lea.sflag [#allocation4], 1
    %13 = vsyncpa %s12, 0
    loop: start=0, step=1, limit=4
    $region2: #{tpu_custom_call.1} parent=1 // loop_pre_header
      _
    $region3: #{tpu_custom_call.1} parent=1 // loop_header
      %s15 = sphi 0, %s19
      %p16 = scmp.ge.s32.totalorder %s15, 4
      %s23 = sphi 0, %s23
      %s25 = sphi 0, %s23
      %s26 = sphi 0, %s25
      %s40 = sphi 0, %s26
      %s46 = sphi 0, %s48
      %s49 = sphi 0, %s46
      %s50 = sphi 0, %s49
      %s66 = sphi 0, %s50
      %s72 = sphi 0, %s74
      %s75 = sphi 0, %s72
      %s76 = sphi 0, %s75
      %s92 = sphi 0, %s76
    $region4: #{tpu_custom_call.1} parent=1 // loop_header_branch
      %18 = sbr.rel (%p16) target = $region8
    $region5: #{tpu_custom_call.1} parent=1 // loop_body
      %s20 = ssub.s32 %s15, 1
      %s21 = ssub.s32 %s15, 2
      %s22 = sadd.s32 %s15, 1
      %s24 = sadd.s32 %s23, 1
      %p27 = scmp.eq.s32.totalorder %s15, 1
      %p28 = scmp.ne.s32.totalorder %s23, %s25
      %p29 = scmp.eq.s32.totalorder %s15, 0
      %p30 = por %p28, %p29
      %p31 = scmp.ne.s32.totalorder %s23, %s25
      %p32 = scmp.eq.s32.totalorder %s20, 1
      %p33 = por %p31, %p32
      %p34 = scmp.ne.s32.totalorder %s25, %s26
      %p35 = scmp.eq.s32.totalorder %s20, 0
      %p36 = por %p34, %p35
      %p37 = scmp.ne.s32.totalorder %s25, %s26
      %p38 = scmp.eq.s32.totalorder %s21, 1
      %p39 = por %p37, %p38
      %p41 = scmp.ne.s32.totalorder %s26, %s40
      %p42 = scmp.eq.s32.totalorder %s21, 0
      %p43 = por %p41, %p42
      %s44 = ssub.s32 %s15, %s22
      %p45 = scmp.eq.s32.totalorder %s44, 0
      %s47 = sadd.s32 %s46, 1
      %s48 = scalar_select %p45, %s46, %s47
      %p51 = pneg %p45
      %p52 = scmp.eq.s32.totalorder %s15, 1
      %p53 = por %p51, %p52
      %p54 = scmp.ne.s32.totalorder %s46, %s49
      %p55 = scmp.eq.s32.totalorder %s15, 0
      %p56 = por %p54, %p55
      %p57 = scmp.ne.s32.totalorder %s46, %s49
      %p58 = scmp.eq.s32.totalorder %s20, 1
      %p59 = por %p57, %p58
      %p60 = scmp.ne.s32.totalorder %s49, %s50
      %p61 = scmp.eq.s32.totalorder %s20, 0
      %p62 = por %p60, %p61
      %p63 = scmp.ne.s32.totalorder %s49, %s50
      %p64 = scmp.eq.s32.totalorder %s21, 1
      %p65 = por %p63, %p64
      %p67 = scmp.ne.s32.totalorder %s50, %s66
      %p68 = scmp.eq.s32.totalorder %s21, 0
      %p69 = por %p67, %p68
      %s70 = ssub.s32 %s15, %s22
      %p71 = scmp.eq.s32.totalorder %s70, 0
      %s73 = sadd.s32 %s72, 1
      %s74 = scalar_select %p71, %s72, %s73
      %p77 = pneg %p71
      %p78 = scmp.eq.s32.totalorder %s15, 1
      %p79 = por %p77, %p78
      %p80 = scmp.ne.s32.totalorder %s72, %s75
      %p81 = scmp.eq.s32.totalorder %s15, 0
      %p82 = por %p80, %p81
      %p83 = scmp.ne.s32.totalorder %s72, %s75
      %p84 = scmp.eq.s32.totalorder %s20, 1
      %p85 = por %p83, %p84
      %p86 = scmp.ne.s32.totalorder %s75, %s76
      %p87 = scmp.eq.s32.totalorder %s20, 0
      %p88 = por %p86, %p87
      %p89 = scmp.ne.s32.totalorder %s75, %s76
      %p90 = scmp.eq.s32.totalorder %s21, 1
      %p91 = por %p89, %p90
      %p93 = scmp.ne.s32.totalorder %s76, %s92
      %p94 = scmp.eq.s32.totalorder %s21, 0
      %p95 = por %p93, %p94
      %p96 = scmp.le.s32.totalorder 1, %s15
      %p97 = scmp.lt.s32.totalorder %s15, 3
      %p98 = pnand %p96, %p97
      %p99 = pneg %p98
      // Predicated region
      $region9: #{tpu_custom_call.1} parent=5 // pred_check
        _
      $region10: #{tpu_custom_call.1} parent=5 // pred_check_branch
        %101 = sbr.rel (%p98) target = $region12
      $region11: #{tpu_custom_call.1} parent=5 // pred_region
        %s102 = ssub.s32 %s15, 1
        // Predicated region
        $region13: #{tpu_custom_call.1} parent=11 // pred_check
          %p103 = pneg %p36
        $region14: #{tpu_custom_call.1} parent=11 // pred_check_branch
          %105 = sbr.rel (%p103) target = $region16
        $region15: #{tpu_custom_call.1} parent=11 // pred_region
          %s107 = ssub.s32 128, 128
          %108 = vsyncadd [#allocation3], %s107
          %s110 = sshll.u32 [#allocation2], 4
          %s111 = int_to_ptr.vmem [resolvable:$true] %s110
          %113 = dma.hbm_to_vmem [thread:$0]  %s0, 128, %s111, [#allocation3]
        $region16: #{tpu_custom_call.1} parent=11 // pred_fallthru
          _
      $region12: #{tpu_custom_call.1} parent=5 // pred_fallthru
        _
      %p114 = scmp.lt.s32.totalorder %s15, 2
      // Predicated region
      $region17: #{tpu_custom_call.1} parent=5 // pred_check
        %p115 = pneg %p114
      $region18: #{tpu_custom_call.1} parent=5 // pred_check_branch
        %117 = sbr.rel (%p115) target = $region20
      $region19: #{tpu_custom_call.1} parent=5 // pred_region
        // Predicated region
        $region21: #{tpu_custom_call.1} parent=19 // pred_check
          %p118 = pneg %p56
        $region22: #{tpu_custom_call.1} parent=19 // pred_check_branch
          %120 = sbr.rel (%p118) target = $region24
        $region23: #{tpu_custom_call.1} parent=19 // pred_region
          %s121 = sand.u32 %s46, 1
          %s122 = scalar_lea.sflag [#allocation6], %s121
          %s123 = sand.u32 %s46, 1
          %s124 = smul.addr %s123, 8
          %s125 = scalar_lea.vmem [#allocation5], %s124
          %s127 = ssub.s32 128, 128
          %128 = vsyncadd %s122, %s127
          %s129 = smul.addr %s15, 128
          %s130 = scalar_lea.hbm %s1, %s129
          %s132 = sshll.u32 %s125, 4
          %s133 = int_to_ptr.vmem [resolvable:$true] %s132
          %135 = dma.hbm_to_vmem [thread:$0]  %s130, 128, %s133, %s122
        $region24: #{tpu_custom_call.1} parent=19 // pred_fallthru
          _
      $region20: #{tpu_custom_call.1} parent=5 // pred_fallthru
        _
      %p136 = scmp.le.s32.totalorder 1, %s15
      %p137 = scmp.lt.s32.totalorder %s15, 3
      %p138 = pnand %p136, %p137
      %p139 = pneg %p138
      // Predicated region
      $region25: #{tpu_custom_call.1} parent=5 // pred_check
        _
      $region26: #{tpu_custom_call.1} parent=5 // pred_check_branch
        %141 = sbr.rel (%p138) target = $region28
      $region27: #{tpu_custom_call.1} parent=5 // pred_region
        %s142 = ssub.s32 %s15, 1
        // Predicated region
        $region29: #{tpu_custom_call.1} parent=27 // pred_check
          %p143 = pneg %p36
        $region30: #{tpu_custom_call.1} parent=27 // pred_check_branch
          %145 = sbr.rel (%p143) target = $region32
        $region31: #{tpu_custom_call.1} parent=27 // pred_region
          %146 = dma.done [#allocation3], 128
        $region32: #{tpu_custom_call.1} parent=27 // pred_fallthru
          _
        %s147 = sand.u32 %s49, 1
        %s148 = scalar_lea.sflag [#allocation6], %s147
        %s149 = sand.u32 %s49, 1
        %s150 = smul.addr %s149, 8
        %s151 = scalar_lea.vmem [#allocation5], %s150
        // Predicated region
        $region33: #{tpu_custom_call.1} parent=27 // pred_check
          %p152 = pneg %p62
        $region34: #{tpu_custom_call.1} parent=27 // pred_check_branch
          %154 = sbr.rel (%p152) target = $region36
        $region35: #{tpu_custom_call.1} parent=27 // pred_region
          %155 = dma.done %s148, 128
        $region36: #{tpu_custom_call.1} parent=27 // pred_fallthru
          _
        %p156 = pneg %p36
        %p157 = pneg %p33
        %s158 = sand.u32 %s49, 1
        %s159 = scalar_lea.sflag [#allocation6], %s158
        %s160 = sand.u32 %s49, 1
        %s161 = smul.addr %s160, 8
        %s162 = scalar_lea.vmem [#allocation5], %s161
        %p163 = pneg %p62
        %p164 = pneg %p59
        %p165 = pneg %p88
        %p166 = pneg %p85
        %s167 = sand.u32 %s75, 1
        %s168 = scalar_lea.sflag [#allocation4], %s167
        %s169 = sand.u32 %s75, 1
        %s170 = smul.addr %s169, 8
        %s171 = scalar_lea.vmem [#allocation7], %s170
        %v172 = vld [vmem:[%s151] sm:$0xff]
        %v173 = vld [vmem:[#allocation2] sm:$0xff]
        %v174 = vadd.f32 %v172, %v173
        %175 = vst [vmem:[%s171] sm:$0xff] %v174
        %s176 = sand.u32 %s75, 1
        %s177 = scalar_lea.sflag [#allocation4], %s176
        %s178 = sand.u32 %s75, 1
        %s179 = smul.addr %s178, 8
        %s180 = scalar_lea.vmem [#allocation7], %s179
        // Predicated region
        $region37: #{tpu_custom_call.1} parent=27 // pred_check
          %p181 = pneg %p85
        $region38: #{tpu_custom_call.1} parent=27 // pred_check_branch
          %183 = sbr.rel (%p181) target = $region40
        $region39: #{tpu_custom_call.1} parent=27 // pred_region
          %s185 = ssub.s32 128, 128
          %186 = vsyncadd %s177, %s185
          %s187 = smul.addr %s20, 128
          %s188 = scalar_lea.hbm %s2, %s187
          %s190 = sshll.u32 %s180, 4
          %s191 = int_to_ptr.vmem [resolvable:$true] %s190
          %193 = dma.vmem_to_hbm [thread:$0]  %s191, 128, %s188, %s177
        $region40: #{tpu_custom_call.1} parent=27 // pred_fallthru
          _
      $region28: #{tpu_custom_call.1} parent=5 // pred_fallthru
        _
      %p194 = scmp.le.s32.totalorder 2, %s15
      // Predicated region
      $region41: #{tpu_custom_call.1} parent=5 // pred_check
        %p195 = pneg %p194
      $region42: #{tpu_custom_call.1} parent=5 // pred_check_branch
        %197 = sbr.rel (%p195) target = $region44
      $region43: #{tpu_custom_call.1} parent=5 // pred_region
        %s198 = ssub.s32 %s15, 2
        // Predicated region
        $region45: #{tpu_custom_call.1} parent=43 // pred_check
          %p199 = pneg %p91
        $region46: #{tpu_custom_call.1} parent=43 // pred_check_branch
          %201 = sbr.rel (%p199) target = $region48
        $region47: #{tpu_custom_call.1} parent=43 // pred_region
          %s202 = sand.u32 %s76, 1
          %s203 = scalar_lea.sflag [#allocation4], %s202
          %s204 = sand.u32 %s76, 1
          %s205 = smul.addr %s204, 8
          %s206 = scalar_lea.vmem [#allocation7], %s205
          %207 = dma.done %s203, 128
        $region48: #{tpu_custom_call.1} parent=43 // pred_fallthru
          _
      $region44: #{tpu_custom_call.1} parent=5 // pred_fallthru
        _
    $region6: #{tpu_custom_call.1} parent=1 // loop_footer
      %s19 = sadd.s32 1, %s15
    $region7: #{tpu_custom_call.1} parent=1 // loop_footer_branch
      %14 = sbr.rel target = $region3
    $region8: #{tpu_custom_call.1} parent=1 // loop_exit
      _
    %208 = vsyncpa [#allocation3], 1
    %s209 = scalar_lea.sflag [#allocation3], 1
    %210 = vsyncpa %s209, 1
    %211 = vsyncpa [#allocation6], 1
    %s212 = scalar_lea.sflag [#allocation6], 1
    %213 = vsyncpa %s212, 1
    %214 = vsyncpa [#allocation4], 1
    %s215 = scalar_lea.sflag [#allocation4], 1
    %216 = vsyncpa %s215, 1

// kernel: tpu_custom_call.1
$region0: #{tpu_custom_call.1}
  #allocation0 [shape = 'u32[]', space=smem, size = 0x4, offset = 0x4, fixed_abs, tag = 'smem constant byte address 0x4 - core index']
  #allocation1 [shape = 'u32[144,128]{1,0:T(1,128)}', space=vmem, size = 0x12000, scoped, tag = 'internal scratch']
  #allocation2 [shape = 'bf16[16,8,1152]{2,1,0:T(8,128)(2,1)}', space=vmem, size = 0x48000, scoped, tag = 'scratch operand']
  %s0 = inlined_call_operand.hbm [shape: bf16[2,36,16,128], index: 0, kind: input, shape index: {}]
  %s1 = inlined_call_operand.hbm [shape: bf16[128,128], index: 1, kind: input, shape index: {}]
  %s2 = inlined_call_operand.vmem [shape: f32[1,128], index: 2, kind: input, shape index: {}]
  %s3 = inlined_call_operand.hbm [shape: bf16[1152,128], index: 3, kind: input, shape index: {}]
  %s4 = inlined_call_operand.vmem [shape: f32[1,128], index: 4, kind: input, shape index: {}]
  %s5 = inlined_call_operand.hbm [shape: bf16[128,128], index: 5, kind: input, shape index: {}]
  %s6 = inlined_call_operand.vmem [shape: f32[1,128], index: 6, kind: input, shape index: {}]
  %s7 = inlined_call_operand.hbm [shape: bf16[128,128], index: 7, kind: input, shape index: {}]
  %s8 = inlined_call_operand.hbm [shape: bf16[2,64,128], index: 8, kind: output, shape index: {}]
  %s9 = sld [smem:[#allocation0]]
  $region62: #{tpu_custom_call.1} parent=0
    _
  %s11 = ssub.s32 1, %s9
  %s12 = scalar_select 0, %s11, %s9
  $region1: #{tpu_custom_call.1} parent=0
    #allocation3 [shape = 'u8[294912]{0}', space=vmem, size = 0x48000, scoped, tag = 'input window, operand 0, single buffered']
    #allocation4 [shape = 's32[1]{0}', space=sflag, size = 0x4, scoped, tag = 'scoped memory for tpu_custom_call.1']
    #allocation5 [shape = 's32[1]{0}', space=sflag, size = 0x4, scoped, tag = 'scoped memory for tpu_custom_call.1']
    #allocation6 [shape = 'u8[32768]{0}', space=vmem, size = 0x8000, scoped, tag = 'input window, operand 1, single buffered']
    #allocation7 [shape = 's32[1]{0}', space=sflag, size = 0x4, scoped, tag = 'scoped memory for tpu_custom_call.1']
    #allocation8 [shape = 'u8[294912]{0}', space=vmem, size = 0x48000, scoped, tag = 'input window, operand 3, single buffered']
    #allocation9 [shape = 'u8[32768]{0}', space=vmem, size = 0x8000, scoped, tag = 'input window, operand 5, single buffered']
    #allocation10 [shape = 's32[1]{0}', space=sflag, size = 0x4, scoped, tag = 'scoped memory for tpu_custom_call.1']
    #allocation11 [shape = 'u8[32768]{0}', space=vmem, size = 0x8000, scoped, tag = 'input window, operand 7, single buffered']
    #allocation12 [shape = 'u8[32768]{0}', space=vmem, size = 0x8000, scoped, tag = 'output window, operand 0, single buffered']
    %13 = vsyncpa [#allocation4], 0
    %14 = vsyncpa [#allocation7], 0
    %15 = vsyncpa [#allocation10], 0
    %16 = vsyncpa [#allocation5], 0
    // Predicated region
    $region2: #{tpu_custom_call.1} parent=1 // pred_check
      _
    $region3: #{tpu_custom_call.1} parent=1 // pred_check_branch
      %18 = sbr.rel (0) target = $region5
    $region4: #{tpu_custom_call.1} parent=1 // pred_region
      %s20 = ssub.s32 9216, 9216
      %21 = vsyncadd [#allocation4], %s20
      %s22 = sshll.u32 [#allocation3], 4
      %s23 = int_to_ptr.vmem [resolvable:$true] %s22
      %28 = dma.hbm_to_vmem [thread:$0]  %s0, 9216, %s23, [#allocation4], 64, 64, 4
    $region5: #{tpu_custom_call.1} parent=1 // pred_fallthru
      _
    // Predicated region
    $region6: #{tpu_custom_call.1} parent=1 // pred_check
      _
    $region7: #{tpu_custom_call.1} parent=1 // pred_check_branch
      %30 = sbr.rel (0) target = $region9
    $region8: #{tpu_custom_call.1} parent=1 // pred_region
      %s32 = ssub.s32 1024, 1024
      %33 = vsyncadd [#allocation7], %s32
      %s34 = sshll.u32 [#allocation6], 4
      %s35 = int_to_ptr.vmem [resolvable:$true] %s34
      %40 = dma.hbm_to_vmem [thread:$0]  %s1, 1024, %s35, [#allocation7], 64, 64, 4
    $region9: #{tpu_custom_call.1} parent=1 // pred_fallthru
      _
    // Predicated region
    $region10: #{tpu_custom_call.1} parent=1 // pred_check
      _
    $region11: #{tpu_custom_call.1} parent=1 // pred_check_branch
      %42 = sbr.rel (0) target = $region13
    $region12: #{tpu_custom_call.1} parent=1 // pred_region
      _
    $region13: #{tpu_custom_call.1} parent=1 // pred_fallthru
      _
    // Predicated region
    $region14: #{tpu_custom_call.1} parent=1 // pred_check
      _
    $region15: #{tpu_custom_call.1} parent=1 // pred_check_branch
      %44 = sbr.rel (0) target = $region17
    $region16: #{tpu_custom_call.1} parent=1 // pred_region
      %s46 = ssub.s32 9216, 9216
      %47 = vsyncadd [#allocation7], %s46
      %s48 = sshll.u32 [#allocation8], 4
      %s49 = int_to_ptr.vmem [resolvable:$true] %s48
      %54 = dma.hbm_to_vmem [thread:$0]  %s3, 9216, %s49, [#allocation7], 64, 64, 4
    $region17: #{tpu_custom_call.1} parent=1 // pred_fallthru
      _
    // Predicated region
    $region18: #{tpu_custom_call.1} parent=1 // pred_check
      _
    $region19: #{tpu_custom_call.1} parent=1 // pred_check_branch
      %56 = sbr.rel (0) target = $region21
    $region20: #{tpu_custom_call.1} parent=1 // pred_region
      _
    $region21: #{tpu_custom_call.1} parent=1 // pred_fallthru
      _
    // Predicated region
    $region22: #{tpu_custom_call.1} parent=1 // pred_check
      _
    $region23: #{tpu_custom_call.1} parent=1 // pred_check_branch
      %58 = sbr.rel (0) target = $region25
    $region24: #{tpu_custom_call.1} parent=1 // pred_region
      %s60 = ssub.s32 1024, 1024
      %61 = vsyncadd [#allocation10], %s60
      %s62 = sshll.u32 [#allocation9], 4
      %s63 = int_to_ptr.vmem [resolvable:$true] %s62
      %68 = dma.hbm_to_vmem [thread:$0]  %s5, 1024, %s63, [#allocation10], 64, 64, 4
    $region25: #{tpu_custom_call.1} parent=1 // pred_fallthru
      _
    // Predicated region
    $region26: #{tpu_custom_call.1} parent=1 // pred_check
      _
    $region27: #{tpu_custom_call.1} parent=1 // pred_check_branch
      %70 = sbr.rel (0) target = $region29
    $region28: #{tpu_custom_call.1} parent=1 // pred_region
      _
    $region29: #{tpu_custom_call.1} parent=1 // pred_fallthru
      _
    // Predicated region
    $region30: #{tpu_custom_call.1} parent=1 // pred_check
      _
    $region31: #{tpu_custom_call.1} parent=1 // pred_check_branch
      %72 = sbr.rel (0) target = $region33
    $region32: #{tpu_custom_call.1} parent=1 // pred_region
      %s74 = ssub.s32 1024, 1024
      %75 = vsyncadd [#allocation10], %s74
      %s76 = sshll.u32 [#allocation11], 4
      %s77 = int_to_ptr.vmem [resolvable:$true] %s76
      %82 = dma.hbm_to_vmem [thread:$0]  %s7, 1024, %s77, [#allocation10], 64, 64, 4
    $region33: #{tpu_custom_call.1} parent=1 // pred_fallthru
      _
    // Predicated region
    $region34: #{tpu_custom_call.1} parent=1 // pred_check
      _
    $region35: #{tpu_custom_call.1} parent=1 // pred_check_branch
      %84 = sbr.rel (0) target = $region37
    $region36: #{tpu_custom_call.1} parent=1 // pred_region
      %85 = dma.done [#allocation4], 9216
    $region37: #{tpu_custom_call.1} parent=1 // pred_fallthru
      _
    // Predicated region
    $region38: #{tpu_custom_call.1} parent=1 // pred_check
      _
    $region39: #{tpu_custom_call.1} parent=1 // pred_check_branch
      %87 = sbr.rel (0) target = $region41
    $region40: #{tpu_custom_call.1} parent=1 // pred_region
      %88 = dma.done [#allocation7], 1024
    $region41: #{tpu_custom_call.1} parent=1 // pred_fallthru
      _
    // Predicated region
    $region42: #{tpu_custom_call.1} parent=1 // pred_check
      _
    $region43: #{tpu_custom_call.1} parent=1 // pred_check_branch
      %90 = sbr.rel (0) target = $region45
    $region44: #{tpu_custom_call.1} parent=1 // pred_region
      %91 = dma.done [#allocation7], 9216
    $region45: #{tpu_custom_call.1} parent=1 // pred_fallthru
      _
    // Predicated region
    $region46: #{tpu_custom_call.1} parent=1 // pred_check
      _
    $region47: #{tpu_custom_call.1} parent=1 // pred_check_branch
      %93 = sbr.rel (0) target = $region49
    $region48: #{tpu_custom_call.1} parent=1 // pred_region
      %94 = dma.done [#allocation10], 1024
    $region49: #{tpu_custom_call.1} parent=1 // pred_fallthru
      _
    // Predicated region
    $region50: #{tpu_custom_call.1} parent=1 // pred_check
      _
    $region51: #{tpu_custom_call.1} parent=1 // pred_check_branch
      %96 = sbr.rel (0) target = $region53
    $region52: #{tpu_custom_call.1} parent=1 // pred_region
      %97 = dma.done [#allocation10], 1024
    $region53: #{tpu_custom_call.1} parent=1 // pred_fallthru
      _
    %v99 = vld [vmem:[#allocation3] sm:$0xf]
    %v100 = vld [vmem:[#allocation3 + $0x4] sm:$0xf]
    %v101 = vld [vmem:[#allocation3 + $0x8] sm:$0xf]
    %v102 = vld [vmem:[#allocation3 + $0xc] sm:$0xf]
    %v103 = vld [vmem:[#allocation3 + $0x10] sm:$0xf]
    %v104 = vld [vmem:[#allocation3 + $0x14] sm:$0xf]
    %v105 = vld [vmem:[#allocation3 + $0x18] sm:$0xf]
    %v106 = vld [vmem:[#allocation3 + $0x1c] sm:$0xf]
    %v107 = vld [vmem:[#allocation3 + $0x20] sm:$0xf]
    %v108 = vld [vmem:[#allocation3 + $0x24] sm:$0xf]
    %v109 = vld [vmem:[#allocation3 + $0x28] sm:$0xf]
    %v110 = vld [vmem:[#allocation3 + $0x2c] sm:$0xf]
    %v111 = vld [vmem:[#allocation3 + $0x30] sm:$0xf]
    %v112 = vld [vmem:[#allocation3 + $0x34] sm:$0xf]
    %v113 = vld [vmem:[#allocation3 + $0x38] sm:$0xf]
    %v114 = vld [vmem:[#allocation3 + $0x3c] sm:$0xf]
    %v115 = vld [vmem:[#allocation3 + $0x40] sm:$0xf]
    %v116 = vld [vmem:[#allocation3 + $0x44] sm:$0xf]
    %v117 = vld [vmem:[#allocation3 + $0x48] sm:$0xf]
    %v118 = vld [vmem:[#allocation3 + $0x4c] sm:$0xf]
    %v119 = vld [vmem:[#allocation3 + $0x50] sm:$0xf]
    %v120 = vld [vmem:[#allocation3 + $0x54] sm:$0xf]
    %v121 = vld [vmem:[#allocation3 + $0x58] sm:$0xf]
    %v122 = vld [vmem:[#allocation3 + $0x5c] sm:$0xf]
    %v123 = vld [vmem:[#allocation3 + $0x60] sm:$0xf]
    %v124 = vld [vmem:[#allocation3 + $0x64] sm:$0xf]
    %v125 = vld [vmem:[#allocation3 + $0x68] sm:$0xf]
    %v126 = vld [vmem:[#allocation3 + $0x6c] sm:$0xf]
    %v127 = vld [vmem:[#allocation3 + $0x70] sm:$0xf]
    %v128 = vld [vmem:[#allocation3 + $0x74] sm:$0xf]
    %v129 = vld [vmem:[#allocation3 + $0x78] sm:$0xf]
    %v130 = vld [vmem:[#allocation3 + $0x7c] sm:$0xf]
    %v131 = vld [vmem:[#allocation3 + $0x80] sm:$0xf]
    %v132 = vld [vmem:[#allocation3 + $0x84] sm:$0xf]
    %v133 = vld [vmem:[#allocation3 + $0x88] sm:$0xf]
    %v134 = vld [vmem:[#allocation3 + $0x8c] sm:$0xf]
    %v135 = vld [vmem:[#allocation3 + $0x90] sm:$0xf]
    %v136 = vld [vmem:[#allocation3 + $0x94] sm:$0xf]
    %v137 = vld [vmem:[#allocation3 + $0x98] sm:$0xf]
    %v138 = vld [vmem:[#allocation3 + $0x9c] sm:$0xf]
    %v139 = vld [vmem:[#allocation3 + $0xa0] sm:$0xf]
    %v140 = vld [vmem:[#allocation3 + $0xa4] sm:$0xf]
    %v141 = vld [vmem:[#allocation3 + $0xa8] sm:$0xf]
    %v142 = vld [vmem:[#allocation3 + $0xac] sm:$0xf]
    %v143 = vld [vmem:[#allocation3 + $0xb0] sm:$0xf]
    %v144 = vld [vmem:[#allocation3 + $0xb4] sm:$0xf]
    %v145 = vld [vmem:[#allocation3 + $0xb8] sm:$0xf]
    %v146 = vld [vmem:[#allocation3 + $0xbc] sm:$0xf]
    %v147 = vld [vmem:[#allocation3 + $0xc0] sm:$0xf]
    %v148 = vld [vmem:[#allocation3 + $0xc4] sm:$0xf]
    %v149 = vld [vmem:[#allocation3 + $0xc8] sm:$0xf]
    %v150 = vld [vmem:[#allocation3 + $0xcc] sm:$0xf]
    %v151 = vld [vmem:[#allocation3 + $0xd0] sm:$0xf]
    %v152 = vld [vmem:[#allocation3 + $0xd4] sm:$0xf]
    %v153 = vld [vmem:[#allocation3 + $0xd8] sm:$0xf]
    %v154 = vld [vmem:[#allocation3 + $0xdc] sm:$0xf]
    %v155 = vld [vmem:[#allocation3 + $0xe0] sm:$0xf]
    %v156 = vld [vmem:[#allocation3 + $0xe4] sm:$0xf]
    %v157 = vld [vmem:[#allocation3 + $0xe8] sm:$0xf]
    %v158 = vld [vmem:[#allocation3 + $0xec] sm:$0xf]
    %v159 = vld [vmem:[#allocation3 + $0xf0] sm:$0xf]
    %v160 = vld [vmem:[#allocation3 + $0xf4] sm:$0xf]
    %v161 = vld [vmem:[#allocation3 + $0xf8] sm:$0xf]
    %v162 = vld [vmem:[#allocation3 + $0xfc] sm:$0xf]
    %v163 = vld [vmem:[#allocation3 + $0x100] sm:$0xf]
    %v164 = vld [vmem:[#allocation3 + $0x104] sm:$0xf]
    %v165 = vld [vmem:[#allocation3 + $0x108] sm:$0xf]
    %v166 = vld [vmem:[#allocation3 + $0x10c] sm:$0xf]
    %v167 = vld [vmem:[#allocation3 + $0x110] sm:$0xf]
    %v168 = vld [vmem:[#allocation3 + $0x114] sm:$0xf]
    %v169 = vld [vmem:[#allocation3 + $0x118] sm:$0xf]
    %v170 = vld [vmem:[#allocation3 + $0x11c] sm:$0xf]
    %v171 = vld [vmem:[#allocation3 + $0x120] sm:$0xf]
    %v172 = vld [vmem:[#allocation3 + $0x124] sm:$0xf]
    %v173 = vld [vmem:[#allocation3 + $0x128] sm:$0xf]
    %v174 = vld [vmem:[#allocation3 + $0x12c] sm:$0xf]
    %v175 = vld [vmem:[#allocation3 + $0x130] sm:$0xf]
    %v176 = vld [vmem:[#allocation3 + $0x134] sm:$0xf]
    %v177 = vld [vmem:[#allocation3 + $0x138] sm:$0xf]
    %v178 = vld [vmem:[#allocation3 + $0x13c] sm:$0xf]
    %v179 = vld [vmem:[#allocation3 + $0x140] sm:$0xf]
    %v180 = vld [vmem:[#allocation3 + $0x144] sm:$0xf]
    %v181 = vld [vmem:[#allocation3 + $0x148] sm:$0xf]
    %v182 = vld [vmem:[#allocation3 + $0x14c] sm:$0xf]
    %v183 = vld [vmem:[#allocation3 + $0x150] sm:$0xf]
    %v184 = vld [vmem:[#allocation3 + $0x154] sm:$0xf]
    %v185 = vld [vmem:[#allocation3 + $0x158] sm:$0xf]
    %v186 = vld [vmem:[#allocation3 + $0x15c] sm:$0xf]
    %v187 = vld [vmem:[#allocation3 + $0x160] sm:$0xf]
    %v188 = vld [vmem:[#allocation3 + $0x164] sm:$0xf]
    %v189 = vld [vmem:[#allocation3 + $0x168] sm:$0xf]
    %v190 = vld [vmem:[#allocation3 + $0x16c] sm:$0xf]
    %v191 = vld [vmem:[#allocation3 + $0x170] sm:$0xf]
    %v192 = vld [vmem:[#allocation3 + $0x174] sm:$0xf]
    %v193 = vld [vmem:[#allocation3 + $0x178] sm:$0xf]
    %v194 = vld [vmem:[#allocation3 + $0x17c] sm:$0xf]
    %v195 = vld [vmem:[#allocation3 + $0x180] sm:$0xf]
    %v196 = vld [vmem:[#allocation3 + $0x184] sm:$0xf]
    %v197 = vld [vmem:[#allocation3 + $0x188] sm:$0xf]
    %v198 = vld [vmem:[#allocation3 + $0x18c] sm:$0xf]
    %v199 = vld [vmem:[#allocation3 + $0x190] sm:$0xf]
    %v200 = vld [vmem:[#allocation3 + $0x194] sm:$0xf]
    %v201 = vld [vmem:[#allocation3 + $0x198] sm:$0xf]
    %v202 = vld [vmem:[#allocation3 + $0x19c] sm:$0xf]
    %v203 = vld [vmem:[#allocation3 + $0x1a0] sm:$0xf]
    %v204 = vld [vmem:[#allocation3 + $0x1a4] sm:$0xf]
    %v205 = vld [vmem:[#allocation3 + $0x1a8] sm:$0xf]
    %v206 = vld [vmem:[#allocation3 + $0x1ac] sm:$0xf]
    %v207 = vld [vmem:[#allocation3 + $0x1b0] sm:$0xf]
    %v208 = vld [vmem:[#allocation3 + $0x1b4] sm:$0xf]
    %v209 = vld [vmem:[#allocation3 + $0x1b8] sm:$0xf]
    %v210 = vld [vmem:[#allocation3 + $0x1bc] sm:$0xf]
    %v211 = vld [vmem:[#allocation3 + $0x1c0] sm:$0xf]
    %v212 = vld [vmem:[#allocation3 + $0x1c4] sm:$0xf]
    %v213 = vld [vmem:[#allocation3 + $0x1c8] sm:$0xf]
    %v214 = vld [vmem:[#allocation3 + $0x1cc] sm:$0xf]
    %v215 = vld [vmem:[#allocation3 + $0x1d0] sm:$0xf]
    %v216 = vld [vmem:[#allocation3 + $0x1d4] sm:$0xf]
    %v217 = vld [vmem:[#allocation3 + $0x1d8] sm:$0xf]
    %v218 = vld [vmem:[#allocation3 + $0x1dc] sm:$0xf]
    %v219 = vld [vmem:[#allocation3 + $0x1e0] sm:$0xf]
    %v220 = vld [vmem:[#allocation3 + $0x1e4] sm:$0xf]
    %v221 = vld [vmem:[#allocation3 + $0x1e8] sm:$0xf]
    %v222 = vld [vmem:[#allocation3 + $0x1ec] sm:$0xf]
    %v223 = vld [vmem:[#allocation3 + $0x1f0] sm:$0xf]
    %v224 = vld [vmem:[#allocation3 + $0x1f4] sm:$0xf]
    %v225 = vld [vmem:[#allocation3 + $0x1f8] sm:$0xf]
    %v226 = vld [vmem:[#allocation3 + $0x1fc] sm:$0xf]
    %v227 = vld [vmem:[#allocation3 + $0x200] sm:$0xf]
    %v228 = vld [vmem:[#allocation3 + $0x204] sm:$0xf]
    %v229 = vld [vmem:[#allocation3 + $0x208] sm:$0xf]
    %v230 = vld [vmem:[#allocation3 + $0x20c] sm:$0xf]
    %v231 = vld [vmem:[#allocation3 + $0x210] sm:$0xf]
    %v232 = vld [vmem:[#allocation3 + $0x214] sm:$0xf]
    %v233 = vld [vmem:[#allocation3 + $0x218] sm:$0xf]
    %v234 = vld [vmem:[#allocation3 + $0x21c] sm:$0xf]
    %v235 = vld [vmem:[#allocation3 + $0x220] sm:$0xf]
    %v236 = vld [vmem:[#allocation3 + $0x224] sm:$0xf]
    %v237 = vld [vmem:[#allocation3 + $0x228] sm:$0xf]
    %v238 = vld [vmem:[#allocation3 + $0x22c] sm:$0xf]
    %v239 = vld [vmem:[#allocation3 + $0x230] sm:$0xf]
    %v240 = vld [vmem:[#allocation3 + $0x234] sm:$0xf]
    %v241 = vld [vmem:[#allocation3 + $0x238] sm:$0xf]
    %v242 = vld [vmem:[#allocation3 + $0x23c] sm:$0xf]
    %v243 = vld [vmem:[#allocation6] sm:$0xf]
    %v244 = vld [vmem:[#allocation6 + $0x4] sm:$0xf]
    %v245 = vld [vmem:[#allocation6 + $0x8] sm:$0xf]
    %v246 = vld [vmem:[#allocation6 + $0xc] sm:$0xf]
    %v247 = vld [vmem:[#allocation6 + $0x10] sm:$0xf]
    %v248 = vld [vmem:[#allocation6 + $0x14] sm:$0xf]
    %v249 = vld [vmem:[#allocation6 + $0x18] sm:$0xf]
    %v250 = vld [vmem:[#allocation6 + $0x1c] sm:$0xf]
    %v251 = vld [vmem:[#allocation6 + $0x20] sm:$0xf]
    %v252 = vld [vmem:[#allocation6 + $0x24] sm:$0xf]
    %v253 = vld [vmem:[#allocation6 + $0x28] sm:$0xf]
    %v254 = vld [vmem:[#allocation6 + $0x2c] sm:$0xf]
    %v255 = vld [vmem:[#allocation6 + $0x30] sm:$0xf]
    %v256 = vld [vmem:[#allocation6 + $0x34] sm:$0xf]
    %v257 = vld [vmem:[#allocation6 + $0x38] sm:$0xf]
    %v258 = vld [vmem:[#allocation6 + $0x3c] sm:$0xf]
    %v259 = vld [vmem:[%s2] sm:$0x1]
    %v261 = vlaneseq
    %v262 = vshrl.u32 %v261, 7
    %v263 = vsub.s32 0, %v262
    %v264 = vrot.slane %v259, %v263
    %v410 = vunpack.c.l.b16 %v99
    %v411 = vunpack.c.l.b16 %v100
    %v412 = vunpack.c.l.b16 %v101
    %v413 = vunpack.c.l.b16 %v102
    %v414 = vunpack.c.l.b16 %v103
    %v415 = vunpack.c.l.b16 %v104
    %v416 = vunpack.c.l.b16 %v105
    %v417 = vunpack.c.l.b16 %v106
    %v418 = vunpack.c.l.b16 %v107
    %v419 = vunpack.c.l.b16 %v108
    %v420 = vunpack.c.l.b16 %v109
    %v421 = vunpack.c.l.b16 %v110
    %v422 = vunpack.c.l.b16 %v111
    %v423 = vunpack.c.l.b16 %v112
    %v424 = vunpack.c.l.b16 %v113
    %v425 = vunpack.c.l.b16 %v114
    %v426 = vunpack.c.l.b16 %v115
    %v427 = vunpack.c.l.b16 %v116
    %v428 = vunpack.c.l.b16 %v117
    %v429 = vunpack.c.l.b16 %v118
    %v430 = vunpack.c.l.b16 %v119
    %v431 = vunpack.c.l.b16 %v120
    %v432 = vunpack.c.l.b16 %v121
    %v433 = vunpack.c.l.b16 %v122
    %v434 = vunpack.c.l.b16 %v123
    %v435 = vunpack.c.l.b16 %v124
    %v436 = vunpack.c.l.b16 %v125
    %v437 = vunpack.c.l.b16 %v126
    %v438 = vunpack.c.l.b16 %v127
    %v439 = vunpack.c.l.b16 %v128
    %v440 = vunpack.c.l.b16 %v129
    %v441 = vunpack.c.l.b16 %v130
    %v442 = vunpack.c.l.b16 %v131
    %v443 = vunpack.c.l.b16 %v132
    %v444 = vunpack.c.l.b16 %v133
    %v445 = vunpack.c.l.b16 %v134
    %v446 = vunpack.c.l.b16 %v135
    %v447 = vunpack.c.l.b16 %v136
    %v448 = vunpack.c.l.b16 %v137
    %v449 = vunpack.c.l.b16 %v138
    %v450 = vunpack.c.l.b16 %v139
    %v451 = vunpack.c.l.b16 %v140
    %v452 = vunpack.c.l.b16 %v141
    %v453 = vunpack.c.l.b16 %v142
    %v454 = vunpack.c.l.b16 %v143
    %v455 = vunpack.c.l.b16 %v144
    %v456 = vunpack.c.l.b16 %v145
    %v457 = vunpack.c.l.b16 %v146
    %v458 = vunpack.c.l.b16 %v147
    %v459 = vunpack.c.l.b16 %v148
    %v460 = vunpack.c.l.b16 %v149
    %v461 = vunpack.c.l.b16 %v150
    %v462 = vunpack.c.l.b16 %v151
    %v463 = vunpack.c.l.b16 %v152
    %v464 = vunpack.c.l.b16 %v153
    %v465 = vunpack.c.l.b16 %v154
    %v466 = vunpack.c.l.b16 %v155
    %v467 = vunpack.c.l.b16 %v156
    %v468 = vunpack.c.l.b16 %v157
    %v469 = vunpack.c.l.b16 %v158
    %v470 = vunpack.c.l.b16 %v159
    %v471 = vunpack.c.l.b16 %v160
    %v472 = vunpack.c.l.b16 %v161
    %v473 = vunpack.c.l.b16 %v162
    %v474 = vunpack.c.l.b16 %v163
    %v475 = vunpack.c.l.b16 %v164
    %v476 = vunpack.c.l.b16 %v165
    %v477 = vunpack.c.l.b16 %v166
    %v478 = vunpack.c.l.b16 %v167
    %v479 = vunpack.c.l.b16 %v168
    %v480 = vunpack.c.l.b16 %v169
    %v481 = vunpack.c.l.b16 %v170
    %v482 = vunpack.c.l.b16 %v171
    %v483 = vunpack.c.l.b16 %v172
    %v484 = vunpack.c.l.b16 %v173
    %v485 = vunpack.c.l.b16 %v174
    %v486 = vunpack.c.l.b16 %v175
    %v487 = vunpack.c.l.b16 %v176
    %v488 = vunpack.c.l.b16 %v177
    %v489 = vunpack.c.l.b16 %v178
    %v490 = vunpack.c.l.b16 %v179
    %v491 = vunpack.c.l.b16 %v180
    %v492 = vunpack.c.l.b16 %v181
    %v493 = vunpack.c.l.b16 %v182
    %v494 = vunpack.c.l.b16 %v183
    %v495 = vunpack.c.l.b16 %v184
    %v496 = vunpack.c.l.b16 %v185
    %v497 = vunpack.c.l.b16 %v186
    %v498 = vunpack.c.l.b16 %v187
    %v499 = vunpack.c.l.b16 %v188
    %v500 = vunpack.c.l.b16 %v189
    %v501 = vunpack.c.l.b16 %v190
    %v502 = vunpack.c.l.b16 %v191
    %v503 = vunpack.c.l.b16 %v192
    %v504 = vunpack.c.l.b16 %v193
    %v505 = vunpack.c.l.b16 %v194
    %v506 = vunpack.c.l.b16 %v195
    %v507 = vunpack.c.l.b16 %v196
    %v508 = vunpack.c.l.b16 %v197
    %v509 = vunpack.c.l.b16 %v198
    %v510 = vunpack.c.l.b16 %v199
    %v511 = vunpack.c.l.b16 %v200
    %v512 = vunpack.c.l.b16 %v201
    %v513 = vunpack.c.l.b16 %v202
    %v514 = vunpack.c.l.b16 %v203
    %v515 = vunpack.c.l.b16 %v204
    %v516 = vunpack.c.l.b16 %v205
    %v517 = vunpack.c.l.b16 %v206
    %v518 = vunpack.c.l.b16 %v207
    %v519 = vunpack.c.l.b16 %v208
    %v520 = vunpack.c.l.b16 %v209
    %v521 = vunpack.c.l.b16 %v210
    %v522 = vunpack.c.l.b16 %v211
    %v523 = vunpack.c.l.b16 %v212
    %v524 = vunpack.c.l.b16 %v213
    %v525 = vunpack.c.l.b16 %v214
    %v526 = vunpack.c.l.b16 %v215
    %v527 = vunpack.c.l.b16 %v216
    %v528 = vunpack.c.l.b16 %v217
    %v529 = vunpack.c.l.b16 %v218
    %v530 = vunpack.c.l.b16 %v219
    %v531 = vunpack.c.l.b16 %v220
    %v532 = vunpack.c.l.b16 %v221
    %v533 = vunpack.c.l.b16 %v222
    %v534 = vunpack.c.l.b16 %v223
    %v535 = vunpack.c.l.b16 %v224
    %v536 = vunpack.c.l.b16 %v225
    %v537 = vunpack.c.l.b16 %v226
    %v538 = vunpack.c.l.b16 %v227
    %v539 = vunpack.c.l.b16 %v228
    %v540 = vunpack.c.l.b16 %v229
    %v541 = vunpack.c.l.b16 %v230
    %v542 = vunpack.c.l.b16 %v231
    %v543 = vunpack.c.l.b16 %v232
    %v544 = vunpack.c.l.b16 %v233
    %v545 = vunpack.c.l.b16 %v234
    %v546 = vunpack.c.l.b16 %v235
    %v547 = vunpack.c.l.b16 %v236
    %v548 = vunpack.c.l.b16 %v237
    %v549 = vunpack.c.l.b16 %v238
    %v550 = vunpack.c.l.b16 %v239
    %v551 = vunpack.c.l.b16 %v240
    %v552 = vunpack.c.l.b16 %v241
    %v553 = vunpack.c.l.b16 %v242
    %v554 = vpack.c.b16 %v411, %v410
    %v555 = vpack.c.b16 %v413, %v412
    %v556 = vpack.c.b16 %v415, %v414
    %v557 = vpack.c.b16 %v417, %v416
    %v558 = vpack.c.b16 %v419, %v418
    %v559 = vpack.c.b16 %v421, %v420
    %v560 = vpack.c.b16 %v423, %v422
    %v561 = vpack.c.b16 %v425, %v424
    %v562 = vpack.c.b16 %v427, %v426
    %v563 = vpack.c.b16 %v429, %v428
    %v564 = vpack.c.b16 %v431, %v430
    %v565 = vpack.c.b16 %v433, %v432
    %v566 = vpack.c.b16 %v435, %v434
    %v567 = vpack.c.b16 %v437, %v436
    %v568 = vpack.c.b16 %v439, %v438
    %v569 = vpack.c.b16 %v441, %v440
    %v570 = vpack.c.b16 %v443, %v442
    %v571 = vpack.c.b16 %v445, %v444
    %v572 = vpack.c.b16 %v447, %v446
    %v573 = vpack.c.b16 %v449, %v448
    %v574 = vpack.c.b16 %v451, %v450
    %v575 = vpack.c.b16 %v453, %v452
    %v576 = vpack.c.b16 %v455, %v454
    %v577 = vpack.c.b16 %v457, %v456
    %v578 = vpack.c.b16 %v459, %v458
    %v579 = vpack.c.b16 %v461, %v460
    %v580 = vpack.c.b16 %v463, %v462
    %v581 = vpack.c.b16 %v465, %v464
    %v582 = vpack.c.b16 %v467, %v466
    %v583 = vpack.c.b16 %v469, %v468
    %v584 = vpack.c.b16 %v471, %v470
    %v585 = vpack.c.b16 %v473, %v472
    %v586 = vpack.c.b16 %v475, %v474
    %v587 = vpack.c.b16 %v477, %v476
    %v588 = vpack.c.b16 %v479, %v478
    %v589 = vpack.c.b16 %v481, %v480
    %v590 = vpack.c.b16 %v483, %v482
    %v591 = vpack.c.b16 %v485, %v484
    %v592 = vpack.c.b16 %v487, %v486
    %v593 = vpack.c.b16 %v489, %v488
    %v594 = vpack.c.b16 %v491, %v490
    %v595 = vpack.c.b16 %v493, %v492
    %v596 = vpack.c.b16 %v495, %v494
    %v597 = vpack.c.b16 %v497, %v496
    %v598 = vpack.c.b16 %v499, %v498
    %v599 = vpack.c.b16 %v501, %v500
    %v600 = vpack.c.b16 %v503, %v502
    %v601 = vpack.c.b16 %v505, %v504
    %v602 = vpack.c.b16 %v507, %v506
    %v603 = vpack.c.b16 %v509, %v508
    %v604 = vpack.c.b16 %v511, %v510
    %v605 = vpack.c.b16 %v513, %v512
    %v606 = vpack.c.b16 %v515, %v514
    %v607 = vpack.c.b16 %v517, %v516
    %v608 = vpack.c.b16 %v519, %v518
    %v609 = vpack.c.b16 %v521, %v520
    %v610 = vpack.c.b16 %v523, %v522
    %v611 = vpack.c.b16 %v525, %v524
    %v612 = vpack.c.b16 %v527, %v526
    %v613 = vpack.c.b16 %v529, %v528
    %v614 = vpack.c.b16 %v531, %v530
    %v615 = vpack.c.b16 %v533, %v532
    %v616 = vpack.c.b16 %v535, %v534
    %v617 = vpack.c.b16 %v537, %v536
    %v618 = vpack.c.b16 %v539, %v538
    %v619 = vpack.c.b16 %v541, %v540
    %v620 = vpack.c.b16 %v543, %v542
    %v621 = vpack.c.b16 %v545, %v544
    %v622 = vpack.c.b16 %v547, %v546
    %v623 = vpack.c.b16 %v549, %v548
    %v624 = vpack.c.b16 %v551, %v550
    %v625 = vpack.c.b16 %v553, %v552
    %v714 = vunpack.c.l.b16 %v243
    %v715 = vunpack.c.l.b16 %v244
    %v716 = vunpack.c.l.b16 %v245
    %v717 = vunpack.c.l.b16 %v246
    %v718 = vunpack.c.l.b16 %v247
    %v719 = vunpack.c.l.b16 %v248
    %v720 = vunpack.c.l.b16 %v249
    %v721 = vunpack.c.l.b16 %v250
    %v722 = vunpack.c.l.b16 %v251
    %v723 = vunpack.c.l.b16 %v252
    %v724 = vunpack.c.l.b16 %v253
    %v725 = vunpack.c.l.b16 %v254
    %v726 = vunpack.c.l.b16 %v255
    %v727 = vunpack.c.l.b16 %v256
    %v728 = vunpack.c.l.b16 %v257
    %v729 = vunpack.c.l.b16 %v258
    %v730 = vpack.c.b16 %v715, %v714
    %v731 = vpack.c.b16 %v717, %v716
    %v732 = vpack.c.b16 %v719, %v718
    %v733 = vpack.c.b16 %v721, %v720
    %v734 = vpack.c.b16 %v723, %v722
    %v735 = vpack.c.b16 %v725, %v724
    %v736 = vpack.c.b16 %v727, %v726
    %v737 = vpack.c.b16 %v729, %v728
    %746 = vmatprep.subr.bf16.mxu0 0
    %747 = vmatpush1.bf16.msra.mxu0 %v730
    %748 = vmatprep.subr.bf16.mxu0 0
    %749 = vmatpush1.bf16.msra.mxu0 %v731
    %750 = vmatprep.subr.bf16.mxu0 0
    %751 = vmatpush1.bf16.msra.mxu0 %v732
    %752 = vmatprep.subr.bf16.mxu0 0
    %753 = vmatpush1.bf16.msra.mxu0 %v733
    %754 = vmatprep.subr.bf16.mxu0 0
    %755 = vmatpush1.bf16.msra.mxu0 %v734
    %756 = vmatprep.subr.bf16.mxu0 0
    %757 = vmatpush1.bf16.msra.mxu0 %v735
    %758 = vmatprep.subr.bf16.mxu0 0
    %759 = vmatpush1.bf16.msra.mxu0 %v736
    %760 = vmatprep.subr.bf16.mxu0 0
    %761 = vmatpush1.bf16.msra.mxu0 %v737
    %762 = vmatprep.subr.bf16.mxu0 0
    %763 = vmatpush1.bf16.msra.mxu0 0
    %764 = vmatprep.subr.bf16.mxu0 0
    %765 = vmatpush1.bf16.msra.mxu0 0
    %766 = vmatprep.subr.bf16.mxu0 0
    %767 = vmatpush1.bf16.msra.mxu0 0
    %768 = vmatprep.subr.bf16.mxu0 0
    %769 = vmatpush1.bf16.msra.mxu0 0
    %770 = vmatprep.subr.bf16.mxu0 0
    %771 = vmatpush1.bf16.msra.mxu0 0
    %772 = vmatprep.subr.bf16.mxu0 0
    %773 = vmatpush1.bf16.msra.mxu0 0
    %774 = vmatprep.subr.bf16.mxu0 0
    %775 = vmatpush1.bf16.msra.mxu0 0
    %776 = vmatprep.subr.bf16.mxu0 0
    %777 = vmatpush1.bf16.msra.mxu0 0
    %778 = vmatprep.mubr.bf16.mxu0 0
    %779 = vmatmul.mubr.bf16.gmra.mrb[0].mxu0 %v554
    %v780 = vpop.f32.mrb[0].mxu0
    %v781 = vadd.f32 %v264, %v780
    %v782 = vpop.f32.mrb[0].mxu0
    %v783 = vpop.f32.mrb[0].mxu0
    %v784 = vadd.f32 %v264, %v783
    %v785 = vpop.f32.mrb[0].mxu0
    %786 = vmatprep.mubr.bf16.mxu0 0
    %787 = vmatmul.mubr.bf16.gmra.mrb[0].mxu0 %v555
    %v788 = vpop.f32.mrb[0].mxu0
    %v789 = vadd.f32 %v264, %v788
    %v790 = vpop.f32.mrb[0].mxu0
    %v791 = vpop.f32.mrb[0].mxu0
    %v792 = vadd.f32 %v264, %v791
    %v793 = vpop.f32.mrb[0].mxu0
    %794 = vmatprep.mubr.bf16.mxu0 0
    %795 = vmatmul.mubr.bf16.gmra.mrb[0].mxu0 %v556
    %v796 = vpop.f32.mrb[0].mxu0
    %v797 = vadd.f32 %v264, %v796
    %v798 = vpop.f32.mrb[0].mxu0
    %v799 = vpop.f32.mrb[0].mxu0
    %v800 = vadd.f32 %v264, %v799
    %v801 = vpop.f32.mrb[0].mxu0
    %802 = vmatprep.mubr.bf16.mxu0 0
    %803 = vmatmul.mubr.bf16.gmra.mrb[0].mxu0 %v557
    %v804 = vpop.f32.mrb[0].mxu0
    %v805 = vadd.f32 %v264, %v804
    %v806 = vpop.f32.mrb[0].mxu0
    %v807 = vpop.f32.mrb[0].mxu0
    %v808 = vadd.f32 %v264, %v807
    %v809 = vpop.f32.mrb[0].mxu0
    %810 = vmatprep.mubr.bf16.mxu0 0
    %811 = vmatmul.mubr.bf16.gmra.mrb[0].mxu0 %v558
    %v812 = vpop.f32.mrb[0].mxu0
    %v813 = vadd.f32 %v264, %v812
    %v814 = vpop.f32.mrb[0].mxu0
    %v815 = vpop.f32.mrb[0].mxu0
    %v816 = vadd.f32 %v264, %v815
    %v817 = vpop.f32.mrb[0].mxu0
    %818 = vmatprep.mubr.bf16.mxu0 0
    %819 = vmatmul.mubr.bf16.gmra.mrb[0].mxu0 %v559
    %v820 = vpop.f32.mrb[0].mxu0
    %v821 = vadd.f32 %v264, %v820
    %v822 = vpop.f32.mrb[0].mxu0
    %v823 = vpop.f32.mrb[0].mxu0
    %v824 = vadd.f32 %v264, %v823
    %v825 = vpop.f32.mrb[0].mxu0
    %826 = vmatprep.mubr.bf16.mxu0 0
    %827 = vmatmul.mubr.bf16.gmra.mrb[0].mxu0 %v560
    %v828 = vpop.f32.mrb[0].mxu0
    %v829 = vadd.f32 %v264, %v828
    %v830 = vpop.f32.mrb[0].mxu0
    %v831 = vpop.f32.mrb[0].mxu0
    %v832 = vadd.f32 %v264, %v831
    %v833 = vpop.f32.mrb[0].mxu0
    %834 = vmatprep.mubr.bf16.mxu0 0
    %835 = vmatmul.mubr.bf16.gmra.mrb[0].mxu0 %v561
    %v836 = vpop.f32.mrb[0].mxu0
    %v837 = vadd.f32 %v264, %v836
    %v838 = vpop.f32.mrb[0].mxu0
    %v839 = vpop.f32.mrb[0].mxu0
    %v840 = vadd.f32 %v264, %v839
    %v841 = vpop.f32.mrb[0].mxu0
    %842 = vmatprep.mubr.bf16.mxu0 0
    %843 = vmatmul.mubr.bf16.gmra.mrb[0].mxu0 %v562
    %v844 = vpop.f32.mrb[0].mxu0
    %v845 = vadd.f32 %v264, %v844
    %v846 = vpop.f32.mrb[0].mxu0
    %v847 = vpop.f32.mrb[0].mxu0
    %v848 = vadd.f32 %v264, %v847
    %v849 = vpop.f32.mrb[0].mxu0
    %850 = vmatprep.mubr.bf16.mxu0 0
    %851 = vmatmul.mubr.bf16.gmra.mrb[0].mxu0 %v563
    %v852 = vpop.f32.mrb[0].mxu0
    %v853 = vadd.f32 %v264, %v852
    %v854 = vpop.f32.mrb[0].mxu0
    %v855 = vpop.f32.mrb[0].mxu0
    %v856 = vadd.f32 %v264, %v855
    %v857 = vpop.f32.mrb[0].mxu0
    %858 = vmatprep.mubr.bf16.mxu0 0
    %859 = vmatmul.mubr.bf16.gmra.mrb[0].mxu0 %v564
    %v860 = vpop.f32.mrb[0].mxu0
    %v861 = vadd.f32 %v264, %v860
    %v862 = vpop.f32.mrb[0].mxu0
    %v863 = vpop.f32.mrb[0].mxu0
    %v864 = vadd.f32 %v264, %v863
    %v865 = vpop.f32.mrb[0].mxu0
    %866 = vmatprep.mubr.bf16.mxu0 0
    %867 = vmatmul.mubr.bf16.gmra.mrb[0].mxu0 %v565
    %v868 = vpop.f32.mrb[0].mxu0
    %v869 = vadd.f32 %v264, %v868
    %v870 = vpop.f32.mrb[0].mxu0
    %v871 = vpop.f32.mrb[0].mxu0
    %v872 = vadd.f32 %v264, %v871
    %v873 = vpop.f32.mrb[0].mxu0
    %874 = vmatprep.mubr.bf16.mxu0 0
    %875 = vmatmul.mubr.bf16.gmra.mrb[0].mxu0 %v566
    %v876 = vpop.f32.mrb[0].mxu0
    %v877 = vadd.f32 %v264, %v876
    %v878 = vpop.f32.mrb[0].mxu0
    %v879 = vpop.f32.mrb[0].mxu0
    %v880 = vadd.f32 %v264, %v879
    %v881 = vpop.f32.mrb[0].mxu0
    %882 = vmatprep.mubr.bf16.mxu0 0
    %883 = vmatmul.mubr.bf16.gmra.mrb[0].mxu0 %v567
    %v884 = vpop.f32.mrb[0].mxu0
    %v885 = vadd.f32 %v264, %v884
    %v886 = vpop.f32.mrb[0].mxu0
    %v887 = vpop.f32.mrb[0].mxu0
    %v888 = vadd.f32 %v264, %v887
    %v889 = vpop.f32.mrb[0].mxu0
    %890 = vmatprep.mubr.bf16.mxu0 0
    %891 = vmatmul.mubr.bf16.gmra.mrb[0].mxu0 %v568
    %v892 = vpop.f32.mrb[0].mxu0
    %v893 = vadd.f32 %v264, %v892
    %v894 = vpop.f32.mrb[0].mxu0
    %v895 = vpop.f32.mrb[0].mxu0
    %v896 = vadd.f32 %v264, %v895
    %v897 = vpop.f32.mrb[0].mxu0
    %898 = vmatprep.mubr.bf16.mxu0 0
    %899 = vmatmul.mubr.bf16.gmra.mrb[0].mxu0 %v569
    %v900 = vpop.f32.mrb[0].mxu0
    %v901 = vadd.f32 %v264, %v900
    %v902 = vpop.f32.mrb[0].mxu0
    %v903 = vpop.f32.mrb[0].mxu0
    %v904 = vadd.f32 %v264, %v903
    %v905 = vpop.f32.mrb[0].mxu0
    %906 = vmatprep.mubr.bf16.mxu0 0
    %907 = vmatmul.mubr.bf16.gmra.mrb[0].mxu0 %v570
    %v908 = vpop.f32.mrb[0].mxu0
    %v909 = vadd.f32 %v264, %v908
    %v910 = vpop.f32.mrb[0].mxu0
    %v911 = vpop.f32.mrb[0].mxu0
    %v912 = vadd.f32 %v264, %v911
    %v913 = vpop.f32.mrb[0].mxu0
    %914 = vmatprep.mubr.bf16.mxu0 0
    %915 = vmatmul.mubr.bf16.gmra.mrb[0].mxu0 %v571
    %v916 = vpop.f32.mrb[0].mxu0
    %v917 = vadd.f32 %v264, %v916
    %v918 = vpop.f32.mrb[0].mxu0
    %v919 = vpop.f32.mrb[0].mxu0
    %v920 = vadd.f32 %v264, %v919
    %v921 = vpop.f32.mrb[0].mxu0
    %922 = vmatprep.mubr.bf16.mxu0 0
    %923 = vmatmul.mubr.bf16.gmra.mrb[0].mxu0 %v572
    %v924 = vpop.f32.mrb[0].mxu0
    %v925 = vadd.f32 %v264, %v924
    %v926 = vpop.f32.mrb[0].mxu0
    %v927 = vpop.f32.mrb[0].mxu0
    %v928 = vadd.f32 %v264, %v927
    %v929 = vpop.f32.mrb[0].mxu0
    %930 = vmatprep.mubr.bf16.mxu0 0
    %931 = vmatmul.mubr.bf16.gmra.mrb[0].mxu0 %v573
    %v932 = vpop.f32.mrb[0].mxu0
    %v933 = vadd.f32 %v264, %v932
    %v934 = vpop.f32.mrb[0].mxu0
    %v935 = vpop.f32.mrb[0].mxu0
    %v936 = vadd.f32 %v264, %v935
    %v937 = vpop.f32.mrb[0].mxu0
    %938 = vmatprep.mubr.bf16.mxu0 0
    %939 = vmatmul.mubr.bf16.gmra.mrb[0].mxu0 %v574
    %v940 = vpop.f32.mrb[0].mxu0
    %v941 = vadd.f32 %v264, %v940
    %v942 = vpop.f32.mrb[0].mxu0
    %v943 = vpop.f32.mrb[0].mxu0
    %v944 = vadd.f32 %v264, %v943
    %v945 = vpop.f32.mrb[0].mxu0
    %946 = vmatprep.mubr.bf16.mxu0 0
    %947 = vmatmul.mubr.bf16.gmra.mrb[0].mxu0 %v575
    %v948 = vpop.f32.mrb[0].mxu0
    %v949 = vadd.f32 %v264, %v948
    %v950 = vpop.f32.mrb[0].mxu0
    %v951 = vpop.f32.mrb[0].mxu0
    %v952 = vadd.f32 %v264, %v951
    %v953 = vpop.f32.mrb[0].mxu0
    %954 = vmatprep.mubr.bf16.mxu0 0
    %955 = vmatmul.mubr.bf16.gmra.mrb[0].mxu0 %v576
    %v956 = vpop.f32.mrb[0].mxu0
    %v957 = vadd.f32 %v264, %v956
    %v958 = vpop.f32.mrb[0].mxu0
    %v959 = vpop.f32.mrb[0].mxu0
    %v960 = vadd.f32 %v264, %v959
    %v961 = vpop.f32.mrb[0].mxu0
    %962 = vmatprep.mubr.bf16.mxu0 0
    %963 = vmatmul.mubr.bf16.gmra.mrb[0].mxu0 %v577
    %v964 = vpop.f32.mrb[0].mxu0
    %v965 = vadd.f32 %v264, %v964
    %v966 = vpop.f32.mrb[0].mxu0
    %v967 = vpop.f32.mrb[0].mxu0
    %v968 = vadd.f32 %v264, %v967
    %v969 = vpop.f32.mrb[0].mxu0
    %970 = vmatprep.mubr.bf16.mxu0 0
    %971 = vmatmul.mubr.bf16.gmra.mrb[0].mxu0 %v578
    %v972 = vpop.f32.mrb[0].mxu0
    %v973 = vadd.f32 %v264, %v972
    %v974 = vpop.f32.mrb[0].mxu0
    %v975 = vpop.f32.mrb[0].mxu0
    %v976 = vadd.f32 %v264, %v975
    %v977 = vpop.f32.mrb[0].mxu0
    %978 = vmatprep.mubr.bf16.mxu0 0
    %979 = vmatmul.mubr.bf16.gmra.mrb[0].mxu0 %v579
    %v980 = vpop.f32.mrb[0].mxu0
    %v981 = vadd.f32 %v264, %v980
    %v982 = vpop.f32.mrb[0].mxu0
    %v983 = vpop.f32.mrb[0].mxu0
    %v984 = vadd.f32 %v264, %v983
    %v985 = vpop.f32.mrb[0].mxu0
    %986 = vmatprep.mubr.bf16.mxu0 0
    %987 = vmatmul.mubr.bf16.gmra.mrb[0].mxu0 %v580
    %v988 = vpop.f32.mrb[0].mxu0
    %v989 = vpop.f32.mrb[0].mxu0
    %v990 = vpop.f32.mrb[0].mxu0
    %v991 = vpop.f32.mrb[0].mxu0
    %992 = vmatprep.mubr.bf16.mxu0 0
    %993 = vmatmul.mubr.bf16.gmra.mrb[0].mxu0 %v581
    %v994 = vpop.f32.mrb[0].mxu0
    %v995 = vadd.f32 %v264, %v994
    %v996 = vpop.f32.mrb[0].mxu0
    %v997 = vpop.f32.mrb[0].mxu0
    %v998 = vadd.f32 %v264, %v997
    %v999 = vpop.f32.mrb[0].mxu0
    %1000 = vmatprep.mubr.bf16.mxu0 0
    %1001 = vmatmul.mubr.bf16.gmra.mrb[0].mxu0 %v582
    %v1002 = vpop.f32.mrb[0].mxu0
    %v1003 = vadd.f32 %v264, %v1002
    %v1004 = vpop.f32.mrb[0].mxu0
    %v1005 = vpop.f32.mrb[0].mxu0
    %v1006 = vadd.f32 %v264, %v1005
    %v1007 = vpop.f32.mrb[0].mxu0
    %1008 = vmatprep.mubr.bf16.mxu0 0
    %1009 = vmatmul.mubr.bf16.gmra.mrb[0].mxu0 %v583
    %v1010 = vpop.f32.mrb[0].mxu0
    %v1011 = vadd.f32 %v264, %v1010
    %v1012 = vpop.f32.mrb[0].mxu0
    %v1013 = vpop.f32.mrb[0].mxu0
    %v1014 = vadd.f32 %v264, %v1013
    %v1015 = vpop.f32.mrb[0].mxu0
    %1016 = vmatprep.mubr.bf16.mxu0 0
    %1017 = vmatmul.mubr.bf16.gmra.mrb[0].mxu0 %v584
    %v1018 = vpop.f32.mrb[0].mxu0
    %v1019 = vadd.f32 %v264, %v1018
    %v1020 = vpop.f32.mrb[0].mxu0
    %v1021 = vpop.f32.mrb[0].mxu0
    %v1022 = vadd.f32 %v264, %v1021
    %v1023 = vpop.f32.mrb[0].mxu0
    %1024 = vmatprep.mubr.bf16.mxu0 0
    %1025 = vmatmul.mubr.bf16.gmra.mrb[0].mxu0 %v585
    %v1026 = vpop.f32.mrb[0].mxu0
    %v1027 = vadd.f32 %v264, %v1026
    %v1028 = vpop.f32.mrb[0].mxu0
    %v1029 = vpop.f32.mrb[0].mxu0
    %v1030 = vadd.f32 %v264, %v1029
    %v1031 = vpop.f32.mrb[0].mxu0
    %1032 = vmatprep.mubr.bf16.mxu0 0
    %1033 = vmatmul.mubr.bf16.gmra.mrb[0].mxu0 %v586
    %v1034 = vpop.f32.mrb[0].mxu0
    %v1035 = vadd.f32 %v264, %v1034
    %v1036 = vpop.f32.mrb[0].mxu0
    %v1037 = vpop.f32.mrb[0].mxu0
    %v1038 = vadd.f32 %v264, %v1037
    %v1039 = vpop.f32.mrb[0].mxu0
    %1040 = vmatprep.mubr.bf16.mxu0 0
    %1041 = vmatmul.mubr.bf16.gmra.mrb[0].mxu0 %v587
    %v1042 = vpop.f32.mrb[0].mxu0
    %v1043 = vadd.f32 %v264, %v1042
    %v1044 = vpop.f32.mrb[0].mxu0
    %v1045 = vpop.f32.mrb[0].mxu0
    %v1046 = vadd.f32 %v264, %v1045
    %v1047 = vpop.f32.mrb[0].mxu0
    %1048 = vmatprep.mubr.bf16.mxu0 0
    %1049 = vmatmul.mubr.bf16.gmra.mrb[0].mxu0 %v588
    %v1050 = vpop.f32.mrb[0].mxu0
    %v1051 = vadd.f32 %v264, %v1050
    %v1052 = vpop.f32.mrb[0].mxu0
    %v1053 = vpop.f32.mrb[0].mxu0
    %v1054 = vadd.f32 %v264, %v1053
    %v1055 = vpop.f32.mrb[0].mxu0
    %1056 = vmatprep.mubr.bf16.mxu0 0
    %1057 = vmatmul.mubr.bf16.gmra.mrb[0].mxu0 %v589
    %v1058 = vpop.f32.mrb[0].mxu0
    %v1059 = vpop.f32.mrb[0].mxu0
    %v1060 = vpop.f32.mrb[0].mxu0
    %v1061 = vpop.f32.mrb[0].mxu0
    %1062 = vmatprep.mubr.bf16.mxu0 0
    %1063 = vmatmul.mubr.bf16.gmra.mrb[0].mxu0 %v590
    %v1064 = vpop.f32.mrb[0].mxu0
    %v1065 = vadd.f32 %v264, %v1064
    %v1066 = vpop.f32.mrb[0].mxu0
    %v1067 = vpop.f32.mrb[0].mxu0
    %v1068 = vadd.f32 %v264, %v1067
    %v1069 = vpop.f32.mrb[0].mxu0
    %1070 = vmatprep.mubr.bf16.mxu0 0
    %1071 = vmatmul.mubr.bf16.gmra.mrb[0].mxu0 %v591
    %v1072 = vpop.f32.mrb[0].mxu0
    %v1073 = vadd.f32 %v264, %v1072
    %v1074 = vpop.f32.mrb[0].mxu0
    %v1075 = vpop.f32.mrb[0].mxu0
    %v1076 = vadd.f32 %v264, %v1075
    %v1077 = vpop.f32.mrb[0].mxu0
    %1078 = vmatprep.mubr.bf16.mxu0 0
    %1079 = vmatmul.mubr.bf16.gmra.mrb[0].mxu0 %v592
    %v1080 = vpop.f32.mrb[0].mxu0
    %v1081 = vadd.f32 %v264, %v1080
    %v1082 = vpop.f32.mrb[0].mxu0
    %v1083 = vpop.f32.mrb[0].mxu0
    %v1084 = vadd.f32 %v264, %v1083
    %v1085 = vpop.f32.mrb[0].mxu0
    %1086 = vmatprep.mubr.bf16.mxu0 0
    %1087 = vmatmul.mubr.bf16.gmra.mrb[0].mxu0 %v593
    %v1088 = vpop.f32.mrb[0].mxu0
    %v1089 = vadd.f32 %v264, %v1088
    %v1090 = vpop.f32.mrb[0].mxu0
    %v1091 = vpop.f32.mrb[0].mxu0
    %v1092 = vadd.f32 %v264, %v1091
    %v1093 = vpop.f32.mrb[0].mxu0
    %1094 = vmatprep.mubr.bf16.mxu0 0
    %1095 = vmatmul.mubr.bf16.gmra.mrb[0].mxu0 %v594
    %v1096 = vpop.f32.mrb[0].mxu0
    %v1097 = vadd.f32 %v264, %v1096
    %v1098 = vpop.f32.mrb[0].mxu0
    %v1099 = vpop.f32.mrb[0].mxu0
    %v1100 = vadd.f32 %v264, %v1099
    %v1101 = vpop.f32.mrb[0].mxu0
    %1102 = vmatprep.mubr.bf16.mxu0 0
    %1103 = vmatmul.mubr.bf16.gmra.mrb[0].mxu0 %v595
    %v1104 = vpop.f32.mrb[0].mxu0
    %v1105 = vadd.f32 %v264, %v1104
    %v1106 = vpop.f32.mrb[0].mxu0
    %v1107 = vpop.f32.mrb[0].mxu0
    %v1108 = vadd.f32 %v264, %v1107
    %v1109 = vpop.f32.mrb[0].mxu0
    %1110 = vmatprep.mubr.bf16.mxu0 0
    %1111 = vmatmul.mubr.bf16.gmra.mrb[0].mxu0 %v596
    %v1112 = vpop.f32.mrb[0].mxu0
    %v1113 = vadd.f32 %v264, %v1112
    %v1114 = vpop.f32.mrb[0].mxu0
    %v1115 = vpop.f32.mrb[0].mxu0
    %v1116 = vadd.f32 %v264, %v1115
    %v1117 = vpop.f32.mrb[0].mxu0
    %1118 = vmatprep.mubr.bf16.mxu0 0
    %1119 = vmatmul.mubr.bf16.gmra.mrb[0].mxu0 %v597
    %v1120 = vpop.f32.mrb[0].mxu0
    %v1121 = vadd.f32 %v264, %v1120
    %v1122 = vpop.f32.mrb[0].mxu0
    %v1123 = vpop.f32.mrb[0].mxu0
    %v1124 = vadd.f32 %v264, %v1123
    %v1125 = vpop.f32.mrb[0].mxu0
    %1126 = vmatprep.mubr.bf16.mxu0 0
    %1127 = vmatmul.mubr.bf16.gmra.mrb[0].mxu0 %v598
    %v1128 = vpop.f32.mrb[0].mxu0
    %v1129 = vadd.f32 %v264, %v1128
    %v1130 = vpop.f32.mrb[0].mxu0
    %v1131 = vpop.f32.mrb[0].mxu0
    %v1132 = vadd.f32 %v264, %v1131
    %v1133 = vpop.f32.mrb[0].mxu0
    %1134 = vmatprep.mubr.bf16.mxu0 0
    %1135 = vmatmul.mubr.bf16.gmra.mrb[0].mxu0 %v599
    %v1136 = vpop.f32.mrb[0].mxu0
    %v1137 = vadd.f32 %v264, %v1136
    %v1138 = vpop.f32.mrb[0].mxu0
    %v1139 = vpop.f32.mrb[0].mxu0
    %v1140 = vadd.f32 %v264, %v1139
    %v1141 = vpop.f32.mrb[0].mxu0
    %1142 = vmatprep.mubr.bf16.mxu0 0
    %1143 = vmatmul.mubr.bf16.gmra.mrb[0].mxu0 %v600
    %v1144 = vpop.f32.mrb[0].mxu0
    %v1145 = vadd.f32 %v264, %v1144
    %v1146 = vpop.f32.mrb[0].mxu0
    %v1147 = vpop.f32.mrb[0].mxu0
    %v1148 = vadd.f32 %v264, %v1147
    %v1149 = vpop.f32.mrb[0].mxu0
    %1150 = vmatprep.mubr.bf16.mxu0 0
    %1151 = vmatmul.mubr.bf16.gmra.mrb[0].mxu0 %v601
    %v1152 = vpop.f32.mrb[0].mxu0
    %v1153 = vadd.f32 %v264, %v1152
    %v1154 = vpop.f32.mrb[0].mxu0
    %v1155 = vpop.f32.mrb[0].mxu0
    %v1156 = vadd.f32 %v264, %v1155
    %v1157 = vpop.f32.mrb[0].mxu0
    %1158 = vmatprep.mubr.bf16.mxu0 0
    %1159 = vmatmul.mubr.bf16.gmra.mrb[0].mxu0 %v602
    %v1160 = vpop.f32.mrb[0].mxu0
    %v1161 = vadd.f32 %v264, %v1160
    %v1162 = vpop.f32.mrb[0].mxu0
    %v1163 = vpop.f32.mrb[0].mxu0
    %v1164 = vadd.f32 %v264, %v1163
    %v1165 = vpop.f32.mrb[0].mxu0
    %1166 = vmatprep.mubr.bf16.mxu0 0
    %1167 = vmatmul.mubr.bf16.gmra.mrb[0].mxu0 %v603
    %v1168 = vpop.f32.mrb[0].mxu0
    %v1169 = vadd.f32 %v264, %v1168
    %v1170 = vpop.f32.mrb[0].mxu0
    %v1171 = vpop.f32.mrb[0].mxu0
    %v1172 = vadd.f32 %v264, %v1171
    %v1173 = vpop.f32.mrb[0].mxu0
    %1174 = vmatprep.mubr.bf16.mxu0 0
    %1175 = vmatmul.mubr.bf16.gmra.mrb[0].mxu0 %v604
    %v1176 = vpop.f32.mrb[0].mxu0
    %v1177 = vadd.f32 %v264, %v1176
    %v1178 = vpop.f32.mrb[0].mxu0
    %v1179 = vpop.f32.mrb[0].mxu0
    %v1180 = vadd.f32 %v264, %v1179
    %v1181 = vpop.f32.mrb[0].mxu0
    %1182 = vmatprep.mubr.bf16.mxu0 0
    %1183 = vmatmul.mubr.bf16.gmra.mrb[0].mxu0 %v605
    %v1184 = vpop.f32.mrb[0].mxu0
    %v1185 = vadd.f32 %v264, %v1184
    %v1186 = vpop.f32.mrb[0].mxu0
    %v1187 = vpop.f32.mrb[0].mxu0
    %v1188 = vadd.f32 %v264, %v1187
    %v1189 = vpop.f32.mrb[0].mxu0
    %1190 = vmatprep.mubr.bf16.mxu0 0
    %1191 = vmatmul.mubr.bf16.gmra.mrb[0].mxu0 %v606
    %v1192 = vpop.f32.mrb[0].mxu0
    %v1193 = vadd.f32 %v264, %v1192
    %v1194 = vpop.f32.mrb[0].mxu0
    %v1195 = vpop.f32.mrb[0].mxu0
    %v1196 = vadd.f32 %v264, %v1195
    %v1197 = vpop.f32.mrb[0].mxu0
    %1198 = vmatprep.mubr.bf16.mxu0 0
    %1199 = vmatmul.mubr.bf16.gmra.mrb[0].mxu0 %v607
    %v1200 = vpop.f32.mrb[0].mxu0
    %v1201 = vadd.f32 %v264, %v1200
    %v1202 = vpop.f32.mrb[0].mxu0
    %v1203 = vpop.f32.mrb[0].mxu0
    %v1204 = vadd.f32 %v264, %v1203
    %v1205 = vpop.f32.mrb[0].mxu0
    %1206 = vmatprep.mubr.bf16.mxu0 0
    %1207 = vmatmul.mubr.bf16.gmra.mrb[0].mxu0 %v608
    %v1208 = vpop.f32.mrb[0].mxu0
    %v1209 = vadd.f32 %v264, %v1208
    %v1210 = vpop.f32.mrb[0].mxu0
    %v1211 = vpop.f32.mrb[0].mxu0
    %v1212 = vadd.f32 %v264, %v1211
    %v1213 = vpop.f32.mrb[0].mxu0
    %1214 = vmatprep.mubr.bf16.mxu0 0
    %1215 = vmatmul.mubr.bf16.gmra.mrb[0].mxu0 %v609
    %v1216 = vpop.f32.mrb[0].mxu0
    %v1217 = vadd.f32 %v264, %v1216
    %v1218 = vpop.f32.mrb[0].mxu0
    %v1219 = vpop.f32.mrb[0].mxu0
    %v1220 = vadd.f32 %v264, %v1219
    %v1221 = vpop.f32.mrb[0].mxu0
    %1222 = vmatprep.mubr.bf16.mxu0 0
    %1223 = vmatmul.mubr.bf16.gmra.mrb[0].mxu0 %v610
    %v1224 = vpop.f32.mrb[0].mxu0
    %v1225 = vadd.f32 %v264, %v1224
    %v1226 = vpop.f32.mrb[0].mxu0
    %v1227 = vpop.f32.mrb[0].mxu0
    %v1228 = vadd.f32 %v264, %v1227
    %v1229 = vpop.f32.mrb[0].mxu0
    %1230 = vmatprep.mubr.bf16.mxu0 0
    %1231 = vmatmul.mubr.bf16.gmra.mrb[0].mxu0 %v611
    %v1232 = vpop.f32.mrb[0].mxu0
    %v1233 = vadd.f32 %v264, %v1232
    %v1234 = vpop.f32.mrb[0].mxu0
    %v1235 = vpop.f32.mrb[0].mxu0
    %v1236 = vadd.f32 %v264, %v1235
    %v1237 = vpop.f32.mrb[0].mxu0
    %1238 = vmatprep.mubr.bf16.mxu0 0
    %1239 = vmatmul.mubr.bf16.gmra.mrb[0].mxu0 %v612
    %v1240 = vpop.f32.mrb[0].mxu0
    %v1241 = vadd.f32 %v264, %v1240
    %v1242 = vpop.f32.mrb[0].mxu0
    %v1243 = vpop.f32.mrb[0].mxu0
    %v1244 = vadd.f32 %v264, %v1243
    %v1245 = vpop.f32.mrb[0].mxu0
    %1246 = vmatprep.mubr.bf16.mxu0 0
    %1247 = vmatmul.mubr.bf16.gmra.mrb[0].mxu0 %v613
    %v1248 = vpop.f32.mrb[0].mxu0
    %v1249 = vadd.f32 %v264, %v1248
    %v1250 = vpop.f32.mrb[0].mxu0
    %v1251 = vpop.f32.mrb[0].mxu0
    %v1252 = vadd.f32 %v264, %v1251
    %v1253 = vpop.f32.mrb[0].mxu0
    %1254 = vmatprep.mubr.bf16.mxu0 0
    %1255 = vmatmul.mubr.bf16.gmra.mrb[0].mxu0 %v614
    %v1256 = vpop.f32.mrb[0].mxu0
    %v1257 = vadd.f32 %v264, %v1256
    %v1258 = vpop.f32.mrb[0].mxu0
    %v1259 = vpop.f32.mrb[0].mxu0
    %v1260 = vadd.f32 %v264, %v1259
    %v1261 = vpop.f32.mrb[0].mxu0
    %1262 = vmatprep.mubr.bf16.mxu0 0
    %1263 = vmatmul.mubr.bf16.gmra.mrb[0].mxu0 %v615
    %v1264 = vpop.f32.mrb[0].mxu0
    %v1265 = vadd.f32 %v264, %v1264
    %v1266 = vpop.f32.mrb[0].mxu0
    %v1267 = vpop.f32.mrb[0].mxu0
    %v1268 = vadd.f32 %v264, %v1267
    %v1269 = vpop.f32.mrb[0].mxu0
    %1270 = vmatprep.mubr.bf16.mxu0 0
    %1271 = vmatmul.mubr.bf16.gmra.mrb[0].mxu0 %v616
    %v1272 = vpop.f32.mrb[0].mxu0
    %v1273 = vpop.f32.mrb[0].mxu0
    %v1274 = vpop.f32.mrb[0].mxu0
    %v1275 = vpop.f32.mrb[0].mxu0
    %1276 = vmatprep.mubr.bf16.mxu0 0
    %1277 = vmatmul.mubr.bf16.gmra.mrb[0].mxu0 %v617
    %v1278 = vpop.f32.mrb[0].mxu0
    %v1279 = vadd.f32 %v264, %v1278
    %v1280 = vpop.f32.mrb[0].mxu0
    %v1281 = vpop.f32.mrb[0].mxu0
    %v1282 = vadd.f32 %v264, %v1281
    %v1283 = vpop.f32.mrb[0].mxu0
    %1284 = vmatprep.mubr.bf16.mxu0 0
    %1285 = vmatmul.mubr.bf16.gmra.mrb[0].mxu0 %v618
    %v1286 = vpop.f32.mrb[0].mxu0
    %v1287 = vadd.f32 %v264, %v1286
    %v1288 = vpop.f32.mrb[0].mxu0
    %v1289 = vpop.f32.mrb[0].mxu0
    %v1290 = vadd.f32 %v264, %v1289
    %v1291 = vpop.f32.mrb[0].mxu0
    %1292 = vmatprep.mubr.bf16.mxu0 0
    %1293 = vmatmul.mubr.bf16.gmra.mrb[0].mxu0 %v619
    %v1294 = vpop.f32.mrb[0].mxu0
    %v1295 = vadd.f32 %v264, %v1294
    %v1296 = vpop.f32.mrb[0].mxu0
    %v1297 = vpop.f32.mrb[0].mxu0
    %v1298 = vadd.f32 %v264, %v1297
    %v1299 = vpop.f32.mrb[0].mxu0
    %1300 = vmatprep.mubr.bf16.mxu0 0
    %1301 = vmatmul.mubr.bf16.gmra.mrb[0].mxu0 %v620
    %v1302 = vpop.f32.mrb[0].mxu0
    %v1303 = vadd.f32 %v264, %v1302
    %v1304 = vpop.f32.mrb[0].mxu0
    %v1305 = vpop.f32.mrb[0].mxu0
    %v1306 = vadd.f32 %v264, %v1305
    %v1307 = vpop.f32.mrb[0].mxu0
    %1308 = vmatprep.mubr.bf16.mxu0 0
    %1309 = vmatmul.mubr.bf16.gmra.mrb[0].mxu0 %v621
    %v1310 = vpop.f32.mrb[0].mxu0
    %v1311 = vadd.f32 %v264, %v1310
    %v1312 = vpop.f32.mrb[0].mxu0
    %v1313 = vpop.f32.mrb[0].mxu0
    %v1314 = vadd.f32 %v264, %v1313
    %v1315 = vpop.f32.mrb[0].mxu0
    %1316 = vmatprep.mubr.bf16.mxu0 0
    %1317 = vmatmul.mubr.bf16.gmra.mrb[0].mxu0 %v622
    %v1318 = vpop.f32.mrb[0].mxu0
    %v1319 = vadd.f32 %v264, %v1318
    %v1320 = vpop.f32.mrb[0].mxu0
    %v1321 = vpop.f32.mrb[0].mxu0
    %v1322 = vadd.f32 %v264, %v1321
    %v1323 = vpop.f32.mrb[0].mxu0
    %1324 = vmatprep.mubr.bf16.mxu0 0
    %1325 = vmatmul.mubr.bf16.gmra.mrb[0].mxu0 %v623
    %v1326 = vpop.f32.mrb[0].mxu0
    %v1327 = vadd.f32 %v264, %v1326
    %v1328 = vpop.f32.mrb[0].mxu0
    %v1329 = vpop.f32.mrb[0].mxu0
    %v1330 = vadd.f32 %v264, %v1329
    %v1331 = vpop.f32.mrb[0].mxu0
    %1332 = vmatprep.mubr.bf16.mxu0 0
    %1333 = vmatmul.mubr.bf16.gmra.mrb[0].mxu0 %v624
    %v1334 = vpop.f32.mrb[0].mxu0
    %v1335 = vadd.f32 %v264, %v1334
    %v1336 = vpop.f32.mrb[0].mxu0
    %v1337 = vpop.f32.mrb[0].mxu0
    %v1338 = vadd.f32 %v264, %v1337
    %v1339 = vpop.f32.mrb[0].mxu0
    %1340 = vmatprep.mubr.bf16.mxu0 0
    %1341 = vmatmul.mubr.bf16.gmra.mrb[0].mxu0 %v625
    %v1342 = vpop.f32.mrb[0].mxu0
    %v1343 = vpop.f32.mrb[0].mxu0
    %v1344 = vpop.f32.mrb[0].mxu0
    %v1345 = vpop.f32.mrb[0].mxu0
    %1346 = vdwg.mxu0
    %v1347 = vmax.f32 %v781, 0.0
    %v1348 = vmax.f32 %v784, 0.0
    %v1349 = vmax.f32 %v789, 0.0
    %v1350 = vmax.f32 %v792, 0.0
    %v1351 = vmax.f32 %v797, 0.0
    %v1352 = vmax.f32 %v800, 0.0
    %v1353 = vmax.f32 %v805, 0.0
    %v1354 = vmax.f32 %v808, 0.0
    %v1355 = vmax.f32 %v813, 0.0
    %v1356 = vmax.f32 %v816, 0.0
    %v1357 = vmax.f32 %v821, 0.0
    %v1358 = vmax.f32 %v824, 0.0
    %v1359 = vmax.f32 %v829, 0.0
    %v1360 = vmax.f32 %v832, 0.0
    %v1361 = vmax.f32 %v837, 0.0
    %v1362 = vmax.f32 %v840, 0.0
    %v1363 = vmax.f32 %v845, 0.0
    %v1364 = vmax.f32 %v848, 0.0
    %v1365 = vmax.f32 %v853, 0.0
    %v1366 = vmax.f32 %v856, 0.0
    %v1367 = vmax.f32 %v861, 0.0
    %v1368 = vmax.f32 %v864, 0.0
    %v1369 = vmax.f32 %v869, 0.0
    %v1370 = vmax.f32 %v872, 0.0
    %v1371 = vmax.f32 %v877, 0.0
    %v1372 = vmax.f32 %v880, 0.0
    %v1373 = vmax.f32 %v885, 0.0
    %v1374 = vmax.f32 %v888, 0.0
    %v1375 = vmax.f32 %v893, 0.0
    %v1376 = vmax.f32 %v896, 0.0
    %v1377 = vmax.f32 %v901, 0.0
    %v1378 = vmax.f32 %v904, 0.0
    %v1379 = vmax.f32 %v909, 0.0
    %v1380 = vmax.f32 %v912, 0.0
    %v1381 = vmax.f32 %v917, 0.0
    %v1382 = vmax.f32 %v920, 0.0
    %v1383 = vmax.f32 %v925, 0.0
    %v1384 = vmax.f32 %v928, 0.0
    %v1385 = vmax.f32 %v933, 0.0
    %v1386 = vmax.f32 %v936, 0.0
    %v1387 = vmax.f32 %v941, 0.0
    %v1388 = vmax.f32 %v944, 0.0
    %v1389 = vmax.f32 %v949, 0.0
    %v1390 = vmax.f32 %v952, 0.0
    %v1391 = vmax.f32 %v957, 0.0
    %v1392 = vmax.f32 %v960, 0.0
    %v1393 = vmax.f32 %v965, 0.0
    %v1394 = vmax.f32 %v968, 0.0
    %v1395 = vmax.f32 %v973, 0.0
    %v1396 = vmax.f32 %v976, 0.0
    %v1397 = vmax.f32 %v981, 0.0
    %v1398 = vmax.f32 %v984, 0.0
    %v1399 = vmax.f32 %v995, 0.0
    %v1400 = vmax.f32 %v998, 0.0
    %v1401 = vmax.f32 %v1003, 0.0
    %v1402 = vmax.f32 %v1006, 0.0
    %v1403 = vmax.f32 %v1011, 0.0
    %v1404 = vmax.f32 %v1014, 0.0
    %v1405 = vmax.f32 %v1019, 0.0
    %v1406 = vmax.f32 %v1022, 0.0
    %v1407 = vmax.f32 %v1027, 0.0
    %v1408 = vmax.f32 %v1030, 0.0
    %v1409 = vmax.f32 %v1035, 0.0
    %v1410 = vmax.f32 %v1038, 0.0
    %v1411 = vmax.f32 %v1043, 0.0
    %v1412 = vmax.f32 %v1046, 0.0
    %v1413 = vmax.f32 %v1051, 0.0
    %v1414 = vmax.f32 %v1054, 0.0
    %v1415 = vmax.f32 %v1065, 0.0
    %v1416 = vmax.f32 %v1068, 0.0
    %v1417 = vmax.f32 %v1073, 0.0
    %v1418 = vmax.f32 %v1076, 0.0
    %v1419 = vmax.f32 %v1081, 0.0
    %v1420 = vmax.f32 %v1084, 0.0
    %v1421 = vmax.f32 %v1089, 0.0
    %v1422 = vmax.f32 %v1092, 0.0
    %v1423 = vmax.f32 %v1097, 0.0
    %v1424 = vmax.f32 %v1100, 0.0
    %v1425 = vmax.f32 %v1105, 0.0
    %v1426 = vmax.f32 %v1108, 0.0
    %v1427 = vmax.f32 %v1113, 0.0
    %v1428 = vmax.f32 %v1116, 0.0
    %v1429 = vmax.f32 %v1121, 0.0
    %v1430 = vmax.f32 %v1124, 0.0
    %v1431 = vmax.f32 %v1129, 0.0
    %v1432 = vmax.f32 %v1132, 0.0
    %v1433 = vmax.f32 %v1137, 0.0
    %v1434 = vmax.f32 %v1140, 0.0
    %v1435 = vmax.f32 %v1145, 0.0
    %v1436 = vmax.f32 %v1148, 0.0
    %v1437 = vmax.f32 %v1153, 0.0
    %v1438 = vmax.f32 %v1156, 0.0
    %v1439 = vmax.f32 %v1161, 0.0
    %v1440 = vmax.f32 %v1164, 0.0
    %v1441 = vmax.f32 %v1169, 0.0
    %v1442 = vmax.f32 %v1172, 0.0
    %v1443 = vmax.f32 %v1177, 0.0
    %v1444 = vmax.f32 %v1180, 0.0
    %v1445 = vmax.f32 %v1185, 0.0
    %v1446 = vmax.f32 %v1188, 0.0
    %v1447 = vmax.f32 %v1193, 0.0
    %v1448 = vmax.f32 %v1196, 0.0
    %v1449 = vmax.f32 %v1201, 0.0
    %v1450 = vmax.f32 %v1204, 0.0
    %v1451 = vmax.f32 %v1209, 0.0
    %v1452 = vmax.f32 %v1212, 0.0
    %v1453 = vmax.f32 %v1217, 0.0
    %v1454 = vmax.f32 %v1220, 0.0
    %v1455 = vmax.f32 %v1225, 0.0
    %v1456 = vmax.f32 %v1228, 0.0
    %v1457 = vmax.f32 %v1233, 0.0
    %v1458 = vmax.f32 %v1236, 0.0
    %v1459 = vmax.f32 %v1241, 0.0
    %v1460 = vmax.f32 %v1244, 0.0
    %v1461 = vmax.f32 %v1249, 0.0
    %v1462 = vmax.f32 %v1252, 0.0
    %v1463 = vmax.f32 %v1257, 0.0
    %v1464 = vmax.f32 %v1260, 0.0
    %v1465 = vmax.f32 %v1265, 0.0
    %v1466 = vmax.f32 %v1268, 0.0
    %v1467 = vmax.f32 %v1279, 0.0
    %v1468 = vmax.f32 %v1282, 0.0
    %v1469 = vmax.f32 %v1287, 0.0
    %v1470 = vmax.f32 %v1290, 0.0
    %v1471 = vmax.f32 %v1295, 0.0
    %v1472 = vmax.f32 %v1298, 0.0
    %v1473 = vmax.f32 %v1303, 0.0
    %v1474 = vmax.f32 %v1306, 0.0
    %v1475 = vmax.f32 %v1311, 0.0
    %v1476 = vmax.f32 %v1314, 0.0
    %v1477 = vmax.f32 %v1319, 0.0
    %v1478 = vmax.f32 %v1322, 0.0
    %v1479 = vmax.f32 %v1327, 0.0
    %v1480 = vmax.f32 %v1330, 0.0
    %v1481 = vmax.f32 %v1335, 0.0
    %v1482 = vmax.f32 %v1338, 0.0
    %v1483 = vlaneseq
    %v1484 = vshrl.u32 %v1483, 7
    %v1485 = vadd.s32 %v1484, 8
    %vm1486 = vcmp.ge.s32.totalorder %v1484, 1
    %vm1487 = vcmp.ge.s32.totalorder %v1485, 1
    %vm1488 = vmand 0, %vm1486
    %vm1489 = vmand 0, %vm1487
    %vm1490 = vmand 1, %vm1486
    %vm1491 = vmand 1, %vm1487
    %vm1492 = vcmp.le.s32.totalorder %v1484, 8
    %vm1493 = vcmp.le.s32.totalorder %v1485, 8
    %vm1494 = vmand %vm1488, %vm1492
    %vm1495 = vmand %vm1489, %vm1493
    %vm1496 = vmand %vm1490, %vm1492
    %vm1497 = vmand %vm1491, %vm1493
    %vm1498 = vcmp.ge.s32.totalorder %v1484, 0
    %vm1499 = vcmp.ge.s32.totalorder %v1485, 0
    %vm1500 = vmand 0, %vm1498
    %vm1501 = vmand 0, %vm1499
    %vm1502 = vmand 1, %vm1498
    %vm1503 = vmand 1, %vm1499
    %vm1504 = vcmp.le.s32.totalorder %v1484, 7
    %vm1505 = vcmp.le.s32.totalorder %v1485, 7
    %vm1506 = vmand %vm1500, %vm1504
    %vm1507 = vmand %vm1501, %vm1505
    %vm1508 = vmand %vm1502, %vm1504
    %vm1509 = vmand %vm1503, %vm1505
    %vm1510 = vmor %vm1494, %vm1506
    %vm1511 = vmor %vm1495, %vm1507
    %vm1512 = vmor %vm1496, %vm1506
    %vm1513 = vmor %vm1497, %vm1507
    %vm1514 = vmor %vm1494, %vm1508
    %vm1515 = vmor %vm1495, %vm1509
    %vm1516 = vmor %vm1510, %vm1494
    %vm1517 = vmor %vm1511, %vm1495
    %vm1518 = vmor %vm1512, %vm1494
    %vm1519 = vmor %vm1513, %vm1495
    %vm1520 = vmor %vm1514, %vm1494
    %vm1521 = vmor %vm1515, %vm1495
    %vm1522 = vmor %vm1510, %vm1496
    %vm1523 = vmor %vm1511, %vm1497
    %vm1524 = vmor %vm1516, %vm1506
    %vm1525 = vmor %vm1517, %vm1507
    %vm1526 = vmor %vm1518, %vm1506
    %vm1527 = vmor %vm1519, %vm1507
    %vm1528 = vmor %vm1520, %vm1506
    %vm1529 = vmor %vm1521, %vm1507
    %vm1530 = vmor %vm1522, %vm1506
    %vm1531 = vmor %vm1523, %vm1507
    %vm1532 = vmor %vm1516, %vm1508
    %vm1533 = vmor %vm1517, %vm1509
    %v1534 = vsel %vm1524, 1, 0
    %v1535 = vsel %vm1525, 1, 0
    %v1536 = vsel %vm1526, 1, 0
    %v1537 = vsel %vm1527, 1, 0
    %v1538 = vsel %vm1528, 1, 0
    %v1539 = vsel %vm1529, 1, 0
    %v1540 = vsel %vm1530, 1, 0
    %v1541 = vsel %vm1531, 1, 0
    %v1542 = vsel %vm1532, 1, 0
    %v1543 = vsel %vm1533, 1, 0
    %vm1544 = vcmp.eq.s32.totalorder %v1534, 1
    %vm1545 = vcmp.eq.s32.totalorder %v1535, 1
    %vm1546 = vcmp.eq.s32.totalorder %v1536, 1
    %vm1547 = vcmp.eq.s32.totalorder %v1537, 1
    %vm1548 = vcmp.eq.s32.totalorder %v1538, 1
    %vm1549 = vcmp.eq.s32.totalorder %v1539, 1
    %vm1550 = vcmp.eq.s32.totalorder %v1540, 1
    %vm1551 = vcmp.eq.s32.totalorder %v1541, 1
    %vm1552 = vcmp.eq.s32.totalorder %v1542, 1
    %vm1553 = vcmp.eq.s32.totalorder %v1543, 1
    %v1554 = vsel %vm1544, %v1347, 0.0
    %v1555 = vsel %vm1545, %v1348, 0.0
    %v1556 = vsel %vm1546, %v1349, 0.0
    %v1557 = vsel %vm1547, %v1350, 0.0
    %v1558 = vsel %vm1546, %v1351, 0.0
    %v1559 = vsel %vm1547, %v1352, 0.0
    %v1560 = vsel %vm1546, %v1353, 0.0
    %v1561 = vsel %vm1547, %v1354, 0.0
    %v1562 = vsel %vm1546, %v1355, 0.0
    %v1563 = vsel %vm1547, %v1356, 0.0
    %v1564 = vsel %vm1546, %v1357, 0.0
    %v1565 = vsel %vm1547, %v1358, 0.0
    %v1566 = vsel %vm1546, %v1359, 0.0
    %v1567 = vsel %vm1547, %v1360, 0.0
    %v1568 = vsel %vm1546, %v1361, 0.0
    %v1569 = vsel %vm1547, %v1362, 0.0
    %v1570 = vsel %vm1546, %v1363, 0.0
    %v1571 = vsel %vm1547, %v1364, 0.0
    %v1572 = vsel %vm1544, %v1365, 0.0
    %v1573 = vsel %vm1545, %v1366, 0.0
    %v1574 = vsel %vm1548, %v1367, 0.0
    %v1575 = vsel %vm1549, %v1368, 0.0
    %v1576 = vsel %vm1548, %v1369, 0.0
    %v1577 = vsel %vm1549, %v1370, 0.0
    %v1578 = vsel %vm1548, %v1371, 0.0
    %v1579 = vsel %vm1549, %v1372, 0.0
    %v1580 = vsel %vm1548, %v1373, 0.0
    %v1581 = vsel %vm1549, %v1374, 0.0
    %v1582 = vsel %vm1548, %v1375, 0.0
    %v1583 = vsel %vm1549, %v1376, 0.0
    %v1584 = vsel %vm1548, %v1377, 0.0
    %v1585 = vsel %vm1549, %v1378, 0.0
    %v1586 = vsel %vm1548, %v1379, 0.0
    %v1587 = vsel %vm1549, %v1380, 0.0
    %v1588 = vsel %vm1548, %v1381, 0.0
    %v1589 = vsel %vm1549, %v1382, 0.0
    %v1590 = vsel %vm1550, %v1383, 0.0
    %v1591 = vsel %vm1551, %v1384, 0.0
    %v1592 = vsel %vm1550, %v1385, 0.0
    %v1593 = vsel %vm1551, %v1386, 0.0
    %v1594 = vsel %vm1550, %v1387, 0.0
    %v1595 = vsel %vm1551, %v1388, 0.0
    %v1596 = vsel %vm1550, %v1389, 0.0
    %v1597 = vsel %vm1551, %v1390, 0.0
    %v1598 = vsel %vm1550, %v1391, 0.0
    %v1599 = vsel %vm1551, %v1392, 0.0
    %v1600 = vsel %vm1550, %v1393, 0.0
    %v1601 = vsel %vm1551, %v1394, 0.0
    %v1602 = vsel %vm1550, %v1395, 0.0
    %v1603 = vsel %vm1551, %v1396, 0.0
    %v1604 = vsel %vm1550, %v1397, 0.0
    %v1605 = vsel %vm1551, %v1398, 0.0
    %v1606 = vsel %vm1552, %v1399, 0.0
    %v1607 = vsel %vm1553, %v1400, 0.0
    %v1608 = vsel %vm1552, %v1401, 0.0
    %v1609 = vsel %vm1553, %v1402, 0.0
    %v1610 = vsel %vm1552, %v1403, 0.0
    %v1611 = vsel %vm1553, %v1404, 0.0
    %v1612 = vsel %vm1552, %v1405, 0.0
    %v1613 = vsel %vm1553, %v1406, 0.0
    %v1614 = vsel %vm1552, %v1407, 0.0
    %v1615 = vsel %vm1553, %v1408, 0.0
    %v1616 = vsel %vm1552, %v1409, 0.0
    %v1617 = vsel %vm1553, %v1410, 0.0
    %v1618 = vsel %vm1552, %v1411, 0.0
    %v1619 = vsel %vm1553, %v1412, 0.0
    %v1620 = vsel %vm1552, %v1413, 0.0
    %v1621 = vsel %vm1553, %v1414, 0.0
    %v1622 = vsel %vm1544, %v1415, 0.0
    %v1623 = vsel %vm1545, %v1416, 0.0
    %v1624 = vsel %vm1546, %v1417, 0.0
    %v1625 = vsel %vm1547, %v1418, 0.0
    %v1626 = vsel %vm1546, %v1419, 0.0
    %v1627 = vsel %vm1547, %v1420, 0.0
    %v1628 = vsel %vm1546, %v1421, 0.0
    %v1629 = vsel %vm1547, %v1422, 0.0
    %v1630 = vsel %vm1546, %v1423, 0.0
    %v1631 = vsel %vm1547, %v1424, 0.0
    %v1632 = vsel %vm1546, %v1425, 0.0
    %v1633 = vsel %vm1547, %v1426, 0.0
    %v1634 = vsel %vm1546, %v1427, 0.0
    %v1635 = vsel %vm1547, %v1428, 0.0
    %v1636 = vsel %vm1546, %v1429, 0.0
    %v1637 = vsel %vm1547, %v1430, 0.0
    %v1638 = vsel %vm1546, %v1431, 0.0
    %v1639 = vsel %vm1547, %v1432, 0.0
    %v1640 = vsel %vm1544, %v1433, 0.0
    %v1641 = vsel %vm1545, %v1434, 0.0
    %v1642 = vsel %vm1548, %v1435, 0.0
    %v1643 = vsel %vm1549, %v1436, 0.0
    %v1644 = vsel %vm1548, %v1437, 0.0
    %v1645 = vsel %vm1549, %v1438, 0.0
    %v1646 = vsel %vm1548, %v1439, 0.0
    %v1647 = vsel %vm1549, %v1440, 0.0
    %v1648 = vsel %vm1548, %v1441, 0.0
    %v1649 = vsel %vm1549, %v1442, 0.0
    %v1650 = vsel %vm1548, %v1443, 0.0
    %v1651 = vsel %vm1549, %v1444, 0.0
    %v1652 = vsel %vm1548, %v1445, 0.0
    %v1653 = vsel %vm1549, %v1446, 0.0
    %v1654 = vsel %vm1548, %v1447, 0.0
    %v1655 = vsel %vm1549, %v1448, 0.0
    %v1656 = vsel %vm1548, %v1449, 0.0
    %v1657 = vsel %vm1549, %v1450, 0.0
    %v1658 = vsel %vm1550, %v1451, 0.0
    %v1659 = vsel %vm1551, %v1452, 0.0
    %v1660 = vsel %vm1550, %v1453, 0.0
    %v1661 = vsel %vm1551, %v1454, 0.0
    %v1662 = vsel %vm1550, %v1455, 0.0
    %v1663 = vsel %vm1551, %v1456, 0.0
    %v1664 = vsel %vm1550, %v1457, 0.0
    %v1665 = vsel %vm1551, %v1458, 0.0
    %v1666 = vsel %vm1550, %v1459, 0.0
    %v1667 = vsel %vm1551, %v1460, 0.0
    %v1668 = vsel %vm1550, %v1461, 0.0
    %v1669 = vsel %vm1551, %v1462, 0.0
    %v1670 = vsel %vm1550, %v1463, 0.0
    %v1671 = vsel %vm1551, %v1464, 0.0
    %v1672 = vsel %vm1550, %v1465, 0.0
    %v1673 = vsel %vm1551, %v1466, 0.0
    %v1674 = vsel %vm1552, %v1467, 0.0
    %v1675 = vsel %vm1553, %v1468, 0.0
    %v1676 = vsel %vm1552, %v1469, 0.0
    %v1677 = vsel %vm1553, %v1470, 0.0
    %v1678 = vsel %vm1552, %v1471, 0.0
    %v1679 = vsel %vm1553, %v1472, 0.0
    %v1680 = vsel %vm1552, %v1473, 0.0
    %v1681 = vsel %vm1553, %v1474, 0.0
    %v1682 = vsel %vm1552, %v1475, 0.0
    %v1683 = vsel %vm1553, %v1476, 0.0
    %v1684 = vsel %vm1552, %v1477, 0.0
    %v1685 = vsel %vm1553, %v1478, 0.0
    %v1686 = vsel %vm1552, %v1479, 0.0
    %v1687 = vsel %vm1553, %v1480, 0.0
    %v1688 = vsel %vm1552, %v1481, 0.0
    %v1689 = vsel %vm1553, %v1482, 0.0
    %v1690 = vpack.c.bf16 %v1555, %v1554
    %v1691 = vpack.c.bf16 %v1557, %v1556
    %v1692 = vpack.c.bf16 %v1559, %v1558
    %v1693 = vpack.c.bf16 %v1561, %v1560
    %v1694 = vpack.c.bf16 %v1563, %v1562
    %v1695 = vpack.c.bf16 %v1565, %v1564
    %v1696 = vpack.c.bf16 %v1567, %v1566
    %v1697 = vpack.c.bf16 %v1569, %v1568
    %v1698 = vpack.c.bf16 %v1571, %v1570
    %v1699 = vpack.c.bf16 %v1573, %v1572
    %v1700 = vpack.c.bf16 %v1575, %v1574
    %v1701 = vpack.c.bf16 %v1577, %v1576
    %v1702 = vpack.c.bf16 %v1579, %v1578
    %v1703 = vpack.c.bf16 %v1581, %v1580
    %v1704 = vpack.c.bf16 %v1583, %v1582
    %v1705 = vpack.c.bf16 %v1585, %v1584
    %v1706 = vpack.c.bf16 %v1587, %v1586
    %v1707 = vpack.c.bf16 %v1589, %v1588
    %v1708 = vpack.c.bf16 %v1591, %v1590
    %v1709 = vpack.c.bf16 %v1593, %v1592
    %v1710 = vpack.c.bf16 %v1595, %v1594
    %v1711 = vpack.c.bf16 %v1597, %v1596
    %v1712 = vpack.c.bf16 %v1599, %v1598
    %v1713 = vpack.c.bf16 %v1601, %v1600
    %v1714 = vpack.c.bf16 %v1603, %v1602
    %v1715 = vpack.c.bf16 %v1605, %v1604
    %v1716 = vpack.c.bf16 %v1607, %v1606
    %v1717 = vpack.c.bf16 %v1609, %v1608
    %v1718 = vpack.c.bf16 %v1611, %v1610
    %v1719 = vpack.c.bf16 %v1613, %v1612
    %v1720 = vpack.c.bf16 %v1615, %v1614
    %v1721 = vpack.c.bf16 %v1617, %v1616
    %v1722 = vpack.c.bf16 %v1619, %v1618
    %v1723 = vpack.c.bf16 %v1621, %v1620
    %v1724 = vpack.c.bf16 %v1623, %v1622
    %v1725 = vpack.c.bf16 %v1625, %v1624
    %v1726 = vpack.c.bf16 %v1627, %v1626
    %v1727 = vpack.c.bf16 %v1629, %v1628
    %v1728 = vpack.c.bf16 %v1631, %v1630
    %v1729 = vpack.c.bf16 %v1633, %v1632
    %v1730 = vpack.c.bf16 %v1635, %v1634
    %v1731 = vpack.c.bf16 %v1637, %v1636
    %v1732 = vpack.c.bf16 %v1639, %v1638
    %v1733 = vpack.c.bf16 %v1641, %v1640
    %v1734 = vpack.c.bf16 %v1643, %v1642
    %v1735 = vpack.c.bf16 %v1645, %v1644
    %v1736 = vpack.c.bf16 %v1647, %v1646
    %v1737 = vpack.c.bf16 %v1649, %v1648
    %v1738 = vpack.c.bf16 %v1651, %v1650
    %v1739 = vpack.c.bf16 %v1653, %v1652
    %v1740 = vpack.c.bf16 %v1655, %v1654
    %v1741 = vpack.c.bf16 %v1657, %v1656
    %v1742 = vpack.c.bf16 %v1659, %v1658
    %v1743 = vpack.c.bf16 %v1661, %v1660
    %v1744 = vpack.c.bf16 %v1663, %v1662
    %v1745 = vpack.c.bf16 %v1665, %v1664
    %v1746 = vpack.c.bf16 %v1667, %v1666
    %v1747 = vpack.c.bf16 %v1669, %v1668
    %v1748 = vpack.c.bf16 %v1671, %v1670
    %v1749 = vpack.c.bf16 %v1673, %v1672
    %v1750 = vpack.c.bf16 %v1675, %v1674
    %v1751 = vpack.c.bf16 %v1677, %v1676
    %v1752 = vpack.c.bf16 %v1679, %v1678
    %v1753 = vpack.c.bf16 %v1681, %v1680
    %v1754 = vpack.c.bf16 %v1683, %v1682
    %v1755 = vpack.c.bf16 %v1685, %v1684
    %v1756 = vpack.c.bf16 %v1687, %v1686
    %v1757 = vpack.c.bf16 %v1689, %v1688
    %1758 = vst [vmem:[#allocation2] sm:$0xf] %v1690
    %1759 = vst [vmem:[#allocation2 + $0x24] sm:$0xf] %v1691
    %1760 = vst [vmem:[#allocation2 + $0x48] sm:$0xf] %v1692
    %1761 = vst [vmem:[#allocation2 + $0x6c] sm:$0xf] %v1693
    %1762 = vst [vmem:[#allocation2 + $0x90] sm:$0xf] %v1694
    %1763 = vst [vmem:[#allocation2 + $0xb4] sm:$0xf] %v1695
    %1764 = vst [vmem:[#allocation2 + $0xd8] sm:$0xf] %v1696
    %1765 = vst [vmem:[#allocation2 + $0xfc] sm:$0xf] %v1697
    %1766 = vst [vmem:[#allocation2 + $0x120] sm:$0xf] %v1724
    %1767 = vst [vmem:[#allocation2 + $0x144] sm:$0xf] %v1725
    %1768 = vst [vmem:[#allocation2 + $0x168] sm:$0xf] %v1726
    %1769 = vst [vmem:[#allocation2 + $0x18c] sm:$0xf] %v1727
    %1770 = vst [vmem:[#allocation2 + $0x1b0] sm:$0xf] %v1728
    %1771 = vst [vmem:[#allocation2 + $0x1d4] sm:$0xf] %v1729
    %1772 = vst [vmem:[#allocation2 + $0x1f8] sm:$0xf] %v1730
    %1773 = vst [vmem:[#allocation2 + $0x21c] sm:$0xf] %v1731
    %1774 = vst [vmem:[#allocation2 + $0x4] sm:$0xf] %v1699
    %1775 = vst [vmem:[#allocation2 + $0x28] sm:$0xf] %v1700
    %1776 = vst [vmem:[#allocation2 + $0x4c] sm:$0xf] %v1701
    %1777 = vst [vmem:[#allocation2 + $0x70] sm:$0xf] %v1702
    %1778 = vst [vmem:[#allocation2 + $0x94] sm:$0xf] %v1703
    %1779 = vst [vmem:[#allocation2 + $0xb8] sm:$0xf] %v1704
    %1780 = vst [vmem:[#allocation2 + $0xdc] sm:$0xf] %v1705
    %1781 = vst [vmem:[#allocation2 + $0x100] sm:$0xf] %v1706
    %1782 = vst [vmem:[#allocation2 + $0x124] sm:$0xf] %v1733
    %1783 = vst [vmem:[#allocation2 + $0x148] sm:$0xf] %v1734
    %1784 = vst [vmem:[#allocation2 + $0x16c] sm:$0xf] %v1735
    %1785 = vst [vmem:[#allocation2 + $0x190] sm:$0xf] %v1736
    %1786 = vst [vmem:[#allocation2 + $0x1b4] sm:$0xf] %v1737
    %1787 = vst [vmem:[#allocation2 + $0x1d8] sm:$0xf] %v1738
    %1788 = vst [vmem:[#allocation2 + $0x1fc] sm:$0xf] %v1739
    %1789 = vst [vmem:[#allocation2 + $0x220] sm:$0xf] %v1740
    %v1806 = vunpack.c.l.b16 %v1690
    %v1807 = vunpack.c.h.b16 %v1690
    %v1808 = vunpack.c.l.b16 %v1691
    %v1809 = vunpack.c.h.b16 %v1691
    %v1810 = vunpack.c.l.b16 %v1692
    %v1811 = vunpack.c.h.b16 %v1692
    %v1812 = vunpack.c.l.b16 %v1693
    %v1813 = vunpack.c.h.b16 %v1693
    %v1814 = vunpack.c.l.b16 %v1694
    %v1815 = vunpack.c.h.b16 %v1694
    %v1816 = vunpack.c.l.b16 %v1695
    %v1817 = vunpack.c.h.b16 %v1695
    %v1818 = vunpack.c.l.b16 %v1696
    %v1819 = vunpack.c.h.b16 %v1696
    %v1820 = vunpack.c.l.b16 %v1697
    %v1821 = vunpack.c.h.b16 %v1697
    %v1822 = vunpack.c.l.b16 %v1724
    %v1823 = vunpack.c.h.b16 %v1724
    %v1824 = vunpack.c.l.b16 %v1725
    %v1825 = vunpack.c.h.b16 %v1725
    %v1826 = vunpack.c.l.b16 %v1726
    %v1827 = vunpack.c.h.b16 %v1726
    %v1828 = vunpack.c.l.b16 %v1727
    %v1829 = vunpack.c.h.b16 %v1727
    %v1830 = vunpack.c.l.b16 %v1728
    %v1831 = vunpack.c.h.b16 %v1728
    %v1832 = vunpack.c.l.b16 %v1729
    %v1833 = vunpack.c.h.b16 %v1729
    %v1834 = vunpack.c.l.b16 %v1730
    %v1835 = vunpack.c.h.b16 %v1730
    %v1836 = vunpack.c.l.b16 %v1731
    %v1837 = vunpack.c.h.b16 %v1731
    %v1838 = vpack.c.b16 %v1806, %v1806
    %v1839 = vpack.c.b16 %v1807, %v1807
    %v1840 = vpack.c.b16 %v1808, %v1808
    %v1841 = vpack.c.b16 %v1809, %v1809
    %v1842 = vpack.c.b16 %v1810, %v1810
    %v1843 = vpack.c.b16 %v1811, %v1811
    %v1844 = vpack.c.b16 %v1812, %v1812
    %v1845 = vpack.c.b16 %v1813, %v1813
    %v1846 = vpack.c.b16 %v1814, %v1814
    %v1847 = vpack.c.b16 %v1815, %v1815
    %v1848 = vpack.c.b16 %v1816, %v1816
    %v1849 = vpack.c.b16 %v1817, %v1817
    %v1850 = vpack.c.b16 %v1818, %v1818
    %v1851 = vpack.c.b16 %v1819, %v1819
    %v1852 = vpack.c.b16 %v1820, %v1820
    %v1853 = vpack.c.b16 %v1821, %v1821
    %v1854 = vpack.c.b16 %v1822, %v1822
    %v1855 = vpack.c.b16 %v1823, %v1823
    %v1856 = vpack.c.b16 %v1824, %v1824
    %v1857 = vpack.c.b16 %v1825, %v1825
    %v1858 = vpack.c.b16 %v1826, %v1826
    %v1859 = vpack.c.b16 %v1827, %v1827
    %v1860 = vpack.c.b16 %v1828, %v1828
    %v1861 = vpack.c.b16 %v1829, %v1829
    %v1862 = vpack.c.b16 %v1830, %v1830
    %v1863 = vpack.c.b16 %v1831, %v1831
    %v1864 = vpack.c.b16 %v1832, %v1832
    %v1865 = vpack.c.b16 %v1833, %v1833
    %v1866 = vpack.c.b16 %v1834, %v1834
    %v1867 = vpack.c.b16 %v1835, %v1835
    %v1868 = vpack.c.b16 %v1836, %v1836
    %v1869 = vpack.c.b16 %v1837, %v1837
    %vm1870 = vsmask.f32 3328
    %vm1871 = vsmask.f32 7440
    %vm1872 = vmor %vm1870, %vm1871
    %v1874 = vshrl.u32 %v1838, 16
    %v1876 = vrot.slane %v1874, 4
    %v1877 = vshll.u32 %v1838, 16
    %v1879 = vrot.slane %v1877, 5
    %v1880 = vor.u32 %v1876, %v1879
    %v1881 = vrot.slane %v1880, 4
    %v1883 = vshll.u32 %v1839, 16
    %v1885 = vrot.slane %v1883, 5
    %v1886 = vsel %vm1872, %v1881, %v1885
    %v1888 = vshrl.u32 %v1840, 16
    %v1890 = vrot.slane %v1888, 4
    %v1891 = vshll.u32 %v1840, 16
    %v1893 = vrot.slane %v1891, 5
    %v1894 = vor.u32 %v1890, %v1893
    %v1895 = vrot.slane %v1894, 4
    %v1897 = vshll.u32 %v1841, 16
    %v1899 = vrot.slane %v1897, 5
    %v1900 = vsel %vm1872, %v1895, %v1899
    %v1902 = vshrl.u32 %v1842, 16
    %v1904 = vrot.slane %v1902, 4
    %v1905 = vshll.u32 %v1842, 16
    %v1907 = vrot.slane %v1905, 5
    %v1908 = vor.u32 %v1904, %v1907
    %v1909 = vrot.slane %v1908, 4
    %v1911 = vshll.u32 %v1843, 16
    %v1913 = vrot.slane %v1911, 5
    %v1914 = vsel %vm1872, %v1909, %v1913
    %v1916 = vshrl.u32 %v1844, 16
    %v1918 = vrot.slane %v1916, 4
    %v1919 = vshll.u32 %v1844, 16
    %v1921 = vrot.slane %v1919, 5
    %v1922 = vor.u32 %v1918, %v1921
    %v1923 = vrot.slane %v1922, 4
    %v1925 = vshll.u32 %v1845, 16
    %v1927 = vrot.slane %v1925, 5
    %v1928 = vsel %vm1872, %v1923, %v1927
    %v1930 = vshrl.u32 %v1846, 16
    %v1932 = vrot.slane %v1930, 4
    %v1933 = vshll.u32 %v1846, 16
    %v1935 = vrot.slane %v1933, 5
    %v1936 = vor.u32 %v1932, %v1935
    %v1937 = vrot.slane %v1936, 4
    %v1939 = vshll.u32 %v1847, 16
    %v1941 = vrot.slane %v1939, 5
    %v1942 = vsel %vm1872, %v1937, %v1941
    %v1944 = vshrl.u32 %v1848, 16
    %v1946 = vrot.slane %v1944, 4
    %v1947 = vshll.u32 %v1848, 16
    %v1949 = vrot.slane %v1947, 5
    %v1950 = vor.u32 %v1946, %v1949
    %v1951 = vrot.slane %v1950, 4
    %v1953 = vshll.u32 %v1849, 16
    %v1955 = vrot.slane %v1953, 5
    %v1956 = vsel %vm1872, %v1951, %v1955
    %v1958 = vshrl.u32 %v1850, 16
    %v1960 = vrot.slane %v1958, 4
    %v1961 = vshll.u32 %v1850, 16
    %v1963 = vrot.slane %v1961, 5
    %v1964 = vor.u32 %v1960, %v1963
    %v1965 = vrot.slane %v1964, 4
    %v1967 = vshll.u32 %v1851, 16
    %v1969 = vrot.slane %v1967, 5
    %v1970 = vsel %vm1872, %v1965, %v1969
    %v1972 = vshrl.u32 %v1852, 16
    %v1974 = vrot.slane %v1972, 4
    %v1975 = vshll.u32 %v1852, 16
    %v1977 = vrot.slane %v1975, 5
    %v1978 = vor.u32 %v1974, %v1977
    %v1979 = vrot.slane %v1978, 4
    %v1981 = vshll.u32 %v1853, 16
    %v1983 = vrot.slane %v1981, 5
    %v1984 = vsel %vm1872, %v1979, %v1983
    %v1986 = vshrl.u32 %v1854, 16
    %v1988 = vrot.slane %v1986, 4
    %v1989 = vshll.u32 %v1854, 16
    %v1991 = vrot.slane %v1989, 5
    %v1992 = vor.u32 %v1988, %v1991
    %v1993 = vrot.slane %v1992, 4
    %v1995 = vshll.u32 %v1855, 16
    %v1997 = vrot.slane %v1995, 5
    %v1998 = vsel %vm1872, %v1993, %v1997
    %v2000 = vshrl.u32 %v1856, 16
    %v2002 = vrot.slane %v2000, 4
    %v2003 = vshll.u32 %v1856, 16
    %v2005 = vrot.slane %v2003, 5
    %v2006 = vor.u32 %v2002, %v2005
    %v2007 = vrot.slane %v2006, 4
    %v2009 = vshll.u32 %v1857, 16
    %v2011 = vrot.slane %v2009, 5
    %v2012 = vsel %vm1872, %v2007, %v2011
    %v2014 = vshrl.u32 %v1858, 16
    %v2016 = vrot.slane %v2014, 4
    %v2017 = vshll.u32 %v1858, 16
    %v2019 = vrot.slane %v2017, 5
    %v2020 = vor.u32 %v2016, %v2019
    %v2021 = vrot.slane %v2020, 4
    %v2023 = vshll.u32 %v1859, 16
    %v2025 = vrot.slane %v2023, 5
    %v2026 = vsel %vm1872, %v2021, %v2025
    %v2028 = vshrl.u32 %v1860, 16
    %v2030 = vrot.slane %v2028, 4
    %v2031 = vshll.u32 %v1860, 16
    %v2033 = vrot.slane %v2031, 5
    %v2034 = vor.u32 %v2030, %v2033
    %v2035 = vrot.slane %v2034, 4
    %v2037 = vshll.u32 %v1861, 16
    %v2039 = vrot.slane %v2037, 5
    %v2040 = vsel %vm1872, %v2035, %v2039
    %v2042 = vshrl.u32 %v1862, 16
    %v2044 = vrot.slane %v2042, 4
    %v2045 = vshll.u32 %v1862, 16
    %v2047 = vrot.slane %v2045, 5
    %v2048 = vor.u32 %v2044, %v2047
    %v2049 = vrot.slane %v2048, 4
    %v2051 = vshll.u32 %v1863, 16
    %v2053 = vrot.slane %v2051, 5
    %v2054 = vsel %vm1872, %v2049, %v2053
    %v2056 = vshrl.u32 %v1864, 16
    %v2058 = vrot.slane %v2056, 4
    %v2059 = vshll.u32 %v1864, 16
    %v2061 = vrot.slane %v2059, 5
    %v2062 = vor.u32 %v2058, %v2061
    %v2063 = vrot.slane %v2062, 4
    %v2065 = vshll.u32 %v1865, 16
    %v2067 = vrot.slane %v2065, 5
    %v2068 = vsel %vm1872, %v2063, %v2067
    %v2070 = vshrl.u32 %v1866, 16
    %v2072 = vrot.slane %v2070, 4
    %v2073 = vshll.u32 %v1866, 16
    %v2075 = vrot.slane %v2073, 5
    %v2076 = vor.u32 %v2072, %v2075
    %v2077 = vrot.slane %v2076, 4
    %v2079 = vshll.u32 %v1867, 16
    %v2081 = vrot.slane %v2079, 5
    %v2082 = vsel %vm1872, %v2077, %v2081
    %v2084 = vshrl.u32 %v1868, 16
    %v2086 = vrot.slane %v2084, 4
    %v2087 = vshll.u32 %v1868, 16
    %v2089 = vrot.slane %v2087, 5
    %v2090 = vor.u32 %v2086, %v2089
    %v2091 = vrot.slane %v2090, 4
    %v2093 = vshll.u32 %v1869, 16
    %v2095 = vrot.slane %v2093, 5
    %v2096 = vsel %vm1872, %v2091, %v2095
    %2113 = vst [vmem:[#allocation2 + $0x8] sm:$0xf] %v1886
    %2114 = vst [vmem:[#allocation2 + $0x2c] sm:$0xf] %v1900
    %2115 = vst [vmem:[#allocation2 + $0x50] sm:$0xf] %v1914
    %2116 = vst [vmem:[#allocation2 + $0x74] sm:$0xf] %v1928
    %2117 = vst [vmem:[#allocation2 + $0x98] sm:$0xf] %v1942
    %2118 = vst [vmem:[#allocation2 + $0xbc] sm:$0xf] %v1956
    %2119 = vst [vmem:[#allocation2 + $0xe0] sm:$0xf] %v1970
    %2120 = vst [vmem:[#allocation2 + $0x104] sm:$0xf] %v1984
    %2121 = vst [vmem:[#allocation2 + $0x128] sm:$0xf] %v1998
    %2122 = vst [vmem:[#allocation2 + $0x14c] sm:$0xf] %v2012
    %2123 = vst [vmem:[#allocation2 + $0x170] sm:$0xf] %v2026
    %2124 = vst [vmem:[#allocation2 + $0x194] sm:$0xf] %v2040
    %2125 = vst [vmem:[#allocation2 + $0x1b8] sm:$0xf] %v2054
    %2126 = vst [vmem:[#allocation2 + $0x1dc] sm:$0xf] %v2068
    %2127 = vst [vmem:[#allocation2 + $0x200] sm:$0xf] %v2082
    %2128 = vst [vmem:[#allocation2 + $0x224] sm:$0xf] %v2096
    %2129 = vst [vmem:[#allocation2 + $0xc] sm:$0xf] %v1708
    %2130 = vst [vmem:[#allocation2 + $0x30] sm:$0xf] %v1709
    %2131 = vst [vmem:[#allocation2 + $0x54] sm:$0xf] %v1710
    %2132 = vst [vmem:[#allocation2 + $0x78] sm:$0xf] %v1711
    %2133 = vst [vmem:[#allocation2 + $0x9c] sm:$0xf] %v1712
    %2134 = vst [vmem:[#allocation2 + $0xc0] sm:$0xf] %v1713
    %2135 = vst [vmem:[#allocation2 + $0xe4] sm:$0xf] %v1714
    %2136 = vst [vmem:[#allocation2 + $0x108] sm:$0xf] %v1715
    %2137 = vst [vmem:[#allocation2 + $0x12c] sm:$0xf] %v1742
    %2138 = vst [vmem:[#allocation2 + $0x150] sm:$0xf] %v1743
    %2139 = vst [vmem:[#allocation2 + $0x174] sm:$0xf] %v1744
    %2140 = vst [vmem:[#allocation2 + $0x198] sm:$0xf] %v1745
    %2141 = vst [vmem:[#allocation2 + $0x1bc] sm:$0xf] %v1746
    %2142 = vst [vmem:[#allocation2 + $0x1e0] sm:$0xf] %v1747
    %2143 = vst [vmem:[#allocation2 + $0x204] sm:$0xf] %v1748
    %2144 = vst [vmem:[#allocation2 + $0x228] sm:$0xf] %v1749
    %2145 = vst [vmem:[#allocation2 + $0x10] sm:$0xf] %v1716
    %2146 = vst [vmem:[#allocation2 + $0x34] sm:$0xf] %v1717
    %2147 = vst [vmem:[#allocation2 + $0x58] sm:$0xf] %v1718
    %2148 = vst [vmem:[#allocation2 + $0x7c] sm:$0xf] %v1719
    %2149 = vst [vmem:[#allocation2 + $0xa0] sm:$0xf] %v1720
    %2150 = vst [vmem:[#allocation2 + $0xc4] sm:$0xf] %v1721
    %2151 = vst [vmem:[#allocation2 + $0xe8] sm:$0xf] %v1722
    %2152 = vst [vmem:[#allocation2 + $0x10c] sm:$0xf] %v1723
    %2153 = vst [vmem:[#allocation2 + $0x130] sm:$0xf] %v1750
    %2154 = vst [vmem:[#allocation2 + $0x154] sm:$0xf] %v1751
    %2155 = vst [vmem:[#allocation2 + $0x178] sm:$0xf] %v1752
    %2156 = vst [vmem:[#allocation2 + $0x19c] sm:$0xf] %v1753
    %2157 = vst [vmem:[#allocation2 + $0x1c0] sm:$0xf] %v1754
    %2158 = vst [vmem:[#allocation2 + $0x1e4] sm:$0xf] %v1755
    %2159 = vst [vmem:[#allocation2 + $0x208] sm:$0xf] %v1756
    %2160 = vst [vmem:[#allocation2 + $0x22c] sm:$0xf] %v1757
    %v2177 = vunpack.c.l.b16 %v1708
    %v2178 = vunpack.c.h.b16 %v1708
    %v2179 = vunpack.c.l.b16 %v1709
    %v2180 = vunpack.c.h.b16 %v1709
    %v2181 = vunpack.c.l.b16 %v1710
    %v2182 = vunpack.c.h.b16 %v1710
    %v2183 = vunpack.c.l.b16 %v1711
    %v2184 = vunpack.c.h.b16 %v1711
    %v2185 = vunpack.c.l.b16 %v1712
    %v2186 = vunpack.c.h.b16 %v1712
    %v2187 = vunpack.c.l.b16 %v1713
    %v2188 = vunpack.c.h.b16 %v1713
    %v2189 = vunpack.c.l.b16 %v1714
    %v2190 = vunpack.c.h.b16 %v1714
    %v2191 = vunpack.c.l.b16 %v1715
    %v2192 = vunpack.c.h.b16 %v1715
    %v2193 = vunpack.c.l.b16 %v1742
    %v2194 = vunpack.c.h.b16 %v1742
    %v2195 = vunpack.c.l.b16 %v1743
    %v2196 = vunpack.c.h.b16 %v1743
    %v2197 = vunpack.c.l.b16 %v1744
    %v2198 = vunpack.c.h.b16 %v1744
    %v2199 = vunpack.c.l.b16 %v1745
    %v2200 = vunpack.c.h.b16 %v1745
    %v2201 = vunpack.c.l.b16 %v1746
    %v2202 = vunpack.c.h.b16 %v1746
    %v2203 = vunpack.c.l.b16 %v1747
    %v2204 = vunpack.c.h.b16 %v1747
    %v2205 = vunpack.c.l.b16 %v1748
    %v2206 = vunpack.c.h.b16 %v1748
    %v2207 = vunpack.c.l.b16 %v1749
    %v2208 = vunpack.c.h.b16 %v1749
    %v2209 = vpack.c.b16 %v2177, %v2177
    %v2210 = vpack.c.b16 %v2178, %v2178
    %v2211 = vpack.c.b16 %v2179, %v2179
    %v2212 = vpack.c.b16 %v2180, %v2180
    %v2213 = vpack.c.b16 %v2181, %v2181
    %v2214 = vpack.c.b16 %v2182, %v2182
    %v2215 = vpack.c.b16 %v2183, %v2183
    %v2216 = vpack.c.b16 %v2184, %v2184
    %v2217 = vpack.c.b16 %v2185, %v2185
    %v2218 = vpack.c.b16 %v2186, %v2186
    %v2219 = vpack.c.b16 %v2187, %v2187
    %v2220 = vpack.c.b16 %v2188, %v2188
    %v2221 = vpack.c.b16 %v2189, %v2189
    %v2222 = vpack.c.b16 %v2190, %v2190
    %v2223 = vpack.c.b16 %v2191, %v2191
    %v2224 = vpack.c.b16 %v2192, %v2192
    %v2225 = vpack.c.b16 %v2193, %v2193
    %v2226 = vpack.c.b16 %v2194, %v2194
    %v2227 = vpack.c.b16 %v2195, %v2195
    %v2228 = vpack.c.b16 %v2196, %v2196
    %v2229 = vpack.c.b16 %v2197, %v2197
    %v2230 = vpack.c.b16 %v2198, %v2198
    %v2231 = vpack.c.b16 %v2199, %v2199
    %v2232 = vpack.c.b16 %v2200, %v2200
    %v2233 = vpack.c.b16 %v2201, %v2201
    %v2234 = vpack.c.b16 %v2202, %v2202
    %v2235 = vpack.c.b16 %v2203, %v2203
    %v2236 = vpack.c.b16 %v2204, %v2204
    %v2237 = vpack.c.b16 %v2205, %v2205
    %v2238 = vpack.c.b16 %v2206, %v2206
    %v2239 = vpack.c.b16 %v2207, %v2207
    %v2240 = vpack.c.b16 %v2208, %v2208
    %v2242 = vshrl.u32 %v2209, 16
    %v2244 = vrot.slane %v2242, 4
    %v2245 = vshll.u32 %v2209, 16
    %v2247 = vrot.slane %v2245, 5
    %v2248 = vor.u32 %v2244, %v2247
    %v2249 = vrot.slane %v2248, 4
    %v2251 = vshll.u32 %v2210, 16
    %v2253 = vrot.slane %v2251, 5
    %v2254 = vsel %vm1872, %v2249, %v2253
    %v2256 = vshrl.u32 %v2211, 16
    %v2258 = vrot.slane %v2256, 4
    %v2259 = vshll.u32 %v2211, 16
    %v2261 = vrot.slane %v2259, 5
    %v2262 = vor.u32 %v2258, %v2261
    %v2263 = vrot.slane %v2262, 4
    %v2265 = vshll.u32 %v2212, 16
    %v2267 = vrot.slane %v2265, 5
    %v2268 = vsel %vm1872, %v2263, %v2267
    %v2270 = vshrl.u32 %v2213, 16
    %v2272 = vrot.slane %v2270, 4
    %v2273 = vshll.u32 %v2213, 16
    %v2275 = vrot.slane %v2273, 5
    %v2276 = vor.u32 %v2272, %v2275
    %v2277 = vrot.slane %v2276, 4
    %v2279 = vshll.u32 %v2214, 16
    %v2281 = vrot.slane %v2279, 5
    %v2282 = vsel %vm1872, %v2277, %v2281
    %v2284 = vshrl.u32 %v2215, 16
    %v2286 = vrot.slane %v2284, 4
    %v2287 = vshll.u32 %v2215, 16
    %v2289 = vrot.slane %v2287, 5
    %v2290 = vor.u32 %v2286, %v2289
    %v2291 = vrot.slane %v2290, 4
    %v2293 = vshll.u32 %v2216, 16
    %v2295 = vrot.slane %v2293, 5
    %v2296 = vsel %vm1872, %v2291, %v2295
    %v2298 = vshrl.u32 %v2217, 16
    %v2300 = vrot.slane %v2298, 4
    %v2301 = vshll.u32 %v2217, 16
    %v2303 = vrot.slane %v2301, 5
    %v2304 = vor.u32 %v2300, %v2303
    %v2305 = vrot.slane %v2304, 4
    %v2307 = vshll.u32 %v2218, 16
    %v2309 = vrot.slane %v2307, 5
    %v2310 = vsel %vm1872, %v2305, %v2309
    %v2312 = vshrl.u32 %v2219, 16
    %v2314 = vrot.slane %v2312, 4
    %v2315 = vshll.u32 %v2219, 16
    %v2317 = vrot.slane %v2315, 5
    %v2318 = vor.u32 %v2314, %v2317
    %v2319 = vrot.slane %v2318, 4
    %v2321 = vshll.u32 %v2220, 16
    %v2323 = vrot.slane %v2321, 5
    %v2324 = vsel %vm1872, %v2319, %v2323
    %v2326 = vshrl.u32 %v2221, 16
    %v2328 = vrot.slane %v2326, 4
    %v2329 = vshll.u32 %v2221, 16
    %v2331 = vrot.slane %v2329, 5
    %v2332 = vor.u32 %v2328, %v2331
    %v2333 = vrot.slane %v2332, 4
    %v2335 = vshll.u32 %v2222, 16
    %v2337 = vrot.slane %v2335, 5
    %v2338 = vsel %vm1872, %v2333, %v2337
    %v2340 = vshrl.u32 %v2223, 16
    %v2342 = vrot.slane %v2340, 4
    %v2343 = vshll.u32 %v2223, 16
    %v2345 = vrot.slane %v2343, 5
    %v2346 = vor.u32 %v2342, %v2345
    %v2347 = vrot.slane %v2346, 4
    %v2349 = vshll.u32 %v2224, 16
    %v2351 = vrot.slane %v2349, 5
    %v2352 = vsel %vm1872, %v2347, %v2351
    %v2354 = vshrl.u32 %v2225, 16
    %v2356 = vrot.slane %v2354, 4
    %v2357 = vshll.u32 %v2225, 16
    %v2359 = vrot.slane %v2357, 5
    %v2360 = vor.u32 %v2356, %v2359
    %v2361 = vrot.slane %v2360, 4
    %v2363 = vshll.u32 %v2226, 16
    %v2365 = vrot.slane %v2363, 5
    %v2366 = vsel %vm1872, %v2361, %v2365
    %v2368 = vshrl.u32 %v2227, 16
    %v2370 = vrot.slane %v2368, 4
    %v2371 = vshll.u32 %v2227, 16
    %v2373 = vrot.slane %v2371, 5
    %v2374 = vor.u32 %v2370, %v2373
    %v2375 = vrot.slane %v2374, 4
    %v2377 = vshll.u32 %v2228, 16
    %v2379 = vrot.slane %v2377, 5
    %v2380 = vsel %vm1872, %v2375, %v2379
    %v2382 = vshrl.u32 %v2229, 16
    %v2384 = vrot.slane %v2382, 4
    %v2385 = vshll.u32 %v2229, 16
    %v2387 = vrot.slane %v2385, 5
    %v2388 = vor.u32 %v2384, %v2387
    %v2389 = vrot.slane %v2388, 4
    %v2391 = vshll.u32 %v2230, 16
    %v2393 = vrot.slane %v2391, 5
    %v2394 = vsel %vm1872, %v2389, %v2393
    %v2396 = vshrl.u32 %v2231, 16
    %v2398 = vrot.slane %v2396, 4
    %v2399 = vshll.u32 %v2231, 16
    %v2401 = vrot.slane %v2399, 5
    %v2402 = vor.u32 %v2398, %v2401
    %v2403 = vrot.slane %v2402, 4
    %v2405 = vshll.u32 %v2232, 16
    %v2407 = vrot.slane %v2405, 5
    %v2408 = vsel %vm1872, %v2403, %v2407
    %v2410 = vshrl.u32 %v2233, 16
    %v2412 = vrot.slane %v2410, 4
    %v2413 = vshll.u32 %v2233, 16
    %v2415 = vrot.slane %v2413, 5
    %v2416 = vor.u32 %v2412, %v2415
    %v2417 = vrot.slane %v2416, 4
    %v2419 = vshll.u32 %v2234, 16
    %v2421 = vrot.slane %v2419, 5
    %v2422 = vsel %vm1872, %v2417, %v2421
    %v2424 = vshrl.u32 %v2235, 16
    %v2426 = vrot.slane %v2424, 4
    %v2427 = vshll.u32 %v2235, 16
    %v2429 = vrot.slane %v2427, 5
    %v2430 = vor.u32 %v2426, %v2429
    %v2431 = vrot.slane %v2430, 4
    %v2433 = vshll.u32 %v2236, 16
    %v2435 = vrot.slane %v2433, 5
    %v2436 = vsel %vm1872, %v2431, %v2435
    %v2438 = vshrl.u32 %v2237, 16
    %v2440 = vrot.slane %v2438, 4
    %v2441 = vshll.u32 %v2237, 16
    %v2443 = vrot.slane %v2441, 5
    %v2444 = vor.u32 %v2440, %v2443
    %v2445 = vrot.slane %v2444, 4
    %v2447 = vshll.u32 %v2238, 16
    %v2449 = vrot.slane %v2447, 5
    %v2450 = vsel %vm1872, %v2445, %v2449
    %v2452 = vshrl.u32 %v2239, 16
    %v2454 = vrot.slane %v2452, 4
    %v2455 = vshll.u32 %v2239, 16
    %v2457 = vrot.slane %v2455, 5
    %v2458 = vor.u32 %v2454, %v2457
    %v2459 = vrot.slane %v2458, 4
    %v2461 = vshll.u32 %v2240, 16
    %v2463 = vrot.slane %v2461, 5
    %v2464 = vsel %vm1872, %v2459, %v2463
    %2481 = vst [vmem:[#allocation2 + $0x14] sm:$0xf] %v2254
    %2482 = vst [vmem:[#allocation2 + $0x38] sm:$0xf] %v2268
    %2483 = vst [vmem:[#allocation2 + $0x5c] sm:$0xf] %v2282
    %2484 = vst [vmem:[#allocation2 + $0x80] sm:$0xf] %v2296
    %2485 = vst [vmem:[#allocation2 + $0xa4] sm:$0xf] %v2310
    %2486 = vst [vmem:[#allocation2 + $0xc8] sm:$0xf] %v2324
    %2487 = vst [vmem:[#allocation2 + $0xec] sm:$0xf] %v2338
    %2488 = vst [vmem:[#allocation2 + $0x110] sm:$0xf] %v2352
    %2489 = vst [vmem:[#allocation2 + $0x134] sm:$0xf] %v2366
    %2490 = vst [vmem:[#allocation2 + $0x158] sm:$0xf] %v2380
    %2491 = vst [vmem:[#allocation2 + $0x17c] sm:$0xf] %v2394
    %2492 = vst [vmem:[#allocation2 + $0x1a0] sm:$0xf] %v2408
    %2493 = vst [vmem:[#allocation2 + $0x1c4] sm:$0xf] %v2422
    %2494 = vst [vmem:[#allocation2 + $0x1e8] sm:$0xf] %v2436
    %2495 = vst [vmem:[#allocation2 + $0x20c] sm:$0xf] %v2450
    %2496 = vst [vmem:[#allocation2 + $0x230] sm:$0xf] %v2464
    %2497 = vst [vmem:[#allocation2 + $0x18] sm:$0xf] %v1691
    %2498 = vst [vmem:[#allocation2 + $0x3c] sm:$0xf] %v1692
    %2499 = vst [vmem:[#allocation2 + $0x60] sm:$0xf] %v1693
    %2500 = vst [vmem:[#allocation2 + $0x84] sm:$0xf] %v1694
    %2501 = vst [vmem:[#allocation2 + $0xa8] sm:$0xf] %v1695
    %2502 = vst [vmem:[#allocation2 + $0xcc] sm:$0xf] %v1696
    %2503 = vst [vmem:[#allocation2 + $0xf0] sm:$0xf] %v1697
    %2504 = vst [vmem:[#allocation2 + $0x114] sm:$0xf] %v1698
    %2505 = vst [vmem:[#allocation2 + $0x138] sm:$0xf] %v1725
    %2506 = vst [vmem:[#allocation2 + $0x15c] sm:$0xf] %v1726
    %2507 = vst [vmem:[#allocation2 + $0x180] sm:$0xf] %v1727
    %2508 = vst [vmem:[#allocation2 + $0x1a4] sm:$0xf] %v1728
    %2509 = vst [vmem:[#allocation2 + $0x1c8] sm:$0xf] %v1729
    %2510 = vst [vmem:[#allocation2 + $0x1ec] sm:$0xf] %v1730
    %2511 = vst [vmem:[#allocation2 + $0x210] sm:$0xf] %v1731
    %2512 = vst [vmem:[#allocation2 + $0x234] sm:$0xf] %v1732
    %2513 = vst [vmem:[#allocation2 + $0x1c] sm:$0xf] %v1700
    %2514 = vst [vmem:[#allocation2 + $0x40] sm:$0xf] %v1701
    %2515 = vst [vmem:[#allocation2 + $0x64] sm:$0xf] %v1702
    %2516 = vst [vmem:[#allocation2 + $0x88] sm:$0xf] %v1703
    %2517 = vst [vmem:[#allocation2 + $0xac] sm:$0xf] %v1704
    %2518 = vst [vmem:[#allocation2 + $0xd0] sm:$0xf] %v1705
    %2519 = vst [vmem:[#allocation2 + $0xf4] sm:$0xf] %v1706
    %2520 = vst [vmem:[#allocation2 + $0x118] sm:$0xf] %v1707
    %2521 = vst [vmem:[#allocation2 + $0x13c] sm:$0xf] %v1734
    %2522 = vst [vmem:[#allocation2 + $0x160] sm:$0xf] %v1735
    %2523 = vst [vmem:[#allocation2 + $0x184] sm:$0xf] %v1736
    %2524 = vst [vmem:[#allocation2 + $0x1a8] sm:$0xf] %v1737
    %2525 = vst [vmem:[#allocation2 + $0x1cc] sm:$0xf] %v1738
    %2526 = vst [vmem:[#allocation2 + $0x1f0] sm:$0xf] %v1739
    %2527 = vst [vmem:[#allocation2 + $0x214] sm:$0xf] %v1740
    %2528 = vst [vmem:[#allocation2 + $0x238] sm:$0xf] %v1741
    %v2531 = vunpack.c.l.b16 %v1698
    %v2532 = vunpack.c.h.b16 %v1698
    %v2533 = vunpack.c.l.b16 %v1732
    %v2534 = vunpack.c.h.b16 %v1732
    %v2535 = vpack.c.b16 %v2531, %v2531
    %v2536 = vpack.c.b16 %v2532, %v2532
    %v2537 = vpack.c.b16 %v2533, %v2533
    %v2538 = vpack.c.b16 %v2534, %v2534
    %v2540 = vshrl.u32 %v2535, 16
    %v2542 = vrot.slane %v2540, 4
    %v2543 = vshll.u32 %v2535, 16
    %v2545 = vrot.slane %v2543, 5
    %v2546 = vor.u32 %v2542, %v2545
    %v2547 = vrot.slane %v2546, 4
    %v2549 = vshll.u32 %v2536, 16
    %v2551 = vrot.slane %v2549, 5
    %v2552 = vsel %vm1872, %v2547, %v2551
    %v2554 = vshrl.u32 %v2537, 16
    %v2556 = vrot.slane %v2554, 4
    %v2557 = vshll.u32 %v2537, 16
    %v2559 = vrot.slane %v2557, 5
    %v2560 = vor.u32 %v2556, %v2559
    %v2561 = vrot.slane %v2560, 4
    %v2563 = vshll.u32 %v2538, 16
    %v2565 = vrot.slane %v2563, 5
    %v2566 = vsel %vm1872, %v2561, %v2565
    %2569 = vst [vmem:[#allocation2 + $0x20] sm:$0xf] %v1900
    %2570 = vst [vmem:[#allocation2 + $0x44] sm:$0xf] %v1914
    %2571 = vst [vmem:[#allocation2 + $0x68] sm:$0xf] %v1928
    %2572 = vst [vmem:[#allocation2 + $0x8c] sm:$0xf] %v1942
    %2573 = vst [vmem:[#allocation2 + $0xb0] sm:$0xf] %v1956
    %2574 = vst [vmem:[#allocation2 + $0xd4] sm:$0xf] %v1970
    %2575 = vst [vmem:[#allocation2 + $0xf8] sm:$0xf] %v1984
    %2576 = vst [vmem:[#allocation2 + $0x11c] sm:$0xf] %v2552
    %2577 = vst [vmem:[#allocation2 + $0x140] sm:$0xf] %v2012
    %2578 = vst [vmem:[#allocation2 + $0x164] sm:$0xf] %v2026
    %2579 = vst [vmem:[#allocation2 + $0x188] sm:$0xf] %v2040
    %2580 = vst [vmem:[#allocation2 + $0x1ac] sm:$0xf] %v2054
    %2581 = vst [vmem:[#allocation2 + $0x1d0] sm:$0xf] %v2068
    %2582 = vst [vmem:[#allocation2 + $0x1f4] sm:$0xf] %v2082
    %2583 = vst [vmem:[#allocation2 + $0x218] sm:$0xf] %v2096
    %2584 = vst [vmem:[#allocation2 + $0x23c] sm:$0xf] %v2566
    %v2585 = vld [vmem:[#allocation2] sm:$0xff]
    %v2586 = vld [vmem:[#allocation2 + $0x8] sm:$0xff]
    %v2587 = vld [vmem:[#allocation2 + $0x10] sm:$0xff]
    %v2588 = vld [vmem:[#allocation2 + $0x18] sm:$0xff]
    %v2589 = vld [vmem:[#allocation2 + $0x20] sm:$0xf]
    %v2590 = vld [vmem:[#allocation2 + $0x24] sm:$0xff]
    %v2591 = vld [vmem:[#allocation2 + $0x2c] sm:$0xff]
    %v2592 = vld [vmem:[#allocation2 + $0x34] sm:$0xff]
    %v2593 = vld [vmem:[#allocation2 + $0x3c] sm:$0xff]
    %v2594 = vld [vmem:[#allocation2 + $0x44] sm:$0xf]
    %v2595 = vld [vmem:[#allocation2 + $0x48] sm:$0xff]
    %v2596 = vld [vmem:[#allocation2 + $0x50] sm:$0xff]
    %v2597 = vld [vmem:[#allocation2 + $0x58] sm:$0xff]
    %v2598 = vld [vmem:[#allocation2 + $0x60] sm:$0xff]
    %v2599 = vld [vmem:[#allocation2 + $0x68] sm:$0xf]
    %v2600 = vld [vmem:[#allocation2 + $0x6c] sm:$0xff]
    %v2601 = vld [vmem:[#allocation2 + $0x74] sm:$0xff]
    %v2602 = vld [vmem:[#allocation2 + $0x7c] sm:$0xff]
    %v2603 = vld [vmem:[#allocation2 + $0x84] sm:$0xff]
    %v2604 = vld [vmem:[#allocation2 + $0x8c] sm:$0xf]
    %v2605 = vld [vmem:[#allocation2 + $0x90] sm:$0xff]
    %v2606 = vld [vmem:[#allocation2 + $0x98] sm:$0xff]
    %v2607 = vld [vmem:[#allocation2 + $0xa0] sm:$0xff]
    %v2608 = vld [vmem:[#allocation2 + $0xa8] sm:$0xff]
    %v2609 = vld [vmem:[#allocation2 + $0xb0] sm:$0xf]
    %v2610 = vld [vmem:[#allocation2 + $0xb4] sm:$0xff]
    %v2611 = vld [vmem:[#allocation2 + $0xbc] sm:$0xff]
    %v2612 = vld [vmem:[#allocation2 + $0xc4] sm:$0xff]
    %v2613 = vld [vmem:[#allocation2 + $0xcc] sm:$0xff]
    %v2614 = vld [vmem:[#allocation2 + $0xd4] sm:$0xf]
    %v2615 = vld [vmem:[#allocation2 + $0xd8] sm:$0xff]
    %v2616 = vld [vmem:[#allocation2 + $0xe0] sm:$0xff]
    %v2617 = vld [vmem:[#allocation2 + $0xe8] sm:$0xff]
    %v2618 = vld [vmem:[#allocation2 + $0xf0] sm:$0xff]
    %v2619 = vld [vmem:[#allocation2 + $0xf8] sm:$0xf]
    %v2620 = vld [vmem:[#allocation2 + $0xfc] sm:$0xff]
    %v2621 = vld [vmem:[#allocation2 + $0x104] sm:$0xff]
    %v2622 = vld [vmem:[#allocation2 + $0x10c] sm:$0xff]
    %v2623 = vld [vmem:[#allocation2 + $0x114] sm:$0xff]
    %v2624 = vld [vmem:[#allocation2 + $0x11c] sm:$0xf]
    %v2625 = vld [vmem:[#allocation2 + $0x120] sm:$0xff]
    %v2626 = vld [vmem:[#allocation2 + $0x128] sm:$0xff]
    %v2627 = vld [vmem:[#allocation2 + $0x130] sm:$0xff]
    %v2628 = vld [vmem:[#allocation2 + $0x138] sm:$0xff]
    %v2629 = vld [vmem:[#allocation2 + $0x140] sm:$0xf]
    %v2630 = vld [vmem:[#allocation2 + $0x144] sm:$0xff]
    %v2631 = vld [vmem:[#allocation2 + $0x14c] sm:$0xff]
    %v2632 = vld [vmem:[#allocation2 + $0x154] sm:$0xff]
    %v2633 = vld [vmem:[#allocation2 + $0x15c] sm:$0xff]
    %v2634 = vld [vmem:[#allocation2 + $0x164] sm:$0xf]
    %v2635 = vld [vmem:[#allocation2 + $0x168] sm:$0xff]
    %v2636 = vld [vmem:[#allocation2 + $0x170] sm:$0xff]
    %v2637 = vld [vmem:[#allocation2 + $0x178] sm:$0xff]
    %v2638 = vld [vmem:[#allocation2 + $0x180] sm:$0xff]
    %v2639 = vld [vmem:[#allocation2 + $0x188] sm:$0xf]
    %v2640 = vld [vmem:[#allocation2 + $0x18c] sm:$0xff]
    %v2641 = vld [vmem:[#allocation2 + $0x194] sm:$0xff]
    %v2642 = vld [vmem:[#allocation2 + $0x19c] sm:$0xff]
    %v2643 = vld [vmem:[#allocation2 + $0x1a4] sm:$0xff]
    %v2644 = vld [vmem:[#allocation2 + $0x1ac] sm:$0xf]
    %v2645 = vld [vmem:[#allocation2 + $0x1b0] sm:$0xff]
    %v2646 = vld [vmem:[#allocation2 + $0x1b8] sm:$0xff]
    %v2647 = vld [vmem:[#allocation2 + $0x1c0] sm:$0xff]
    %v2648 = vld [vmem:[#allocation2 + $0x1c8] sm:$0xff]
    %v2649 = vld [vmem:[#allocation2 + $0x1d0] sm:$0xf]
    %v2650 = vld [vmem:[#allocation2 + $0x1d4] sm:$0xff]
    %v2651 = vld [vmem:[#allocation2 + $0x1dc] sm:$0xff]
    %v2652 = vld [vmem:[#allocation2 + $0x1e4] sm:$0xff]
    %v2653 = vld [vmem:[#allocation2 + $0x1ec] sm:$0xff]
    %v2654 = vld [vmem:[#allocation2 + $0x1f4] sm:$0xf]
    %v2655 = vld [vmem:[#allocation2 + $0x1f8] sm:$0xff]
    %v2656 = vld [vmem:[#allocation2 + $0x200] sm:$0xff]
    %v2657 = vld [vmem:[#allocation2 + $0x208] sm:$0xff]
    %v2658 = vld [vmem:[#allocation2 + $0x210] sm:$0xff]
    %v2659 = vld [vmem:[#allocation2 + $0x218] sm:$0xf]
    %v2660 = vld [vmem:[#allocation2 + $0x21c] sm:$0xff]
    %v2661 = vld [vmem:[#allocation2 + $0x224] sm:$0xff]
    %v2662 = vld [vmem:[#allocation2 + $0x22c] sm:$0xff]
    %v2663 = vld [vmem:[#allocation2 + $0x234] sm:$0xff]
    %v2664 = vld [vmem:[#allocation2 + $0x23c] sm:$0xf]
    %v2665 = vld [vmem:[#allocation8] sm:$0xf]
    %v2666 = vld [vmem:[#allocation8 + $0x4] sm:$0xf]
    %v2667 = vld [vmem:[#allocation8 + $0x8] sm:$0xf]
    %v2668 = vld [vmem:[#allocation8 + $0xc] sm:$0xf]
    %v2669 = vld [vmem:[#allocation8 + $0x10] sm:$0xf]
    %v2670 = vld [vmem:[#allocation8 + $0x14] sm:$0xf]
    %v2671 = vld [vmem:[#allocation8 + $0x18] sm:$0xf]
    %v2672 = vld [vmem:[#allocation8 + $0x1c] sm:$0xf]
    %v2673 = vld [vmem:[#allocation8 + $0x20] sm:$0xf]
    %v2674 = vld [vmem:[#allocation8 + $0x24] sm:$0xf]
    %v2675 = vld [vmem:[#allocation8 + $0x28] sm:$0xf]
    %v2676 = vld [vmem:[#allocation8 + $0x2c] sm:$0xf]
    %v2677 = vld [vmem:[#allocation8 + $0x30] sm:$0xf]
    %v2678 = vld [vmem:[#allocation8 + $0x34] sm:$0xf]
    %v2679 = vld [vmem:[#allocation8 + $0x38] sm:$0xf]
    %v2680 = vld [vmem:[#allocation8 + $0x3c] sm:$0xf]
    %v2681 = vld [vmem:[#allocation8 + $0x40] sm:$0xf]
    %v2682 = vld [vmem:[#allocation8 + $0x44] sm:$0xf]
    %v2683 = vld [vmem:[#allocation8 + $0x48] sm:$0xf]
    %v2684 = vld [vmem:[#allocation8 + $0x4c] sm:$0xf]
    %v2685 = vld [vmem:[#allocation8 + $0x50] sm:$0xf]
    %v2686 = vld [vmem:[#allocation8 + $0x54] sm:$0xf]
    %v2687 = vld [vmem:[#allocation8 + $0x58] sm:$0xf]
    %v2688 = vld [vmem:[#allocation8 + $0x5c] sm:$0xf]
    %v2689 = vld [vmem:[#allocation8 + $0x60] sm:$0xf]
    %v2690 = vld [vmem:[#allocation8 + $0x64] sm:$0xf]
    %v2691 = vld [vmem:[#allocation8 + $0x68] sm:$0xf]
    %v2692 = vld [vmem:[#allocation8 + $0x6c] sm:$0xf]
    %v2693 = vld [vmem:[#allocation8 + $0x70] sm:$0xf]
    %v2694 = vld [vmem:[#allocation8 + $0x74] sm:$0xf]
    %v2695 = vld [vmem:[#allocation8 + $0x78] sm:$0xf]
    %v2696 = vld [vmem:[#allocation8 + $0x7c] sm:$0xf]
    %v2697 = vld [vmem:[#allocation8 + $0x80] sm:$0xf]
    %v2698 = vld [vmem:[#allocation8 + $0x84] sm:$0xf]
    %v2699 = vld [vmem:[#allocation8 + $0x88] sm:$0xf]
    %v2700 = vld [vmem:[#allocation8 + $0x8c] sm:$0xf]
    %v2701 = vld [vmem:[#allocation8 + $0x90] sm:$0xf]
    %v2702 = vld [vmem:[#allocation8 + $0x94] sm:$0xf]
    %v2703 = vld [vmem:[#allocation8 + $0x98] sm:$0xf]
    %v2704 = vld [vmem:[#allocation8 + $0x9c] sm:$0xf]
    %v2705 = vld [vmem:[#allocation8 + $0xa0] sm:$0xf]
    %v2706 = vld [vmem:[#allocation8 + $0xa4] sm:$0xf]
    %v2707 = vld [vmem:[#allocation8 + $0xa8] sm:$0xf]
    %v2708 = vld [vmem:[#allocation8 + $0xac] sm:$0xf]
    %v2709 = vld [vmem:[#allocation8 + $0xb0] sm:$0xf]
    %v2710 = vld [vmem:[#allocation8 + $0xb4] sm:$0xf]
    %v2711 = vld [vmem:[#allocation8 + $0xb8] sm:$0xf]
    %v2712 = vld [vmem:[#allocation8 + $0xbc] sm:$0xf]
    %v2713 = vld [vmem:[#allocation8 + $0xc0] sm:$0xf]
    %v2714 = vld [vmem:[#allocation8 + $0xc4] sm:$0xf]
    %v2715 = vld [vmem:[#allocation8 + $0xc8] sm:$0xf]
    %v2716 = vld [vmem:[#allocation8 + $0xcc] sm:$0xf]
    %v2717 = vld [vmem:[#allocation8 + $0xd0] sm:$0xf]
    %v2718 = vld [vmem:[#allocation8 + $0xd4] sm:$0xf]
    %v2719 = vld [vmem:[#allocation8 + $0xd8] sm:$0xf]
    %v2720 = vld [vmem:[#allocation8 + $0xdc] sm:$0xf]
    %v2721 = vld [vmem:[#allocation8 + $0xe0] sm:$0xf]
    %v2722 = vld [vmem:[#allocation8 + $0xe4] sm:$0xf]
    %v2723 = vld [vmem:[#allocation8 + $0xe8] sm:$0xf]
    %v2724 = vld [vmem:[#allocation8 + $0xec] sm:$0xf]
    %v2725 = vld [vmem:[#allocation8 + $0xf0] sm:$0xf]
    %v2726 = vld [vmem:[#allocation8 + $0xf4] sm:$0xf]
    %v2727 = vld [vmem:[#allocation8 + $0xf8] sm:$0xf]
    %v2728 = vld [vmem:[#allocation8 + $0xfc] sm:$0xf]
    %v2729 = vld [vmem:[#allocation8 + $0x100] sm:$0xf]
    %v2730 = vld [vmem:[#allocation8 + $0x104] sm:$0xf]
    %v2731 = vld [vmem:[#allocation8 + $0x108] sm:$0xf]
    %v2732 = vld [vmem:[#allocation8 + $0x10c] sm:$0xf]
    %v2733 = vld [vmem:[#allocation8 + $0x110] sm:$0xf]
    %v2734 = vld [vmem:[#allocation8 + $0x114] sm:$0xf]
    %v2735 = vld [vmem:[#allocation8 + $0x118] sm:$0xf]
    %v2736 = vld [vmem:[#allocation8 + $0x11c] sm:$0xf]
    %v2737 = vld [vmem:[#allocation8 + $0x120] sm:$0xf]
    %v2738 = vld [vmem:[#allocation8 + $0x124] sm:$0xf]
    %v2739 = vld [vmem:[#allocation8 + $0x128] sm:$0xf]
    %v2740 = vld [vmem:[#allocation8 + $0x12c] sm:$0xf]
    %v2741 = vld [vmem:[#allocation8 + $0x130] sm:$0xf]
    %v2742 = vld [vmem:[#allocation8 + $0x134] sm:$0xf]
    %v2743 = vld [vmem:[#allocation8 + $0x138] sm:$0xf]
    %v2744 = vld [vmem:[#allocation8 + $0x13c] sm:$0xf]
    %v2745 = vld [vmem:[#allocation8 + $0x140] sm:$0xf]
    %v2746 = vld [vmem:[#allocation8 + $0x144] sm:$0xf]
    %v2747 = vld [vmem:[#allocation8 + $0x148] sm:$0xf]
    %v2748 = vld [vmem:[#allocation8 + $0x14c] sm:$0xf]
    %v2749 = vld [vmem:[#allocation8 + $0x150] sm:$0xf]
    %v2750 = vld [vmem:[#allocation8 + $0x154] sm:$0xf]
    %v2751 = vld [vmem:[#allocation8 + $0x158] sm:$0xf]
    %v2752 = vld [vmem:[#allocation8 + $0x15c] sm:$0xf]
    %v2753 = vld [vmem:[#allocation8 + $0x160] sm:$0xf]
    %v2754 = vld [vmem:[#allocation8 + $0x164] sm:$0xf]
    %v2755 = vld [vmem:[#allocation8 + $0x168] sm:$0xf]
    %v2756 = vld [vmem:[#allocation8 + $0x16c] sm:$0xf]
    %v2757 = vld [vmem:[#allocation8 + $0x170] sm:$0xf]
    %v2758 = vld [vmem:[#allocation8 + $0x174] sm:$0xf]
    %v2759 = vld [vmem:[#allocation8 + $0x178] sm:$0xf]
    %v2760 = vld [vmem:[#allocation8 + $0x17c] sm:$0xf]
    %v2761 = vld [vmem:[#allocation8 + $0x180] sm:$0xf]
    %v2762 = vld [vmem:[#allocation8 + $0x184] sm:$0xf]
    %v2763 = vld [vmem:[#allocation8 + $0x188] sm:$0xf]
    %v2764 = vld [vmem:[#allocation8 + $0x18c] sm:$0xf]
    %v2765 = vld [vmem:[#allocation8 + $0x190] sm:$0xf]
    %v2766 = vld [vmem:[#allocation8 + $0x194] sm:$0xf]
    %v2767 = vld [vmem:[#allocation8 + $0x198] sm:$0xf]
    %v2768 = vld [vmem:[#allocation8 + $0x19c] sm:$0xf]
    %v2769 = vld [vmem:[#allocation8 + $0x1a0] sm:$0xf]
    %v2770 = vld [vmem:[#allocation8 + $0x1a4] sm:$0xf]
    %v2771 = vld [vmem:[#allocation8 + $0x1a8] sm:$0xf]
    %v2772 = vld [vmem:[#allocation8 + $0x1ac] sm:$0xf]
    %v2773 = vld [vmem:[#allocation8 + $0x1b0] sm:$0xf]
    %v2774 = vld [vmem:[#allocation8 + $0x1b4] sm:$0xf]
    %v2775 = vld [vmem:[#allocation8 + $0x1b8] sm:$0xf]
    %v2776 = vld [vmem:[#allocation8 + $0x1bc] sm:$0xf]
    %v2777 = vld [vmem:[#allocation8 + $0x1c0] sm:$0xf]
    %v2778 = vld [vmem:[#allocation8 + $0x1c4] sm:$0xf]
    %v2779 = vld [vmem:[#allocation8 + $0x1c8] sm:$0xf]
    %v2780 = vld [vmem:[#allocation8 + $0x1cc] sm:$0xf]
    %v2781 = vld [vmem:[#allocation8 + $0x1d0] sm:$0xf]
    %v2782 = vld [vmem:[#allocation8 + $0x1d4] sm:$0xf]
    %v2783 = vld [vmem:[#allocation8 + $0x1d8] sm:$0xf]
    %v2784 = vld [vmem:[#allocation8 + $0x1dc] sm:$0xf]
    %v2785 = vld [vmem:[#allocation8 + $0x1e0] sm:$0xf]
    %v2786 = vld [vmem:[#allocation8 + $0x1e4] sm:$0xf]
    %v2787 = vld [vmem:[#allocation8 + $0x1e8] sm:$0xf]
    %v2788 = vld [vmem:[#allocation8 + $0x1ec] sm:$0xf]
    %v2789 = vld [vmem:[#allocation8 + $0x1f0] sm:$0xf]
    %v2790 = vld [vmem:[#allocation8 + $0x1f4] sm:$0xf]
    %v2791 = vld [vmem:[#allocation8 + $0x1f8] sm:$0xf]
    %v2792 = vld [vmem:[#allocation8 + $0x1fc] sm:$0xf]
    %v2793 = vld [vmem:[#allocation8 + $0x200] sm:$0xf]
    %v2794 = vld [vmem:[#allocation8 + $0x204] sm:$0xf]
    %v2795 = vld [vmem:[#allocation8 + $0x208] sm:$0xf]
    %v2796 = vld [vmem:[#allocation8 + $0x20c] sm:$0xf]
    %v2797 = vld [vmem:[#allocation8 + $0x210] sm:$0xf]
    %v2798 = vld [vmem:[#allocation8 + $0x214] sm:$0xf]
    %v2799 = vld [vmem:[#allocation8 + $0x218] sm:$0xf]
    %v2800 = vld [vmem:[#allocation8 + $0x21c] sm:$0xf]
    %v2801 = vld [vmem:[#allocation8 + $0x220] sm:$0xf]
    %v2802 = vld [vmem:[#allocation8 + $0x224] sm:$0xf]
    %v2803 = vld [vmem:[#allocation8 + $0x228] sm:$0xf]
    %v2804 = vld [vmem:[#allocation8 + $0x22c] sm:$0xf]
    %v2805 = vld [vmem:[#allocation8 + $0x230] sm:$0xf]
    %v2806 = vld [vmem:[#allocation8 + $0x234] sm:$0xf]
    %v2807 = vld [vmem:[#allocation8 + $0x238] sm:$0xf]
    %v2808 = vld [vmem:[#allocation8 + $0x23c] sm:$0xf]
    %v2809 = vld [vmem:[%s4] sm:$0x1]
    %v2811 = vlaneseq
    %v2812 = vshrl.u32 %v2811, 7
    %v2813 = vsub.s32 0, %v2812
    %v2814 = vrot.slane %v2809, %v2813
    %v2896 = vunpack.c.l.b16 %v2585
    %v2897 = vunpack.c.h.b16 %v2585
    %v2898 = vunpack.c.l.b16 %v2586
    %v2899 = vunpack.c.h.b16 %v2586
    %v2900 = vunpack.c.l.b16 %v2587
    %v2901 = vunpack.c.h.b16 %v2587
    %v2902 = vunpack.c.l.b16 %v2588
    %v2903 = vunpack.c.h.b16 %v2588
    %v2904 = vunpack.c.l.b16 %v2589
    %v2905 = vunpack.c.l.b16 %v2590
    %v2906 = vunpack.c.h.b16 %v2590
    %v2907 = vunpack.c.l.b16 %v2591
    %v2908 = vunpack.c.h.b16 %v2591
    %v2909 = vunpack.c.l.b16 %v2592
    %v2910 = vunpack.c.h.b16 %v2592
    %v2911 = vunpack.c.l.b16 %v2593
    %v2912 = vunpack.c.h.b16 %v2593
    %v2913 = vunpack.c.l.b16 %v2594
    %v2914 = vunpack.c.l.b16 %v2595
    %v2915 = vunpack.c.h.b16 %v2595
    %v2916 = vunpack.c.l.b16 %v2596
    %v2917 = vunpack.c.h.b16 %v2596
    %v2918 = vunpack.c.l.b16 %v2597
    %v2919 = vunpack.c.h.b16 %v2597
    %v2920 = vunpack.c.l.b16 %v2598
    %v2921 = vunpack.c.h.b16 %v2598
    %v2922 = vunpack.c.l.b16 %v2599
    %v2923 = vunpack.c.l.b16 %v2600
    %v2924 = vunpack.c.h.b16 %v2600
    %v2925 = vunpack.c.l.b16 %v2601
    %v2926 = vunpack.c.h.b16 %v2601
    %v2927 = vunpack.c.l.b16 %v2602
    %v2928 = vunpack.c.h.b16 %v2602
    %v2929 = vunpack.c.l.b16 %v2603
    %v2930 = vunpack.c.h.b16 %v2603
    %v2931 = vunpack.c.l.b16 %v2604
    %v2932 = vunpack.c.l.b16 %v2605
    %v2933 = vunpack.c.h.b16 %v2605
    %v2934 = vunpack.c.l.b16 %v2606
    %v2935 = vunpack.c.h.b16 %v2606
    %v2936 = vunpack.c.l.b16 %v2607
    %v2937 = vunpack.c.h.b16 %v2607
    %v2938 = vunpack.c.l.b16 %v2608
    %v2939 = vunpack.c.h.b16 %v2608
    %v2940 = vunpack.c.l.b16 %v2609
    %v2941 = vunpack.c.l.b16 %v2610
    %v2942 = vunpack.c.h.b16 %v2610
    %v2943 = vunpack.c.l.b16 %v2611
    %v2944 = vunpack.c.h.b16 %v2611
    %v2945 = vunpack.c.l.b16 %v2612
    %v2946 = vunpack.c.h.b16 %v2612
    %v2947 = vunpack.c.l.b16 %v2613
    %v2948 = vunpack.c.h.b16 %v2613
    %v2949 = vunpack.c.l.b16 %v2614
    %v2950 = vunpack.c.l.b16 %v2615
    %v2951 = vunpack.c.h.b16 %v2615
    %v2952 = vunpack.c.l.b16 %v2616
    %v2953 = vunpack.c.h.b16 %v2616
    %v2954 = vunpack.c.l.b16 %v2617
    %v2955 = vunpack.c.h.b16 %v2617
    %v2956 = vunpack.c.l.b16 %v2618
    %v2957 = vunpack.c.h.b16 %v2618
    %v2958 = vunpack.c.l.b16 %v2619
    %v2959 = vunpack.c.l.b16 %v2620
    %v2960 = vunpack.c.h.b16 %v2620
    %v2961 = vunpack.c.l.b16 %v2621
    %v2962 = vunpack.c.h.b16 %v2621
    %v2963 = vunpack.c.l.b16 %v2622
    %v2964 = vunpack.c.h.b16 %v2622
    %v2965 = vunpack.c.l.b16 %v2623
    %v2966 = vunpack.c.h.b16 %v2623
    %v2967 = vunpack.c.l.b16 %v2624
    %v2968 = vunpack.c.l.b16 %v2625
    %v2969 = vunpack.c.h.b16 %v2625
    %v2970 = vunpack.c.l.b16 %v2626
    %v2971 = vunpack.c.h.b16 %v2626
    %v2972 = vunpack.c.l.b16 %v2627
    %v2973 = vunpack.c.h.b16 %v2627
    %v2974 = vunpack.c.l.b16 %v2628
    %v2975 = vunpack.c.h.b16 %v2628
    %v2976 = vunpack.c.l.b16 %v2629
    %v2977 = vunpack.c.l.b16 %v2630
    %v2978 = vunpack.c.h.b16 %v2630
    %v2979 = vunpack.c.l.b16 %v2631
    %v2980 = vunpack.c.h.b16 %v2631
    %v2981 = vunpack.c.l.b16 %v2632
    %v2982 = vunpack.c.h.b16 %v2632
    %v2983 = vunpack.c.l.b16 %v2633
    %v2984 = vunpack.c.h.b16 %v2633
    %v2985 = vunpack.c.l.b16 %v2634
    %v2986 = vunpack.c.l.b16 %v2635
    %v2987 = vunpack.c.h.b16 %v2635
    %v2988 = vunpack.c.l.b16 %v2636
    %v2989 = vunpack.c.h.b16 %v2636
    %v2990 = vunpack.c.l.b16 %v2637
    %v2991 = vunpack.c.h.b16 %v2637
    %v2992 = vunpack.c.l.b16 %v2638
    %v2993 = vunpack.c.h.b16 %v2638
    %v2994 = vunpack.c.l.b16 %v2639
    %v2995 = vunpack.c.l.b16 %v2640
    %v2996 = vunpack.c.h.b16 %v2640
    %v2997 = vunpack.c.l.b16 %v2641
    %v2998 = vunpack.c.h.b16 %v2641
    %v2999 = vunpack.c.l.b16 %v2642
    %v3000 = vunpack.c.h.b16 %v2642
    %v3001 = vunpack.c.l.b16 %v2643
    %v3002 = vunpack.c.h.b16 %v2643
    %v3003 = vunpack.c.l.b16 %v2644
    %v3004 = vunpack.c.l.b16 %v2645
    %v3005 = vunpack.c.h.b16 %v2645
    %v3006 = vunpack.c.l.b16 %v2646
    %v3007 = vunpack.c.h.b16 %v2646
    %v3008 = vunpack.c.l.b16 %v2647
    %v3009 = vunpack.c.h.b16 %v2647
    %v3010 = vunpack.c.l.b16 %v2648
    %v3011 = vunpack.c.h.b16 %v2648
    %v3012 = vunpack.c.l.b16 %v2649
    %v3013 = vunpack.c.l.b16 %v2650
    %v3014 = vunpack.c.h.b16 %v2650
    %v3015 = vunpack.c.l.b16 %v2651
    %v3016 = vunpack.c.h.b16 %v2651
    %v3017 = vunpack.c.l.b16 %v2652
    %v3018 = vunpack.c.h.b16 %v2652
    %v3019 = vunpack.c.l.b16 %v2653
    %v3020 = vunpack.c.h.b16 %v2653
    %v3021 = vunpack.c.l.b16 %v2654
    %v3022 = vunpack.c.l.b16 %v2655
    %v3023 = vunpack.c.h.b16 %v2655
    %v3024 = vunpack.c.l.b16 %v2656
    %v3025 = vunpack.c.h.b16 %v2656
    %v3026 = vunpack.c.l.b16 %v2657
    %v3027 = vunpack.c.h.b16 %v2657
    %v3028 = vunpack.c.l.b16 %v2658
    %v3029 = vunpack.c.h.b16 %v2658
    %v3030 = vunpack.c.l.b16 %v2659
    %v3031 = vunpack.c.l.b16 %v2660
    %v3032 = vunpack.c.h.b16 %v2660
    %v3033 = vunpack.c.l.b16 %v2661
    %v3034 = vunpack.c.h.b16 %v2661
    %v3035 = vunpack.c.l.b16 %v2662
    %v3036 = vunpack.c.h.b16 %v2662
    %v3037 = vunpack.c.l.b16 %v2663
    %v3038 = vunpack.c.h.b16 %v2663
    %v3039 = vunpack.c.l.b16 %v2664
    %v3040 = vpack.c.b16 %v2905, %v2896
    %v3041 = vpack.c.b16 %v2906, %v2897
    %v3042 = vpack.c.b16 %v2907, %v2898
    %v3043 = vpack.c.b16 %v2908, %v2899
    %v3044 = vpack.c.b16 %v2909, %v2900
    %v3045 = vpack.c.b16 %v2910, %v2901
    %v3046 = vpack.c.b16 %v2911, %v2902
    %v3047 = vpack.c.b16 %v2912, %v2903
    %v3048 = vpack.c.b16 %v2913, %v2904
    %v3049 = vpack.c.b16 %v2923, %v2914
    %v3050 = vpack.c.b16 %v2924, %v2915
    %v3051 = vpack.c.b16 %v2925, %v2916
    %v3052 = vpack.c.b16 %v2926, %v2917
    %v3053 = vpack.c.b16 %v2927, %v2918
    %v3054 = vpack.c.b16 %v2928, %v2919
    %v3055 = vpack.c.b16 %v2929, %v2920
    %v3056 = vpack.c.b16 %v2930, %v2921
    %v3057 = vpack.c.b16 %v2931, %v2922
    %v3058 = vpack.c.b16 %v2941, %v2932
    %v3059 = vpack.c.b16 %v2942, %v2933
    %v3060 = vpack.c.b16 %v2943, %v2934
    %v3061 = vpack.c.b16 %v2944, %v2935
    %v3062 = vpack.c.b16 %v2945, %v2936
    %v3063 = vpack.c.b16 %v2946, %v2937
    %v3064 = vpack.c.b16 %v2947, %v2938
    %v3065 = vpack.c.b16 %v2948, %v2939
    %v3066 = vpack.c.b16 %v2949, %v2940
    %v3067 = vpack.c.b16 %v2959, %v2950
    %v3068 = vpack.c.b16 %v2960, %v2951
    %v3069 = vpack.c.b16 %v2961, %v2952
    %v3070 = vpack.c.b16 %v2962, %v2953
    %v3071 = vpack.c.b16 %v2963, %v2954
    %v3072 = vpack.c.b16 %v2964, %v2955
    %v3073 = vpack.c.b16 %v2965, %v2956
    %v3074 = vpack.c.b16 %v2966, %v2957
    %v3075 = vpack.c.b16 %v2967, %v2958
    %v3076 = vpack.c.b16 %v2977, %v2968
    %v3077 = vpack.c.b16 %v2978, %v2969
    %v3078 = vpack.c.b16 %v2979, %v2970
    %v3079 = vpack.c.b16 %v2980, %v2971
    %v3080 = vpack.c.b16 %v2981, %v2972
    %v3081 = vpack.c.b16 %v2982, %v2973
    %v3082 = vpack.c.b16 %v2983, %v2974
    %v3083 = vpack.c.b16 %v2984, %v2975
    %v3084 = vpack.c.b16 %v2985, %v2976
    %v3085 = vpack.c.b16 %v2995, %v2986
    %v3086 = vpack.c.b16 %v2996, %v2987
    %v3087 = vpack.c.b16 %v2997, %v2988
    %v3088 = vpack.c.b16 %v2998, %v2989
    %v3089 = vpack.c.b16 %v2999, %v2990
    %v3090 = vpack.c.b16 %v3000, %v2991
    %v3091 = vpack.c.b16 %v3001, %v2992
    %v3092 = vpack.c.b16 %v3002, %v2993
    %v3093 = vpack.c.b16 %v3003, %v2994
    %v3094 = vpack.c.b16 %v3013, %v3004
    %v3095 = vpack.c.b16 %v3014, %v3005
    %v3096 = vpack.c.b16 %v3015, %v3006
    %v3097 = vpack.c.b16 %v3016, %v3007
    %v3098 = vpack.c.b16 %v3017, %v3008
    %v3099 = vpack.c.b16 %v3018, %v3009
    %v3100 = vpack.c.b16 %v3019, %v3010
    %v3101 = vpack.c.b16 %v3020, %v3011
    %v3102 = vpack.c.b16 %v3021, %v3012
    %v3103 = vpack.c.b16 %v3031, %v3022
    %v3104 = vpack.c.b16 %v3032, %v3023
    %v3105 = vpack.c.b16 %v3033, %v3024
    %v3106 = vpack.c.b16 %v3034, %v3025
    %v3107 = vpack.c.b16 %v3035, %v3026
    %v3108 = vpack.c.b16 %v3036, %v3027
    %v3109 = vpack.c.b16 %v3037, %v3028
    %v3110 = vpack.c.b16 %v3038, %v3029
    %v3111 = vpack.c.b16 %v3039, %v3030
    %v3328 = vunpack.c.l.b16 %v2665
    %v3329 = vunpack.c.l.b16 %v2666
    %v3330 = vunpack.c.l.b16 %v2667
    %v3331 = vunpack.c.l.b16 %v2668
    %v3332 = vunpack.c.l.b16 %v2669
    %v3333 = vunpack.c.l.b16 %v2670
    %v3334 = vunpack.c.l.b16 %v2671
    %v3335 = vunpack.c.l.b16 %v2672
    %v3336 = vunpack.c.l.b16 %v2673
    %v3337 = vunpack.c.l.b16 %v2674
    %v3338 = vunpack.c.l.b16 %v2675
    %v3339 = vunpack.c.l.b16 %v2676
    %v3340 = vunpack.c.l.b16 %v2677
    %v3341 = vunpack.c.l.b16 %v2678
    %v3342 = vunpack.c.l.b16 %v2679
    %v3343 = vunpack.c.l.b16 %v2680
    %v3344 = vunpack.c.l.b16 %v2681
    %v3345 = vunpack.c.l.b16 %v2682
    %v3346 = vunpack.c.l.b16 %v2683
    %v3347 = vunpack.c.l.b16 %v2684
    %v3348 = vunpack.c.l.b16 %v2685
    %v3349 = vunpack.c.l.b16 %v2686
    %v3350 = vunpack.c.l.b16 %v2687
    %v3351 = vunpack.c.l.b16 %v2688
    %v3352 = vunpack.c.l.b16 %v2689
    %v3353 = vunpack.c.l.b16 %v2690
    %v3354 = vunpack.c.l.b16 %v2691
    %v3355 = vunpack.c.l.b16 %v2692
    %v3356 = vunpack.c.l.b16 %v2693
    %v3357 = vunpack.c.l.b16 %v2694
    %v3358 = vunpack.c.l.b16 %v2695
    %v3359 = vunpack.c.l.b16 %v2696
    %v3360 = vunpack.c.l.b16 %v2697
    %v3361 = vunpack.c.l.b16 %v2698
    %v3362 = vunpack.c.l.b16 %v2699
    %v3363 = vunpack.c.l.b16 %v2700
    %v3364 = vunpack.c.l.b16 %v2701
    %v3365 = vunpack.c.l.b16 %v2702
    %v3366 = vunpack.c.l.b16 %v2703
    %v3367 = vunpack.c.l.b16 %v2704
    %v3368 = vunpack.c.l.b16 %v2705
    %v3369 = vunpack.c.l.b16 %v2706
    %v3370 = vunpack.c.l.b16 %v2707
    %v3371 = vunpack.c.l.b16 %v2708
    %v3372 = vunpack.c.l.b16 %v2709
    %v3373 = vunpack.c.l.b16 %v2710
    %v3374 = vunpack.c.l.b16 %v2711
    %v3375 = vunpack.c.l.b16 %v2712
    %v3376 = vunpack.c.l.b16 %v2713
    %v3377 = vunpack.c.l.b16 %v2714
    %v3378 = vunpack.c.l.b16 %v2715
    %v3379 = vunpack.c.l.b16 %v2716
    %v3380 = vunpack.c.l.b16 %v2717
    %v3381 = vunpack.c.l.b16 %v2718
    %v3382 = vunpack.c.l.b16 %v2719
    %v3383 = vunpack.c.l.b16 %v2720
    %v3384 = vunpack.c.l.b16 %v2721
    %v3385 = vunpack.c.l.b16 %v2722
    %v3386 = vunpack.c.l.b16 %v2723
    %v3387 = vunpack.c.l.b16 %v2724
    %v3388 = vunpack.c.l.b16 %v2725
    %v3389 = vunpack.c.l.b16 %v2726
    %v3390 = vunpack.c.l.b16 %v2727
    %v3391 = vunpack.c.l.b16 %v2728
    %v3392 = vunpack.c.l.b16 %v2729
    %v3393 = vunpack.c.l.b16 %v2730
    %v3394 = vunpack.c.l.b16 %v2731
    %v3395 = vunpack.c.l.b16 %v2732
    %v3396 = vunpack.c.l.b16 %v2733
    %v3397 = vunpack.c.l.b16 %v2734
    %v3398 = vunpack.c.l.b16 %v2735
    %v3399 = vunpack.c.l.b16 %v2736
    %v3400 = vunpack.c.l.b16 %v2737
    %v3401 = vunpack.c.l.b16 %v2738
    %v3402 = vunpack.c.l.b16 %v2739
    %v3403 = vunpack.c.l.b16 %v2740
    %v3404 = vunpack.c.l.b16 %v2741
    %v3405 = vunpack.c.l.b16 %v2742
    %v3406 = vunpack.c.l.b16 %v2743
    %v3407 = vunpack.c.l.b16 %v2744
    %v3408 = vunpack.c.l.b16 %v2745
    %v3409 = vunpack.c.l.b16 %v2746
    %v3410 = vunpack.c.l.b16 %v2747
    %v3411 = vunpack.c.l.b16 %v2748
    %v3412 = vunpack.c.l.b16 %v2749
    %v3413 = vunpack.c.l.b16 %v2750
    %v3414 = vunpack.c.l.b16 %v2751
    %v3415 = vunpack.c.l.b16 %v2752
    %v3416 = vunpack.c.l.b16 %v2753
    %v3417 = vunpack.c.l.b16 %v2754
    %v3418 = vunpack.c.l.b16 %v2755
    %v3419 = vunpack.c.l.b16 %v2756
    %v3420 = vunpack.c.l.b16 %v2757
    %v3421 = vunpack.c.l.b16 %v2758
    %v3422 = vunpack.c.l.b16 %v2759
    %v3423 = vunpack.c.l.b16 %v2760
    %v3424 = vunpack.c.l.b16 %v2761
    %v3425 = vunpack.c.l.b16 %v2762
    %v3426 = vunpack.c.l.b16 %v2763
    %v3427 = vunpack.c.l.b16 %v2764
    %v3428 = vunpack.c.l.b16 %v2765
    %v3429 = vunpack.c.l.b16 %v2766
    %v3430 = vunpack.c.l.b16 %v2767
    %v3431 = vunpack.c.l.b16 %v2768
    %v3432 = vunpack.c.l.b16 %v2769
    %v3433 = vunpack.c.l.b16 %v2770
    %v3434 = vunpack.c.l.b16 %v2771
    %v3435 = vunpack.c.l.b16 %v2772
    %v3436 = vunpack.c.l.b16 %v2773
    %v3437 = vunpack.c.l.b16 %v2774
    %v3438 = vunpack.c.l.b16 %v2775
    %v3439 = vunpack.c.l.b16 %v2776
    %v3440 = vunpack.c.l.b16 %v2777
    %v3441 = vunpack.c.l.b16 %v2778
    %v3442 = vunpack.c.l.b16 %v2779
    %v3443 = vunpack.c.l.b16 %v2780
    %v3444 = vunpack.c.l.b16 %v2781
    %v3445 = vunpack.c.l.b16 %v2782
    %v3446 = vunpack.c.l.b16 %v2783
    %v3447 = vunpack.c.l.b16 %v2784
    %v3448 = vunpack.c.l.b16 %v2785
    %v3449 = vunpack.c.l.b16 %v2786
    %v3450 = vunpack.c.l.b16 %v2787
    %v3451 = vunpack.c.l.b16 %v2788
    %v3452 = vunpack.c.l.b16 %v2789
    %v3453 = vunpack.c.l.b16 %v2790
    %v3454 = vunpack.c.l.b16 %v2791
    %v3455 = vunpack.c.l.b16 %v2792
    %v3456 = vunpack.c.l.b16 %v2793
    %v3457 = vunpack.c.l.b16 %v2794
    %v3458 = vunpack.c.l.b16 %v2795
    %v3459 = vunpack.c.l.b16 %v2796
    %v3460 = vunpack.c.l.b16 %v2797
    %v3461 = vunpack.c.l.b16 %v2798
    %v3462 = vunpack.c.l.b16 %v2799
    %v3463 = vunpack.c.l.b16 %v2800
    %v3464 = vunpack.c.l.b16 %v2801
    %v3465 = vunpack.c.l.b16 %v2802
    %v3466 = vunpack.c.l.b16 %v2803
    %v3467 = vunpack.c.l.b16 %v2804
    %v3468 = vunpack.c.l.b16 %v2805
    %v3469 = vunpack.c.l.b16 %v2806
    %v3470 = vunpack.c.l.b16 %v2807
    %v3471 = vunpack.c.l.b16 %v2808
    %v3472 = vpack.c.b16 %v3329, %v3328
    %v3473 = vpack.c.b16 %v3331, %v3330
    %v3474 = vpack.c.b16 %v3333, %v3332
    %v3475 = vpack.c.b16 %v3335, %v3334
    %v3476 = vpack.c.b16 %v3337, %v3336
    %v3477 = vpack.c.b16 %v3339, %v3338
    %v3478 = vpack.c.b16 %v3341, %v3340
    %v3479 = vpack.c.b16 %v3343, %v3342
    %v3480 = vpack.c.b16 %v3345, %v3344
    %v3481 = vpack.c.b16 %v3347, %v3346
    %v3482 = vpack.c.b16 %v3349, %v3348
    %v3483 = vpack.c.b16 %v3351, %v3350
    %v3484 = vpack.c.b16 %v3353, %v3352
    %v3485 = vpack.c.b16 %v3355, %v3354
    %v3486 = vpack.c.b16 %v3357, %v3356
    %v3487 = vpack.c.b16 %v3359, %v3358
    %v3488 = vpack.c.b16 %v3361, %v3360
    %v3489 = vpack.c.b16 %v3363, %v3362
    %v3490 = vpack.c.b16 %v3365, %v3364
    %v3491 = vpack.c.b16 %v3367, %v3366
    %v3492 = vpack.c.b16 %v3369, %v3368
    %v3493 = vpack.c.b16 %v3371, %v3370
    %v3494 = vpack.c.b16 %v3373, %v3372
    %v3495 = vpack.c.b16 %v3375, %v3374
    %v3496 = vpack.c.b16 %v3377, %v3376
    %v3497 = vpack.c.b16 %v3379, %v3378
    %v3498 = vpack.c.b16 %v3381, %v3380
    %v3499 = vpack.c.b16 %v3383, %v3382
    %v3500 = vpack.c.b16 %v3385, %v3384
    %v3501 = vpack.c.b16 %v3387, %v3386
    %v3502 = vpack.c.b16 %v3389, %v3388
    %v3503 = vpack.c.b16 %v3391, %v3390
    %v3504 = vpack.c.b16 %v3393, %v3392
    %v3505 = vpack.c.b16 %v3395, %v3394
    %v3506 = vpack.c.b16 %v3397, %v3396
    %v3507 = vpack.c.b16 %v3399, %v3398
    %v3508 = vpack.c.b16 %v3401, %v3400
    %v3509 = vpack.c.b16 %v3403, %v3402
    %v3510 = vpack.c.b16 %v3405, %v3404
    %v3511 = vpack.c.b16 %v3407, %v3406
    %v3512 = vpack.c.b16 %v3409, %v3408
    %v3513 = vpack.c.b16 %v3411, %v3410
    %v3514 = vpack.c.b16 %v3413, %v3412
    %v3515 = vpack.c.b16 %v3415, %v3414
    %v3516 = vpack.c.b16 %v3417, %v3416
    %v3517 = vpack.c.b16 %v3419, %v3418
    %v3518 = vpack.c.b16 %v3421, %v3420
    %v3519 = vpack.c.b16 %v3423, %v3422
    %v3520 = vpack.c.b16 %v3425, %v3424
    %v3521 = vpack.c.b16 %v3427, %v3426
    %v3522 = vpack.c.b16 %v3429, %v3428
    %v3523 = vpack.c.b16 %v3431, %v3430
    %v3524 = vpack.c.b16 %v3433, %v3432
    %v3525 = vpack.c.b16 %v3435, %v3434
    %v3526 = vpack.c.b16 %v3437, %v3436
    %v3527 = vpack.c.b16 %v3439, %v3438
    %v3528 = vpack.c.b16 %v3441, %v3440
    %v3529 = vpack.c.b16 %v3443, %v3442
    %v3530 = vpack.c.b16 %v3445, %v3444
    %v3531 = vpack.c.b16 %v3447, %v3446
    %v3532 = vpack.c.b16 %v3449, %v3448
    %v3533 = vpack.c.b16 %v3451, %v3450
    %v3534 = vpack.c.b16 %v3453, %v3452
    %v3535 = vpack.c.b16 %v3455, %v3454
    %v3536 = vpack.c.b16 %v3457, %v3456
    %v3537 = vpack.c.b16 %v3459, %v3458
    %v3538 = vpack.c.b16 %v3461, %v3460
    %v3539 = vpack.c.b16 %v3463, %v3462
    %v3540 = vpack.c.b16 %v3465, %v3464
    %v3541 = vpack.c.b16 %v3467, %v3466
    %v3542 = vpack.c.b16 %v3469, %v3468
    %v3543 = vpack.c.b16 %v3471, %v3470
    %3616 = vmatprep.subr.bf16.mxu0 0
    %3617 = vmatpush1.bf16.msra.mxu0 %v3472
    %3618 = vmatprep.subr.bf16.mxu0 0
    %3619 = vmatpush1.bf16.msra.mxu0 %v3473
    %3620 = vmatprep.subr.bf16.mxu0 0
    %3621 = vmatpush1.bf16.msra.mxu0 %v3474
    %3622 = vmatprep.subr.bf16.mxu0 0
    %3623 = vmatpush1.bf16.msra.mxu0 %v3475
    %3624 = vmatprep.subr.bf16.mxu0 0
    %3625 = vmatpush1.bf16.msra.mxu0 %v3476
    %3626 = vmatprep.subr.bf16.mxu0 0
    %3627 = vmatpush1.bf16.msra.mxu0 %v3477
    %3628 = vmatprep.subr.bf16.mxu0 0
    %3629 = vmatpush1.bf16.msra.mxu0 %v3478
    %3630 = vmatprep.subr.bf16.mxu0 0
    %3631 = vmatpush1.bf16.msra.mxu0 %v3479
    %3632 = vmatprep.subr.bf16.mxu0 0
    %3633 = vmatpush1.bf16.msra.mxu0 %v3480
    %3634 = vmatprep.subr.bf16.mxu0 0
    %3635 = vmatpush1.bf16.msra.mxu0 %v3481
    %3636 = vmatprep.subr.bf16.mxu0 0
    %3637 = vmatpush1.bf16.msra.mxu0 %v3482
    %3638 = vmatprep.subr.bf16.mxu0 0
    %3639 = vmatpush1.bf16.msra.mxu0 %v3483
    %3640 = vmatprep.subr.bf16.mxu0 0
    %3641 = vmatpush1.bf16.msra.mxu0 %v3484
    %3642 = vmatprep.subr.bf16.mxu0 0
    %3643 = vmatpush1.bf16.msra.mxu0 %v3485
    %3644 = vmatprep.subr.bf16.mxu0 0
    %3645 = vmatpush1.bf16.msra.mxu0 %v3486
    %3646 = vmatprep.subr.bf16.mxu0 0
    %3647 = vmatpush1.bf16.msra.mxu0 %v3487
    %3648 = vmatprep.mubr.bf16.mxu0 %v3041
    %3649 = vmatmul.mubr.bf16.gmra.mrb[0].mxu0 %v3040
    %v3650 = vpop.f32.mrb[0].mxu0
    %v3651 = vadd.f32 %v2814, %v3650
    %v3652 = vpop.f32.mrb[0].mxu0
    %v3653 = vpop.f32.mrb[0].mxu0
    %v3654 = vadd.f32 %v2814, %v3653
    %v3655 = vpop.f32.mrb[0].mxu0
    %3656 = vmatprep.mubr.bf16.mxu0 %v3050
    %3657 = vmatmul.mubr.bf16.gmra.mrb[0].mxu0 %v3049
    %v3658 = vpop.f32.mrb[0].mxu0
    %v3659 = vadd.f32 %v2814, %v3658
    %v3660 = vpop.f32.mrb[0].mxu0
    %v3661 = vpop.f32.mrb[0].mxu0
    %v3662 = vadd.f32 %v2814, %v3661
    %v3663 = vpop.f32.mrb[0].mxu0
    %3664 = vmatprep.mubr.bf16.mxu0 %v3059
    %3665 = vmatmul.mubr.bf16.gmra.mrb[0].mxu0 %v3058
    %v3666 = vpop.f32.mrb[0].mxu0
    %v3667 = vadd.f32 %v2814, %v3666
    %v3668 = vpop.f32.mrb[0].mxu0
    %v3669 = vpop.f32.mrb[0].mxu0
    %v3670 = vadd.f32 %v2814, %v3669
    %v3671 = vpop.f32.mrb[0].mxu0
    %3672 = vmatprep.mubr.bf16.mxu0 %v3068
    %3673 = vmatmul.mubr.bf16.gmra.mrb[0].mxu0 %v3067
    %v3674 = vpop.f32.mrb[0].mxu0
    %v3675 = vadd.f32 %v2814, %v3674
    %v3676 = vpop.f32.mrb[0].mxu0
    %v3677 = vpop.f32.mrb[0].mxu0
    %v3678 = vadd.f32 %v2814, %v3677
    %v3679 = vpop.f32.mrb[0].mxu0
    %3680 = vmatprep.mubr.bf16.mxu0 %v3077
    %3681 = vmatmul.mubr.bf16.gmra.mrb[0].mxu0 %v3076
    %v3682 = vpop.f32.mrb[0].mxu0
    %v3683 = vadd.f32 %v2814, %v3682
    %v3684 = vpop.f32.mrb[0].mxu0
    %v3685 = vpop.f32.mrb[0].mxu0
    %v3686 = vadd.f32 %v2814, %v3685
    %v3687 = vpop.f32.mrb[0].mxu0
    %3688 = vmatprep.mubr.bf16.mxu0 %v3086
    %3689 = vmatmul.mubr.bf16.gmra.mrb[0].mxu0 %v3085
    %v3690 = vpop.f32.mrb[0].mxu0
    %v3691 = vadd.f32 %v2814, %v3690
    %v3692 = vpop.f32.mrb[0].mxu0
    %v3693 = vpop.f32.mrb[0].mxu0
    %v3694 = vadd.f32 %v2814, %v3693
    %v3695 = vpop.f32.mrb[0].mxu0
    %3696 = vmatprep.mubr.bf16.mxu0 %v3095
    %3697 = vmatmul.mubr.bf16.gmra.mrb[0].mxu0 %v3094
    %v3698 = vpop.f32.mrb[0].mxu0
    %v3699 = vadd.f32 %v2814, %v3698
    %v3700 = vpop.f32.mrb[0].mxu0
    %v3701 = vpop.f32.mrb[0].mxu0
    %v3702 = vadd.f32 %v2814, %v3701
    %v3703 = vpop.f32.mrb[0].mxu0
    %3704 = vmatprep.mubr.bf16.mxu0 %v3104
    %3705 = vmatmul.mubr.bf16.gmra.mrb[0].mxu0 %v3103
    %v3706 = vpop.f32.mrb[0].mxu0
    %v3707 = vadd.f32 %v2814, %v3706
    %v3708 = vpop.f32.mrb[0].mxu0
    %v3709 = vpop.f32.mrb[0].mxu0
    %v3710 = vadd.f32 %v2814, %v3709
    %v3711 = vpop.f32.mrb[0].mxu0
    %3712 = vdwg.mxu0
    %3713 = vmatprep.subr.bf16.mxu0 0
    %3714 = vmatpush1.bf16.msra.mxu0 %v3488
    %3715 = vmatprep.subr.bf16.mxu0 0
    %3716 = vmatpush1.bf16.msra.mxu0 %v3489
    %3717 = vmatprep.subr.bf16.mxu0 0
    %3718 = vmatpush1.bf16.msra.mxu0 %v3490
    %3719 = vmatprep.subr.bf16.mxu0 0
    %3720 = vmatpush1.bf16.msra.mxu0 %v3491
    %3721 = vmatprep.subr.bf16.mxu0 0
    %3722 = vmatpush1.bf16.msra.mxu0 %v3492
    %3723 = vmatprep.subr.bf16.mxu0 0
    %3724 = vmatpush1.bf16.msra.mxu0 %v3493
    %3725 = vmatprep.subr.bf16.mxu0 0
    %3726 = vmatpush1.bf16.msra.mxu0 %v3494
    %3727 = vmatprep.subr.bf16.mxu0 0
    %3728 = vmatpush1.bf16.msra.mxu0 %v3495
    %3729 = vmatprep.subr.bf16.mxu0 0
    %3730 = vmatpush1.bf16.msra.mxu0 %v3496
    %3731 = vmatprep.subr.bf16.mxu0 0
    %3732 = vmatpush1.bf16.msra.mxu0 %v3497
    %3733 = vmatprep.subr.bf16.mxu0 0
    %3734 = vmatpush1.bf16.msra.mxu0 %v3498
    %3735 = vmatprep.subr.bf16.mxu0 0
    %3736 = vmatpush1.bf16.msra.mxu0 %v3499
    %3737 = vmatprep.subr.bf16.mxu0 0
    %3738 = vmatpush1.bf16.msra.mxu0 %v3500
    %3739 = vmatprep.subr.bf16.mxu0 0
    %3740 = vmatpush1.bf16.msra.mxu0 %v3501
    %3741 = vmatprep.subr.bf16.mxu0 0
    %3742 = vmatpush1.bf16.msra.mxu0 %v3502
    %3743 = vmatprep.subr.bf16.mxu0 0
    %3744 = vmatpush1.bf16.msra.mxu0 %v3503
    %3745 = vmatprep.mubr.bf16.mxu0 %v3043
    %3746 = vmatmul.mubr.bf16.gmra.mrb[0].mxu0 %v3042
    %v3747 = vpop.f32.mrb[0].mxu0
    %v3748 = vadd.f32 %v3651, %v3747
    %v3749 = vpop.f32.mrb[0].mxu0
    %v3750 = vpop.f32.mrb[0].mxu0
    %v3751 = vadd.f32 %v3654, %v3750
    %v3752 = vpop.f32.mrb[0].mxu0
    %3753 = vmatprep.mubr.bf16.mxu0 %v3052
    %3754 = vmatmul.mubr.bf16.gmra.mrb[0].mxu0 %v3051
    %v3755 = vpop.f32.mrb[0].mxu0
    %v3756 = vadd.f32 %v3659, %v3755
    %v3757 = vpop.f32.mrb[0].mxu0
    %v3758 = vpop.f32.mrb[0].mxu0
    %v3759 = vadd.f32 %v3662, %v3758
    %v3760 = vpop.f32.mrb[0].mxu0
    %3761 = vmatprep.mubr.bf16.mxu0 %v3061
    %3762 = vmatmul.mubr.bf16.gmra.mrb[0].mxu0 %v3060
    %v3763 = vpop.f32.mrb[0].mxu0
    %v3764 = vadd.f32 %v3667, %v3763
    %v3765 = vpop.f32.mrb[0].mxu0
    %v3766 = vpop.f32.mrb[0].mxu0
    %v3767 = vadd.f32 %v3670, %v3766
    %v3768 = vpop.f32.mrb[0].mxu0
    %3769 = vmatprep.mubr.bf16.mxu0 %v3070
    %3770 = vmatmul.mubr.bf16.gmra.mrb[0].mxu0 %v3069
    %v3771 = vpop.f32.mrb[0].mxu0
    %v3772 = vadd.f32 %v3675, %v3771
    %v3773 = vpop.f32.mrb[0].mxu0
    %v3774 = vpop.f32.mrb[0].mxu0
    %v3775 = vadd.f32 %v3678, %v3774
    %v3776 = vpop.f32.mrb[0].mxu0
    %3777 = vmatprep.mubr.bf16.mxu0 %v3079
    %3778 = vmatmul.mubr.bf16.gmra.mrb[0].mxu0 %v3078
    %v3779 = vpop.f32.mrb[0].mxu0
    %v3780 = vadd.f32 %v3683, %v3779
    %v3781 = vpop.f32.mrb[0].mxu0
    %v3782 = vpop.f32.mrb[0].mxu0
    %v3783 = vadd.f32 %v3686, %v3782
    %v3784 = vpop.f32.mrb[0].mxu0
    %3785 = vmatprep.mubr.bf16.mxu0 %v3088
    %3786 = vmatmul.mubr.bf16.gmra.mrb[0].mxu0 %v3087
    %v3787 = vpop.f32.mrb[0].mxu0
    %v3788 = vadd.f32 %v3691, %v3787
    %v3789 = vpop.f32.mrb[0].mxu0
    %v3790 = vpop.f32.mrb[0].mxu0
    %v3791 = vadd.f32 %v3694, %v3790
    %v3792 = vpop.f32.mrb[0].mxu0
    %3793 = vmatprep.mubr.bf16.mxu0 %v3097
    %3794 = vmatmul.mubr.bf16.gmra.mrb[0].mxu0 %v3096
    %v3795 = vpop.f32.mrb[0].mxu0
    %v3796 = vadd.f32 %v3699, %v3795
    %v3797 = vpop.f32.mrb[0].mxu0
    %v3798 = vpop.f32.mrb[0].mxu0
    %v3799 = vadd.f32 %v3702, %v3798
    %v3800 = vpop.f32.mrb[0].mxu0
    %3801 = vmatprep.mubr.bf16.mxu0 %v3106
    %3802 = vmatmul.mubr.bf16.gmra.mrb[0].mxu0 %v3105
    %v3803 = vpop.f32.mrb[0].mxu0
    %v3804 = vadd.f32 %v3707, %v3803
    %v3805 = vpop.f32.mrb[0].mxu0
    %v3806 = vpop.f32.mrb[0].mxu0
    %v3807 = vadd.f32 %v3710, %v3806
    %v3808 = vpop.f32.mrb[0].mxu0
    %3809 = vdwg.mxu0
    %3810 = vmatprep.subr.bf16.mxu0 0
    %3811 = vmatpush1.bf16.msra.mxu0 %v3504
    %3812 = vmatprep.subr.bf16.mxu0 0
    %3813 = vmatpush1.bf16.msra.mxu0 %v3505
    %3814 = vmatprep.subr.bf16.mxu0 0
    %3815 = vmatpush1.bf16.msra.mxu0 %v3506
    %3816 = vmatprep.subr.bf16.mxu0 0
    %3817 = vmatpush1.bf16.msra.mxu0 %v3507
    %3818 = vmatprep.subr.bf16.mxu0 0
    %3819 = vmatpush1.bf16.msra.mxu0 %v3508
    %3820 = vmatprep.subr.bf16.mxu0 0
    %3821 = vmatpush1.bf16.msra.mxu0 %v3509
    %3822 = vmatprep.subr.bf16.mxu0 0
    %3823 = vmatpush1.bf16.msra.mxu0 %v3510
    %3824 = vmatprep.subr.bf16.mxu0 0
    %3825 = vmatpush1.bf16.msra.mxu0 %v3511
    %3826 = vmatprep.subr.bf16.mxu0 0
    %3827 = vmatpush1.bf16.msra.mxu0 %v3512
    %3828 = vmatprep.subr.bf16.mxu0 0
    %3829 = vmatpush1.bf16.msra.mxu0 %v3513
    %3830 = vmatprep.subr.bf16.mxu0 0
    %3831 = vmatpush1.bf16.msra.mxu0 %v3514
    %3832 = vmatprep.subr.bf16.mxu0 0
    %3833 = vmatpush1.bf16.msra.mxu0 %v3515
    %3834 = vmatprep.subr.bf16.mxu0 0
    %3835 = vmatpush1.bf16.msra.mxu0 %v3516
    %3836 = vmatprep.subr.bf16.mxu0 0
    %3837 = vmatpush1.bf16.msra.mxu0 %v3517
    %3838 = vmatprep.subr.bf16.mxu0 0
    %3839 = vmatpush1.bf16.msra.mxu0 %v3518
    %3840 = vmatprep.subr.bf16.mxu0 0
    %3841 = vmatpush1.bf16.msra.mxu0 %v3519
    %3842 = vmatprep.mubr.bf16.mxu0 %v3045
    %3843 = vmatmul.mubr.bf16.gmra.mrb[0].mxu0 %v3044
    %v3844 = vpop.f32.mrb[0].mxu0
    %v3845 = vadd.f32 %v3748, %v3844
    %v3846 = vpop.f32.mrb[0].mxu0
    %v3847 = vpop.f32.mrb[0].mxu0
    %v3848 = vadd.f32 %v3751, %v3847
    %v3849 = vpop.f32.mrb[0].mxu0
    %3850 = vmatprep.mubr.bf16.mxu0 %v3054
    %3851 = vmatmul.mubr.bf16.gmra.mrb[0].mxu0 %v3053
    %v3852 = vpop.f32.mrb[0].mxu0
    %v3853 = vadd.f32 %v3756, %v3852
    %v3854 = vpop.f32.mrb[0].mxu0
    %v3855 = vpop.f32.mrb[0].mxu0
    %v3856 = vadd.f32 %v3759, %v3855
    %v3857 = vpop.f32.mrb[0].mxu0
    %3858 = vmatprep.mubr.bf16.mxu0 %v3063
    %3859 = vmatmul.mubr.bf16.gmra.mrb[0].mxu0 %v3062
    %v3860 = vpop.f32.mrb[0].mxu0
    %v3861 = vadd.f32 %v3764, %v3860
    %v3862 = vpop.f32.mrb[0].mxu0
    %v3863 = vpop.f32.mrb[0].mxu0
    %v3864 = vadd.f32 %v3767, %v3863
    %v3865 = vpop.f32.mrb[0].mxu0
    %3866 = vmatprep.mubr.bf16.mxu0 %v3072
    %3867 = vmatmul.mubr.bf16.gmra.mrb[0].mxu0 %v3071
    %v3868 = vpop.f32.mrb[0].mxu0
    %v3869 = vadd.f32 %v3772, %v3868
    %v3870 = vpop.f32.mrb[0].mxu0
    %v3871 = vpop.f32.mrb[0].mxu0
    %v3872 = vadd.f32 %v3775, %v3871
    %v3873 = vpop.f32.mrb[0].mxu0
    %3874 = vmatprep.mubr.bf16.mxu0 %v3081
    %3875 = vmatmul.mubr.bf16.gmra.mrb[0].mxu0 %v3080
    %v3876 = vpop.f32.mrb[0].mxu0
    %v3877 = vadd.f32 %v3780, %v3876
    %v3878 = vpop.f32.mrb[0].mxu0
    %v3879 = vpop.f32.mrb[0].mxu0
    %v3880 = vadd.f32 %v3783, %v3879
    %v3881 = vpop.f32.mrb[0].mxu0
    %3882 = vmatprep.mubr.bf16.mxu0 %v3090
    %3883 = vmatmul.mubr.bf16.gmra.mrb[0].mxu0 %v3089
    %v3884 = vpop.f32.mrb[0].mxu0
    %v3885 = vadd.f32 %v3788, %v3884
    %v3886 = vpop.f32.mrb[0].mxu0
    %v3887 = vpop.f32.mrb[0].mxu0
    %v3888 = vadd.f32 %v3791, %v3887
    %v3889 = vpop.f32.mrb[0].mxu0
    %3890 = vmatprep.mubr.bf16.mxu0 %v3099
    %3891 = vmatmul.mubr.bf16.gmra.mrb[0].mxu0 %v3098
    %v3892 = vpop.f32.mrb[0].mxu0
    %v3893 = vadd.f32 %v3796, %v3892
    %v3894 = vpop.f32.mrb[0].mxu0
    %v3895 = vpop.f32.mrb[0].mxu0
    %v3896 = vadd.f32 %v3799, %v3895
    %v3897 = vpop.f32.mrb[0].mxu0
    %3898 = vmatprep.mubr.bf16.mxu0 %v3108
    %3899 = vmatmul.mubr.bf16.gmra.mrb[0].mxu0 %v3107
    %v3900 = vpop.f32.mrb[0].mxu0
    %v3901 = vadd.f32 %v3804, %v3900
    %v3902 = vpop.f32.mrb[0].mxu0
    %v3903 = vpop.f32.mrb[0].mxu0
    %v3904 = vadd.f32 %v3807, %v3903
    %v3905 = vpop.f32.mrb[0].mxu0
    %3906 = vdwg.mxu0
    %3907 = vmatprep.subr.bf16.mxu0 0
    %3908 = vmatpush1.bf16.msra.mxu0 %v3520
    %3909 = vmatprep.subr.bf16.mxu0 0
    %3910 = vmatpush1.bf16.msra.mxu0 %v3521
    %3911 = vmatprep.subr.bf16.mxu0 0
    %3912 = vmatpush1.bf16.msra.mxu0 %v3522
    %3913 = vmatprep.subr.bf16.mxu0 0
    %3914 = vmatpush1.bf16.msra.mxu0 %v3523
    %3915 = vmatprep.subr.bf16.mxu0 0
    %3916 = vmatpush1.bf16.msra.mxu0 %v3524
    %3917 = vmatprep.subr.bf16.mxu0 0
    %3918 = vmatpush1.bf16.msra.mxu0 %v3525
    %3919 = vmatprep.subr.bf16.mxu0 0
    %3920 = vmatpush1.bf16.msra.mxu0 %v3526
    %3921 = vmatprep.subr.bf16.mxu0 0
    %3922 = vmatpush1.bf16.msra.mxu0 %v3527
    %3923 = vmatprep.subr.bf16.mxu0 0
    %3924 = vmatpush1.bf16.msra.mxu0 %v3528
    %3925 = vmatprep.subr.bf16.mxu0 0
    %3926 = vmatpush1.bf16.msra.mxu0 %v3529
    %3927 = vmatprep.subr.bf16.mxu0 0
    %3928 = vmatpush1.bf16.msra.mxu0 %v3530
    %3929 = vmatprep.subr.bf16.mxu0 0
    %3930 = vmatpush1.bf16.msra.mxu0 %v3531
    %3931 = vmatprep.subr.bf16.mxu0 0
    %3932 = vmatpush1.bf16.msra.mxu0 %v3532
    %3933 = vmatprep.subr.bf16.mxu0 0
    %3934 = vmatpush1.bf16.msra.mxu0 %v3533
    %3935 = vmatprep.subr.bf16.mxu0 0
    %3936 = vmatpush1.bf16.msra.mxu0 %v3534
    %3937 = vmatprep.subr.bf16.mxu0 0
    %3938 = vmatpush1.bf16.msra.mxu0 %v3535
    %3939 = vmatprep.mubr.bf16.mxu0 %v3047
    %3940 = vmatmul.mubr.bf16.gmra.mrb[0].mxu0 %v3046
    %v3941 = vpop.f32.mrb[0].mxu0
    %v3942 = vadd.f32 %v3845, %v3941
    %v3943 = vpop.f32.mrb[0].mxu0
    %v3944 = vpop.f32.mrb[0].mxu0
    %v3945 = vadd.f32 %v3848, %v3944
    %v3946 = vpop.f32.mrb[0].mxu0
    %3947 = vmatprep.mubr.bf16.mxu0 %v3056
    %3948 = vmatmul.mubr.bf16.gmra.mrb[0].mxu0 %v3055
    %v3949 = vpop.f32.mrb[0].mxu0
    %v3950 = vadd.f32 %v3853, %v3949
    %v3951 = vpop.f32.mrb[0].mxu0
    %v3952 = vpop.f32.mrb[0].mxu0
    %v3953 = vadd.f32 %v3856, %v3952
    %v3954 = vpop.f32.mrb[0].mxu0
    %3955 = vmatprep.mubr.bf16.mxu0 %v3065
    %3956 = vmatmul.mubr.bf16.gmra.mrb[0].mxu0 %v3064
    %v3957 = vpop.f32.mrb[0].mxu0
    %v3958 = vadd.f32 %v3861, %v3957
    %v3959 = vpop.f32.mrb[0].mxu0
    %v3960 = vpop.f32.mrb[0].mxu0
    %v3961 = vadd.f32 %v3864, %v3960
    %v3962 = vpop.f32.mrb[0].mxu0
    %3963 = vmatprep.mubr.bf16.mxu0 %v3074
    %3964 = vmatmul.mubr.bf16.gmra.mrb[0].mxu0 %v3073
    %v3965 = vpop.f32.mrb[0].mxu0
    %v3966 = vadd.f32 %v3869, %v3965
    %v3967 = vpop.f32.mrb[0].mxu0
    %v3968 = vpop.f32.mrb[0].mxu0
    %v3969 = vadd.f32 %v3872, %v3968
    %v3970 = vpop.f32.mrb[0].mxu0
    %3971 = vmatprep.mubr.bf16.mxu0 %v3083
    %3972 = vmatmul.mubr.bf16.gmra.mrb[0].mxu0 %v3082
    %v3973 = vpop.f32.mrb[0].mxu0
    %v3974 = vadd.f32 %v3877, %v3973
    %v3975 = vpop.f32.mrb[0].mxu0
    %v3976 = vpop.f32.mrb[0].mxu0
    %v3977 = vadd.f32 %v3880, %v3976
    %v3978 = vpop.f32.mrb[0].mxu0
    %3979 = vmatprep.mubr.bf16.mxu0 %v3092
    %3980 = vmatmul.mubr.bf16.gmra.mrb[0].mxu0 %v3091
    %v3981 = vpop.f32.mrb[0].mxu0
    %v3982 = vadd.f32 %v3885, %v3981
    %v3983 = vpop.f32.mrb[0].mxu0
    %v3984 = vpop.f32.mrb[0].mxu0
    %v3985 = vadd.f32 %v3888, %v3984
    %v3986 = vpop.f32.mrb[0].mxu0
    %3987 = vmatprep.mubr.bf16.mxu0 %v3101
    %3988 = vmatmul.mubr.bf16.gmra.mrb[0].mxu0 %v3100
    %v3989 = vpop.f32.mrb[0].mxu0
    %v3990 = vadd.f32 %v3893, %v3989
    %v3991 = vpop.f32.mrb[0].mxu0
    %v3992 = vpop.f32.mrb[0].mxu0
    %v3993 = vadd.f32 %v3896, %v3992
    %v3994 = vpop.f32.mrb[0].mxu0
    %3995 = vmatprep.mubr.bf16.mxu0 %v3110
    %3996 = vmatmul.mubr.bf16.gmra.mrb[0].mxu0 %v3109
    %v3997 = vpop.f32.mrb[0].mxu0
    %v3998 = vadd.f32 %v3901, %v3997
    %v3999 = vpop.f32.mrb[0].mxu0
    %v4000 = vpop.f32.mrb[0].mxu0
    %v4001 = vadd.f32 %v3904, %v4000
    %v4002 = vpop.f32.mrb[0].mxu0
    %4003 = vdwg.mxu0
    %4004 = vmatprep.subr.bf16.mxu0 0
    %4005 = vmatpush1.bf16.msra.mxu0 %v3536
    %4006 = vmatprep.subr.bf16.mxu0 0
    %4007 = vmatpush1.bf16.msra.mxu0 %v3537
    %4008 = vmatprep.subr.bf16.mxu0 0
    %4009 = vmatpush1.bf16.msra.mxu0 %v3538
    %4010 = vmatprep.subr.bf16.mxu0 0
    %4011 = vmatpush1.bf16.msra.mxu0 %v3539
    %4012 = vmatprep.subr.bf16.mxu0 0
    %4013 = vmatpush1.bf16.msra.mxu0 %v3540
    %4014 = vmatprep.subr.bf16.mxu0 0
    %4015 = vmatpush1.bf16.msra.mxu0 %v3541
    %4016 = vmatprep.subr.bf16.mxu0 0
    %4017 = vmatpush1.bf16.msra.mxu0 %v3542
    %4018 = vmatprep.subr.bf16.mxu0 0
    %4019 = vmatpush1.bf16.msra.mxu0 %v3543
    %4020 = vmatprep.subr.bf16.mxu0 0
    %4021 = vmatpush1.bf16.msra.mxu0 0
    %4022 = vmatprep.subr.bf16.mxu0 0
    %4023 = vmatpush1.bf16.msra.mxu0 0
    %4024 = vmatprep.subr.bf16.mxu0 0
    %4025 = vmatpush1.bf16.msra.mxu0 0
    %4026 = vmatprep.subr.bf16.mxu0 0
    %4027 = vmatpush1.bf16.msra.mxu0 0
    %4028 = vmatprep.subr.bf16.mxu0 0
    %4029 = vmatpush1.bf16.msra.mxu0 0
    %4030 = vmatprep.subr.bf16.mxu0 0
    %4031 = vmatpush1.bf16.msra.mxu0 0
    %4032 = vmatprep.subr.bf16.mxu0 0
    %4033 = vmatpush1.bf16.msra.mxu0 0
    %4034 = vmatprep.subr.bf16.mxu0 0
    %4035 = vmatpush1.bf16.msra.mxu0 0
    %4036 = vmatprep.mubr.bf16.mxu0 0
    %4037 = vmatmul.mubr.bf16.gmra.mrb[0].mxu0 %v3048
    %v4038 = vpop.f32.mrb[0].mxu0
    %v4039 = vadd.f32 %v3942, %v4038
    %v4040 = vpop.f32.mrb[0].mxu0
    %v4041 = vpop.f32.mrb[0].mxu0
    %v4042 = vadd.f32 %v3945, %v4041
    %v4043 = vpop.f32.mrb[0].mxu0
    %4044 = vmatprep.mubr.bf16.mxu0 0
    %4045 = vmatmul.mubr.bf16.gmra.mrb[0].mxu0 %v3057
    %v4046 = vpop.f32.mrb[0].mxu0
    %v4047 = vadd.f32 %v3950, %v4046
    %v4048 = vpop.f32.mrb[0].mxu0
    %v4049 = vpop.f32.mrb[0].mxu0
    %v4050 = vadd.f32 %v3953, %v4049
    %v4051 = vpop.f32.mrb[0].mxu0
    %4052 = vmatprep.mubr.bf16.mxu0 0
    %4053 = vmatmul.mubr.bf16.gmra.mrb[0].mxu0 %v3066
    %v4054 = vpop.f32.mrb[0].mxu0
    %v4055 = vadd.f32 %v3958, %v4054
    %v4056 = vpop.f32.mrb[0].mxu0
    %v4057 = vpop.f32.mrb[0].mxu0
    %v4058 = vadd.f32 %v3961, %v4057
    %v4059 = vpop.f32.mrb[0].mxu0
    %4060 = vmatprep.mubr.bf16.mxu0 0
    %4061 = vmatmul.mubr.bf16.gmra.mrb[0].mxu0 %v3075
    %v4062 = vpop.f32.mrb[0].mxu0
    %v4063 = vadd.f32 %v3966, %v4062
    %v4064 = vpop.f32.mrb[0].mxu0
    %v4065 = vpop.f32.mrb[0].mxu0
    %v4066 = vadd.f32 %v3969, %v4065
    %v4067 = vpop.f32.mrb[0].mxu0
    %4068 = vmatprep.mubr.bf16.mxu0 0
    %4069 = vmatmul.mubr.bf16.gmra.mrb[0].mxu0 %v3084
    %v4070 = vpop.f32.mrb[0].mxu0
    %v4071 = vadd.f32 %v3974, %v4070
    %v4072 = vpop.f32.mrb[0].mxu0
    %v4073 = vpop.f32.mrb[0].mxu0
    %v4074 = vadd.f32 %v3977, %v4073
    %v4075 = vpop.f32.mrb[0].mxu0
    %4076 = vmatprep.mubr.bf16.mxu0 0
    %4077 = vmatmul.mubr.bf16.gmra.mrb[0].mxu0 %v3093
    %v4078 = vpop.f32.mrb[0].mxu0
    %v4079 = vadd.f32 %v3982, %v4078
    %v4080 = vpop.f32.mrb[0].mxu0
    %v4081 = vpop.f32.mrb[0].mxu0
    %v4082 = vadd.f32 %v3985, %v4081
    %v4083 = vpop.f32.mrb[0].mxu0
    %4084 = vmatprep.mubr.bf16.mxu0 0
    %4085 = vmatmul.mubr.bf16.gmra.mrb[0].mxu0 %v3102
    %v4086 = vpop.f32.mrb[0].mxu0
    %v4087 = vadd.f32 %v3990, %v4086
    %v4088 = vpop.f32.mrb[0].mxu0
    %v4089 = vpop.f32.mrb[0].mxu0
    %v4090 = vadd.f32 %v3993, %v4089
    %v4091 = vpop.f32.mrb[0].mxu0
    %4092 = vmatprep.mubr.bf16.mxu0 0
    %4093 = vmatmul.mubr.bf16.gmra.mrb[0].mxu0 %v3111
    %v4094 = vpop.f32.mrb[0].mxu0
    %v4095 = vadd.f32 %v3998, %v4094
    %v4096 = vpop.f32.mrb[0].mxu0
    %v4097 = vpop.f32.mrb[0].mxu0
    %v4098 = vadd.f32 %v4001, %v4097
    %v4099 = vpop.f32.mrb[0].mxu0
    %4100 = vdwg.mxu0
    %v4101 = vmax.f32 %v4039, 0.0
    %v4102 = vmax.f32 %v4042, 0.0
    %v4103 = vmax.f32 %v4047, 0.0
    %v4104 = vmax.f32 %v4050, 0.0
    %v4105 = vmax.f32 %v4055, 0.0
    %v4106 = vmax.f32 %v4058, 0.0
    %v4107 = vmax.f32 %v4063, 0.0
    %v4108 = vmax.f32 %v4066, 0.0
    %v4109 = vmax.f32 %v4071, 0.0
    %v4110 = vmax.f32 %v4074, 0.0
    %v4111 = vmax.f32 %v4079, 0.0
    %v4112 = vmax.f32 %v4082, 0.0
    %v4113 = vmax.f32 %v4087, 0.0
    %v4114 = vmax.f32 %v4090, 0.0
    %v4115 = vmax.f32 %v4095, 0.0
    %v4116 = vmax.f32 %v4098, 0.0
    %v4117 = vpack.c.bf16 %v4102, %v4101
    %v4118 = vpack.c.bf16 %v4104, %v4103
    %v4119 = vpack.c.bf16 %v4106, %v4105
    %v4120 = vpack.c.bf16 %v4108, %v4107
    %v4121 = vpack.c.bf16 %v4110, %v4109
    %v4122 = vpack.c.bf16 %v4112, %v4111
    %v4123 = vpack.c.bf16 %v4114, %v4113
    %v4124 = vpack.c.bf16 %v4116, %v4115
    %v4125 = vld [vmem:[#allocation9] sm:$0xf]
    %v4126 = vld [vmem:[#allocation9 + $0x4] sm:$0xf]
    %v4127 = vld [vmem:[#allocation9 + $0x8] sm:$0xf]
    %v4128 = vld [vmem:[#allocation9 + $0xc] sm:$0xf]
    %v4129 = vld [vmem:[#allocation9 + $0x10] sm:$0xf]
    %v4130 = vld [vmem:[#allocation9 + $0x14] sm:$0xf]
    %v4131 = vld [vmem:[#allocation9 + $0x18] sm:$0xf]
    %v4132 = vld [vmem:[#allocation9 + $0x1c] sm:$0xf]
    %v4133 = vld [vmem:[#allocation9 + $0x20] sm:$0xf]
    %v4134 = vld [vmem:[#allocation9 + $0x24] sm:$0xf]
    %v4135 = vld [vmem:[#allocation9 + $0x28] sm:$0xf]
    %v4136 = vld [vmem:[#allocation9 + $0x2c] sm:$0xf]
    %v4137 = vld [vmem:[#allocation9 + $0x30] sm:$0xf]
    %v4138 = vld [vmem:[#allocation9 + $0x34] sm:$0xf]
    %v4139 = vld [vmem:[#allocation9 + $0x38] sm:$0xf]
    %v4140 = vld [vmem:[#allocation9 + $0x3c] sm:$0xf]
    %v4141 = vld [vmem:[#allocation11] sm:$0xf]
    %v4142 = vld [vmem:[#allocation11 + $0x4] sm:$0xf]
    %v4143 = vld [vmem:[#allocation11 + $0x8] sm:$0xf]
    %v4144 = vld [vmem:[#allocation11 + $0xc] sm:$0xf]
    %v4145 = vld [vmem:[#allocation11 + $0x10] sm:$0xf]
    %v4146 = vld [vmem:[#allocation11 + $0x14] sm:$0xf]
    %v4147 = vld [vmem:[#allocation11 + $0x18] sm:$0xf]
    %v4148 = vld [vmem:[#allocation11 + $0x1c] sm:$0xf]
    %v4149 = vld [vmem:[#allocation11 + $0x20] sm:$0xf]
    %v4150 = vld [vmem:[#allocation11 + $0x24] sm:$0xf]
    %v4151 = vld [vmem:[#allocation11 + $0x28] sm:$0xf]
    %v4152 = vld [vmem:[#allocation11 + $0x2c] sm:$0xf]
    %v4153 = vld [vmem:[#allocation11 + $0x30] sm:$0xf]
    %v4154 = vld [vmem:[#allocation11 + $0x34] sm:$0xf]
    %v4155 = vld [vmem:[#allocation11 + $0x38] sm:$0xf]
    %v4156 = vld [vmem:[#allocation11 + $0x3c] sm:$0xf]
    %v4157 = vpack.c.b16 %v466, %v464
    %v4158 = vpack.c.b16 %v470, %v468
    %v4159 = vpack.c.b16 %v474, %v472
    %v4160 = vpack.c.b16 %v478, %v476
    %v4161 = vpack.c.b16 %v538, %v536
    %v4162 = vpack.c.b16 %v542, %v540
    %v4163 = vpack.c.b16 %v546, %v544
    %v4164 = vpack.c.b16 %v550, %v548
    %v4189 = vunpack.c.l.b16 %v4141
    %v4190 = vunpack.c.l.b16 %v4142
    %v4191 = vunpack.c.l.b16 %v4143
    %v4192 = vunpack.c.l.b16 %v4144
    %v4193 = vunpack.c.l.b16 %v4145
    %v4194 = vunpack.c.l.b16 %v4146
    %v4195 = vunpack.c.l.b16 %v4147
    %v4196 = vunpack.c.l.b16 %v4148
    %v4197 = vunpack.c.l.b16 %v4149
    %v4198 = vunpack.c.l.b16 %v4150
    %v4199 = vunpack.c.l.b16 %v4151
    %v4200 = vunpack.c.l.b16 %v4152
    %v4201 = vunpack.c.l.b16 %v4153
    %v4202 = vunpack.c.l.b16 %v4154
    %v4203 = vunpack.c.l.b16 %v4155
    %v4204 = vunpack.c.l.b16 %v4156
    %v4205 = vpack.c.b16 %v4190, %v4189
    %v4206 = vpack.c.b16 %v4192, %v4191
    %v4207 = vpack.c.b16 %v4194, %v4193
    %v4208 = vpack.c.b16 %v4196, %v4195
    %v4209 = vpack.c.b16 %v4198, %v4197
    %v4210 = vpack.c.b16 %v4200, %v4199
    %v4211 = vpack.c.b16 %v4202, %v4201
    %v4212 = vpack.c.b16 %v4204, %v4203
    %4221 = vmatprep.subr.bf16.mxu0 0
    %4222 = vmatpush1.bf16.msra.mxu0 %v4205
    %4223 = vmatprep.subr.bf16.mxu0 0
    %4224 = vmatpush1.bf16.msra.mxu0 %v4206
    %4225 = vmatprep.subr.bf16.mxu0 0
    %4226 = vmatpush1.bf16.msra.mxu0 %v4207
    %4227 = vmatprep.subr.bf16.mxu0 0
    %4228 = vmatpush1.bf16.msra.mxu0 %v4208
    %4229 = vmatprep.subr.bf16.mxu0 0
    %4230 = vmatpush1.bf16.msra.mxu0 %v4209
    %4231 = vmatprep.subr.bf16.mxu0 0
    %4232 = vmatpush1.bf16.msra.mxu0 %v4210
    %4233 = vmatprep.subr.bf16.mxu0 0
    %4234 = vmatpush1.bf16.msra.mxu0 %v4211
    %4235 = vmatprep.subr.bf16.mxu0 0
    %4236 = vmatpush1.bf16.msra.mxu0 %v4212
    %4237 = vmatprep.subr.bf16.mxu0 0
    %4238 = vmatpush1.bf16.msra.mxu0 0
    %4239 = vmatprep.subr.bf16.mxu0 0
    %4240 = vmatpush1.bf16.msra.mxu0 0
    %4241 = vmatprep.subr.bf16.mxu0 0
    %4242 = vmatpush1.bf16.msra.mxu0 0
    %4243 = vmatprep.subr.bf16.mxu0 0
    %4244 = vmatpush1.bf16.msra.mxu0 0
    %4245 = vmatprep.subr.bf16.mxu0 0
    %4246 = vmatpush1.bf16.msra.mxu0 0
    %4247 = vmatprep.subr.bf16.mxu0 0
    %4248 = vmatpush1.bf16.msra.mxu0 0
    %4249 = vmatprep.subr.bf16.mxu0 0
    %4250 = vmatpush1.bf16.msra.mxu0 0
    %4251 = vmatprep.subr.bf16.mxu0 0
    %4252 = vmatpush1.bf16.msra.mxu0 0
    %4253 = vmatprep.mubr.bf16.mxu0 0
    %4254 = vmatmul.mubr.bf16.gmra.mrb[0].mxu0 %v4157
    %v4255 = vpop.f32.mrb[0].mxu0
    %v4256 = vadd.f32 0.0, %v4255
    %v4257 = vpop.f32.mrb[0].mxu0
    %v4258 = vpop.f32.mrb[0].mxu0
    %v4259 = vadd.f32 0.0, %v4258
    %v4260 = vpop.f32.mrb[0].mxu0
    %4261 = vmatprep.mubr.bf16.mxu0 0
    %4262 = vmatmul.mubr.bf16.gmra.mrb[0].mxu0 %v4158
    %v4263 = vpop.f32.mrb[0].mxu0
    %v4264 = vadd.f32 0.0, %v4263
    %v4265 = vpop.f32.mrb[0].mxu0
    %v4266 = vpop.f32.mrb[0].mxu0
    %v4267 = vadd.f32 0.0, %v4266
    %v4268 = vpop.f32.mrb[0].mxu0
    %4269 = vmatprep.mubr.bf16.mxu0 0
    %4270 = vmatmul.mubr.bf16.gmra.mrb[0].mxu0 %v4159
    %v4271 = vpop.f32.mrb[0].mxu0
    %v4272 = vadd.f32 0.0, %v4271
    %v4273 = vpop.f32.mrb[0].mxu0
    %v4274 = vpop.f32.mrb[0].mxu0
    %v4275 = vadd.f32 0.0, %v4274
    %v4276 = vpop.f32.mrb[0].mxu0
    %4277 = vmatprep.mubr.bf16.mxu0 0
    %4278 = vmatmul.mubr.bf16.gmra.mrb[0].mxu0 %v4160
    %v4279 = vpop.f32.mrb[0].mxu0
    %v4280 = vadd.f32 0.0, %v4279
    %v4281 = vpop.f32.mrb[0].mxu0
    %v4282 = vpop.f32.mrb[0].mxu0
    %v4283 = vadd.f32 0.0, %v4282
    %v4284 = vpop.f32.mrb[0].mxu0
    %4285 = vmatprep.mubr.bf16.mxu0 0
    %4286 = vmatmul.mubr.bf16.gmra.mrb[0].mxu0 %v4161
    %v4287 = vpop.f32.mrb[0].mxu0
    %v4288 = vadd.f32 0.0, %v4287
    %v4289 = vpop.f32.mrb[0].mxu0
    %v4290 = vpop.f32.mrb[0].mxu0
    %v4291 = vadd.f32 0.0, %v4290
    %v4292 = vpop.f32.mrb[0].mxu0
    %4293 = vmatprep.mubr.bf16.mxu0 0
    %4294 = vmatmul.mubr.bf16.gmra.mrb[0].mxu0 %v4162
    %v4295 = vpop.f32.mrb[0].mxu0
    %v4296 = vadd.f32 0.0, %v4295
    %v4297 = vpop.f32.mrb[0].mxu0
    %v4298 = vpop.f32.mrb[0].mxu0
    %v4299 = vadd.f32 0.0, %v4298
    %v4300 = vpop.f32.mrb[0].mxu0
    %4301 = vmatprep.mubr.bf16.mxu0 0
    %4302 = vmatmul.mubr.bf16.gmra.mrb[0].mxu0 %v4163
    %v4303 = vpop.f32.mrb[0].mxu0
    %v4304 = vadd.f32 0.0, %v4303
    %v4305 = vpop.f32.mrb[0].mxu0
    %v4306 = vpop.f32.mrb[0].mxu0
    %v4307 = vadd.f32 0.0, %v4306
    %v4308 = vpop.f32.mrb[0].mxu0
    %4309 = vmatprep.mubr.bf16.mxu0 0
    %4310 = vmatmul.mubr.bf16.gmra.mrb[0].mxu0 %v4164
    %v4311 = vpop.f32.mrb[0].mxu0
    %v4312 = vadd.f32 0.0, %v4311
    %v4313 = vpop.f32.mrb[0].mxu0
    %v4314 = vpop.f32.mrb[0].mxu0
    %v4315 = vadd.f32 0.0, %v4314
    %v4316 = vpop.f32.mrb[0].mxu0
    %4317 = vdwg.mxu0
    %v4334 = vunpack.c.l.b16 %v4125
    %v4335 = vunpack.c.l.b16 %v4126
    %v4336 = vunpack.c.l.b16 %v4127
    %v4337 = vunpack.c.l.b16 %v4128
    %v4338 = vunpack.c.l.b16 %v4129
    %v4339 = vunpack.c.l.b16 %v4130
    %v4340 = vunpack.c.l.b16 %v4131
    %v4341 = vunpack.c.l.b16 %v4132
    %v4342 = vunpack.c.l.b16 %v4133
    %v4343 = vunpack.c.l.b16 %v4134
    %v4344 = vunpack.c.l.b16 %v4135
    %v4345 = vunpack.c.l.b16 %v4136
    %v4346 = vunpack.c.l.b16 %v4137
    %v4347 = vunpack.c.l.b16 %v4138
    %v4348 = vunpack.c.l.b16 %v4139
    %v4349 = vunpack.c.l.b16 %v4140
    %v4350 = vpack.c.b16 %v4335, %v4334
    %v4351 = vpack.c.b16 %v4337, %v4336
    %v4352 = vpack.c.b16 %v4339, %v4338
    %v4353 = vpack.c.b16 %v4341, %v4340
    %v4354 = vpack.c.b16 %v4343, %v4342
    %v4355 = vpack.c.b16 %v4345, %v4344
    %v4356 = vpack.c.b16 %v4347, %v4346
    %v4357 = vpack.c.b16 %v4349, %v4348
    %4366 = vmatprep.subr.bf16.mxu0 0
    %4367 = vmatpush1.bf16.msra.mxu0 %v4350
    %4368 = vmatprep.subr.bf16.mxu0 0
    %4369 = vmatpush1.bf16.msra.mxu0 %v4351
    %4370 = vmatprep.subr.bf16.mxu0 0
    %4371 = vmatpush1.bf16.msra.mxu0 %v4352
    %4372 = vmatprep.subr.bf16.mxu0 0
    %4373 = vmatpush1.bf16.msra.mxu0 %v4353
    %4374 = vmatprep.subr.bf16.mxu0 0
    %4375 = vmatpush1.bf16.msra.mxu0 %v4354
    %4376 = vmatprep.subr.bf16.mxu0 0
    %4377 = vmatpush1.bf16.msra.mxu0 %v4355
    %4378 = vmatprep.subr.bf16.mxu0 0
    %4379 = vmatpush1.bf16.msra.mxu0 %v4356
    %4380 = vmatprep.subr.bf16.mxu0 0
    %4381 = vmatpush1.bf16.msra.mxu0 %v4357
    %4382 = vmatprep.subr.bf16.mxu0 0
    %4383 = vmatpush1.bf16.msra.mxu0 0
    %4384 = vmatprep.subr.bf16.mxu0 0
    %4385 = vmatpush1.bf16.msra.mxu0 0
    %4386 = vmatprep.subr.bf16.mxu0 0
    %4387 = vmatpush1.bf16.msra.mxu0 0
    %4388 = vmatprep.subr.bf16.mxu0 0
    %4389 = vmatpush1.bf16.msra.mxu0 0
    %4390 = vmatprep.subr.bf16.mxu0 0
    %4391 = vmatpush1.bf16.msra.mxu0 0
    %4392 = vmatprep.subr.bf16.mxu0 0
    %4393 = vmatpush1.bf16.msra.mxu0 0
    %4394 = vmatprep.subr.bf16.mxu0 0
    %4395 = vmatpush1.bf16.msra.mxu0 0
    %4396 = vmatprep.subr.bf16.mxu0 0
    %4397 = vmatpush1.bf16.msra.mxu0 0
    %4398 = vmatprep.mubr.bf16.mxu0 0
    %4399 = vmatmul.mubr.bf16.gmra.mrb[0].mxu0 %v4117
    %v4400 = vpop.f32.mrb[0].mxu0
    %v4401 = vadd.f32 %v4256, %v4400
    %v4402 = vpop.f32.mrb[0].mxu0
    %v4403 = vpop.f32.mrb[0].mxu0
    %v4404 = vadd.f32 %v4259, %v4403
    %v4405 = vpop.f32.mrb[0].mxu0
    %4406 = vmatprep.mubr.bf16.mxu0 0
    %4407 = vmatmul.mubr.bf16.gmra.mrb[0].mxu0 %v4118
    %v4408 = vpop.f32.mrb[0].mxu0
    %v4409 = vadd.f32 %v4264, %v4408
    %v4410 = vpop.f32.mrb[0].mxu0
    %v4411 = vpop.f32.mrb[0].mxu0
    %v4412 = vadd.f32 %v4267, %v4411
    %v4413 = vpop.f32.mrb[0].mxu0
    %4414 = vmatprep.mubr.bf16.mxu0 0
    %4415 = vmatmul.mubr.bf16.gmra.mrb[0].mxu0 %v4119
    %v4416 = vpop.f32.mrb[0].mxu0
    %v4417 = vadd.f32 %v4272, %v4416
    %v4418 = vpop.f32.mrb[0].mxu0
    %v4419 = vpop.f32.mrb[0].mxu0
    %v4420 = vadd.f32 %v4275, %v4419
    %v4421 = vpop.f32.mrb[0].mxu0
    %4422 = vmatprep.mubr.bf16.mxu0 0
    %4423 = vmatmul.mubr.bf16.gmra.mrb[0].mxu0 %v4120
    %v4424 = vpop.f32.mrb[0].mxu0
    %v4425 = vadd.f32 %v4280, %v4424
    %v4426 = vpop.f32.mrb[0].mxu0
    %v4427 = vpop.f32.mrb[0].mxu0
    %v4428 = vadd.f32 %v4283, %v4427
    %v4429 = vpop.f32.mrb[0].mxu0
    %4430 = vmatprep.mubr.bf16.mxu0 0
    %4431 = vmatmul.mubr.bf16.gmra.mrb[0].mxu0 %v4121
    %v4432 = vpop.f32.mrb[0].mxu0
    %v4433 = vadd.f32 %v4288, %v4432
    %v4434 = vpop.f32.mrb[0].mxu0
    %v4435 = vpop.f32.mrb[0].mxu0
    %v4436 = vadd.f32 %v4291, %v4435
    %v4437 = vpop.f32.mrb[0].mxu0
    %4438 = vmatprep.mubr.bf16.mxu0 0
    %4439 = vmatmul.mubr.bf16.gmra.mrb[0].mxu0 %v4122
    %v4440 = vpop.f32.mrb[0].mxu0
    %v4441 = vadd.f32 %v4296, %v4440
    %v4442 = vpop.f32.mrb[0].mxu0
    %v4443 = vpop.f32.mrb[0].mxu0
    %v4444 = vadd.f32 %v4299, %v4443
    %v4445 = vpop.f32.mrb[0].mxu0
    %4446 = vmatprep.mubr.bf16.mxu0 0
    %4447 = vmatmul.mubr.bf16.gmra.mrb[0].mxu0 %v4123
    %v4448 = vpop.f32.mrb[0].mxu0
    %v4449 = vadd.f32 %v4304, %v4448
    %v4450 = vpop.f32.mrb[0].mxu0
    %v4451 = vpop.f32.mrb[0].mxu0
    %v4452 = vadd.f32 %v4307, %v4451
    %v4453 = vpop.f32.mrb[0].mxu0
    %4454 = vmatprep.mubr.bf16.mxu0 0
    %4455 = vmatmul.mubr.bf16.gmra.mrb[0].mxu0 %v4124
    %v4456 = vpop.f32.mrb[0].mxu0
    %v4457 = vadd.f32 %v4312, %v4456
    %v4458 = vpop.f32.mrb[0].mxu0
    %v4459 = vpop.f32.mrb[0].mxu0
    %v4460 = vadd.f32 %v4315, %v4459
    %v4461 = vpop.f32.mrb[0].mxu0
    %4462 = vdwg.mxu0
    %v4463 = vld [vmem:[%s6] sm:$0x1]
    %v4465 = vlaneseq
    %v4466 = vshrl.u32 %v4465, 7
    %v4467 = vsub.s32 0, %v4466
    %v4468 = vrot.slane %v4463, %v4467
    %v4470 = vadd.f32 %v4401, %v4468
    %v4471 = vadd.f32 %v4404, %v4468
    %v4472 = vadd.f32 %v4409, %v4468
    %v4473 = vadd.f32 %v4412, %v4468
    %v4474 = vadd.f32 %v4417, %v4468
    %v4475 = vadd.f32 %v4420, %v4468
    %v4476 = vadd.f32 %v4425, %v4468
    %v4477 = vadd.f32 %v4428, %v4468
    %v4478 = vadd.f32 %v4433, %v4468
    %v4479 = vadd.f32 %v4436, %v4468
    %v4480 = vadd.f32 %v4441, %v4468
    %v4481 = vadd.f32 %v4444, %v4468
    %v4482 = vadd.f32 %v4449, %v4468
    %v4483 = vadd.f32 %v4452, %v4468
    %v4484 = vadd.f32 %v4457, %v4468
    %v4485 = vadd.f32 %v4460, %v4468
    %v4486 = vmax.f32 %v4470, 0.0
    %v4487 = vmax.f32 %v4471, 0.0
    %v4488 = vmax.f32 %v4472, 0.0
    %v4489 = vmax.f32 %v4473, 0.0
    %v4490 = vmax.f32 %v4474, 0.0
    %v4491 = vmax.f32 %v4475, 0.0
    %v4492 = vmax.f32 %v4476, 0.0
    %v4493 = vmax.f32 %v4477, 0.0
    %v4494 = vmax.f32 %v4478, 0.0
    %v4495 = vmax.f32 %v4479, 0.0
    %v4496 = vmax.f32 %v4480, 0.0
    %v4497 = vmax.f32 %v4481, 0.0
    %v4498 = vmax.f32 %v4482, 0.0
    %v4499 = vmax.f32 %v4483, 0.0
    %v4500 = vmax.f32 %v4484, 0.0
    %v4501 = vmax.f32 %v4485, 0.0
    %v4502 = vpack.c.bf16 %v4487, %v4486
    %v4503 = vpack.c.bf16 %v4489, %v4488
    %v4504 = vpack.c.bf16 %v4491, %v4490
    %v4505 = vpack.c.bf16 %v4493, %v4492
    %v4506 = vpack.c.bf16 %v4495, %v4494
    %v4507 = vpack.c.bf16 %v4497, %v4496
    %v4508 = vpack.c.bf16 %v4499, %v4498
    %v4509 = vpack.c.bf16 %v4501, %v4500
    %v4518 = vunpack.c.l.b16 %v4502
    %v4519 = vunpack.c.h.b16 %v4502
    %v4520 = vunpack.c.l.b16 %v4503
    %v4521 = vunpack.c.h.b16 %v4503
    %v4522 = vunpack.c.l.b16 %v4504
    %v4523 = vunpack.c.h.b16 %v4504
    %v4524 = vunpack.c.l.b16 %v4505
    %v4525 = vunpack.c.h.b16 %v4505
    %v4526 = vunpack.c.l.b16 %v4506
    %v4527 = vunpack.c.h.b16 %v4506
    %v4528 = vunpack.c.l.b16 %v4507
    %v4529 = vunpack.c.h.b16 %v4507
    %v4530 = vunpack.c.l.b16 %v4508
    %v4531 = vunpack.c.h.b16 %v4508
    %v4532 = vunpack.c.l.b16 %v4509
    %v4533 = vunpack.c.h.b16 %v4509
    %v4534 = vpack.c.b16 %v4518, %v4518
    %v4535 = vpack.c.b16 %v4519, %v4519
    %v4536 = vpack.c.b16 %v4520, %v4520
    %v4537 = vpack.c.b16 %v4521, %v4521
    %v4538 = vpack.c.b16 %v4522, %v4522
    %v4539 = vpack.c.b16 %v4523, %v4523
    %v4540 = vpack.c.b16 %v4524, %v4524
    %v4541 = vpack.c.b16 %v4525, %v4525
    %v4542 = vpack.c.b16 %v4526, %v4526
    %v4543 = vpack.c.b16 %v4527, %v4527
    %v4544 = vpack.c.b16 %v4528, %v4528
    %v4545 = vpack.c.b16 %v4529, %v4529
    %v4546 = vpack.c.b16 %v4530, %v4530
    %v4547 = vpack.c.b16 %v4531, %v4531
    %v4548 = vpack.c.b16 %v4532, %v4532
    %v4549 = vpack.c.b16 %v4533, %v4533
    %4566 = vst [vmem:[#allocation12] sm:$0xf] %v4534
    %4567 = vst [vmem:[#allocation12 + $0x4] sm:$0xf] %v4535
    %4568 = vst [vmem:[#allocation12 + $0x8] sm:$0xf] %v4536
    %4569 = vst [vmem:[#allocation12 + $0xc] sm:$0xf] %v4537
    %4570 = vst [vmem:[#allocation12 + $0x10] sm:$0xf] %v4538
    %4571 = vst [vmem:[#allocation12 + $0x14] sm:$0xf] %v4539
    %4572 = vst [vmem:[#allocation12 + $0x18] sm:$0xf] %v4540
    %4573 = vst [vmem:[#allocation12 + $0x1c] sm:$0xf] %v4541
    %4574 = vst [vmem:[#allocation12 + $0x20] sm:$0xf] %v4542
    %4575 = vst [vmem:[#allocation12 + $0x24] sm:$0xf] %v4543
    %4576 = vst [vmem:[#allocation12 + $0x28] sm:$0xf] %v4544
    %4577 = vst [vmem:[#allocation12 + $0x2c] sm:$0xf] %v4545
    %4578 = vst [vmem:[#allocation12 + $0x30] sm:$0xf] %v4546
    %4579 = vst [vmem:[#allocation12 + $0x34] sm:$0xf] %v4547
    %4580 = vst [vmem:[#allocation12 + $0x38] sm:$0xf] %v4548
    %4581 = vst [vmem:[#allocation12 + $0x3c] sm:$0xf] %v4549
    // Predicated region
    $region54: #{tpu_custom_call.1} parent=1 // pred_check
      _
    $region55: #{tpu_custom_call.1} parent=1 // pred_check_branch
      %4583 = sbr.rel (0) target = $region57
    $region56: #{tpu_custom_call.1} parent=1 // pred_region
      %s4585 = ssub.s32 1024, 1024
      %4586 = vsyncadd [#allocation5], %s4585
      %s4587 = sshll.u32 [#allocation12], 4
      %s4588 = int_to_ptr.vmem [resolvable:$true] %s4587
      %4593 = dma.vmem_to_hbm [thread:$0]  %s4588, 1024, %s8, [#allocation5], 64, 64, 4
    $region57: #{tpu_custom_call.1} parent=1 // pred_fallthru
      _
    // Predicated region
    $region58: #{tpu_custom_call.1} parent=1 // pred_check
      _
    $region59: #{tpu_custom_call.1} parent=1 // pred_check_branch
      %4595 = sbr.rel (0) target = $region61
    $region60: #{tpu_custom_call.1} parent=1 // pred_region
      %4596 = dma.done [#allocation5], 1024
    $region61: #{tpu_custom_call.1} parent=1 // pred_fallthru
      _
    %4597 = vsyncpa [#allocation4], 1
    %4598 = vsyncpa [#allocation7], 1
    %4599 = vsyncpa [#allocation10], 1
    %4600 = vsyncpa [#allocation5], 1

</llo_original>
